<compile_context>
chip_gen: v6e
topology: v6e:2x2x1
jax: 0.10.0
libtpu: 0.0.40
codegen_flags: <defaults>
</compile_context>

<pallas_src>
import functools

import jax
import jax.numpy as jnp
from jax import lax
from jax.experimental import pallas as pl
from jax.experimental.pallas import tpu as pltpu

# bf16 operands + f32 accumulation on the MXU.  Set to jnp.float32 for strict
# numerical parity with the fp32 PyTorch reference.
MATMUL_DTYPE = jnp.bfloat16
VMEM_LIMIT = 48 * 1024 * 1024          # safe on v5e/v6e (128 MiB) and v7x (64 MiB)
LN_EPS = 1e-5


# ----------------------------- Pallas kernels ------------------------------

def ln_kernel(x_ref, g_ref, b_ref, o_ref):
    """Standalone LayerNorm (only used on the padded-spatial fallback path)."""
    x = x_ref[...].astype(jnp.float32)
    mean = jnp.mean(x, axis=-1, keepdims=True)
    var = jnp.mean((x - mean) ** 2, axis=-1, keepdims=True)
    y = (x - mean) * lax.rsqrt(var + LN_EPS)
    o_ref[...] = (y * g_ref[...] + b_ref[...]).astype(o_ref.dtype)


def window_attn_kernel(x_ref, bias_ref, mask_ref, wqkv_ref, bqkv_ref,
                       wproj_ref, bproj_ref, *rest, num_heads, scale, apply_ln):
    # x_ref:   (W_BLK, N, C)  block of W_BLK windows
    # bias_ref:(nH, N, N)     grid-invariant relative position bias
    # mask_ref:(W_BLK|1, N, N) shift mask (zeros block when shift == 0)
    # weights pre-transposed to (in, out); biases passed as (1, out)
    if apply_ln:
        g_ref, b_ref, o_ref = rest
    else:
        (o_ref,) = rest

    WB, N, C = x_ref.shape
    hd = C // num_heads
    R = WB * N

    x = x_ref[...].reshape(R, C).astype(jnp.float32)
    if apply_ln:
        mean = jnp.mean(x, axis=-1, keepdims=True)
        var = jnp.mean((x - mean) ** 2, axis=-1, keepdims=True)
        x = (x - mean) * lax.rsqrt(var + LN_EPS) * g_ref[...] + b_ref[...]

    qkv = jnp.dot(x.astype(MATMUL_DTYPE), wqkv_ref[...].astype(MATMUL_DTYPE),
                  preferred_element_type=jnp.float32) + bqkv_ref[...]        # (R, 3C)

    bias = bias_ref[...].astype(jnp.float32)                                 # (nH, N, N)
    mask = mask_ref[...].astype(jnp.float32)                                 # (WB|1, N, N)

    # Per-head loop (static, small nH) with a window-batched 3D contraction per
    # head: only row-splitting reshapes are needed (no lane relayouts), and the
    # two small attention matmuls are batched over W_BLK windows.
    head_outs = []
    for h in range(num_heads):
        q = qkv[:, h * hd:(h + 1) * hd].reshape(WB, N, hd).astype(MATMUL_DTYPE)
        k = qkv[:, C + h * hd:C + (h + 1) * hd].reshape(WB, N, hd).astype(MATMUL_DTYPE)
        v = qkv[:, 2 * C + h * hd:2 * C + (h + 1) * hd].reshape(WB, N, hd).astype(MATMUL_DTYPE)

        s = jnp.einsum('wqd,wkd->wqk', q, k,
                       preferred_element_type=jnp.float32)                   # (WB, N, N)
        s = s * scale + bias[h][None, :, :] + mask
        s = s - jnp.max(s, axis=-1, keepdims=True)
        e = jnp.exp(s)
        p = e * pl.reciprocal(jnp.sum(e, axis=-1, keepdims=True), approx=True)

        oh = jnp.einsum('wqk,wkd->wqd', p.astype(MATMUL_DTYPE), v,
                        preferred_element_type=jnp.float32)                  # (WB, N, hd)
        head_outs.append(oh.reshape(R, hd))

    o = jnp.concatenate(head_outs, axis=-1).astype(MATMUL_DTYPE)             # (R, C)
    o = jnp.dot(o, wproj_ref[...].astype(MATMUL_DTYPE),
                preferred_element_type=jnp.float32) + bproj_ref[...]
    o_ref[...] = o.reshape(WB, N, C).astype(o_ref.dtype)


def ln_ffn_kernel(y_ref, id_ref, g_ref, b_ref, w1_ref, b1_ref, w2_ref, b2_ref, o_ref):
    # x = attn_out + identity ; out = FFN(LayerNorm(x)) + x
    x = y_ref[...].astype(jnp.float32) + id_ref[...].astype(jnp.float32)
    mean = jnp.mean(x, axis=-1, keepdims=True)
    var = jnp.mean((x - mean) ** 2, axis=-1, keepdims=True)
    ln = (x - mean) * lax.rsqrt(var + LN_EPS) * g_ref[...] + b_ref[...]

    h = jnp.dot(ln.astype(MATMUL_DTYPE), w1_ref[...].astype(MATMUL_DTYPE),
                preferred_element_type=jnp.float32) + b1_ref[...]
    # TODO(synk): torch nn.GELU defaults to erf-exact; tanh approximation kept for
    # guaranteed Mosaic lowering (difference ~1e-3).
    h = 0.5 * h * (1.0 + jnp.tanh(0.7978845608028654 * (h + 0.044715 * h * h * h)))
    out = jnp.dot(h.astype(MATMUL_DTYPE), w2_ref[...].astype(MATMUL_DTYPE),
                  preferred_element_type=jnp.float32) + b2_ref[...]
    o_ref[...] = (out + x).astype(o_ref.dtype)


# ----------------------------- Pallas wrappers ------------------------------

def _row_tile(M, target=256):
    return M if M <= target else target


def layernorm(x2d, gamma, beta):
    M, C = x2d.shape
    TM = _row_tile(M)
    return pl.pallas_call(
        ln_kernel,
        out_shape=jax.ShapeDtypeStruct((M, C), x2d.dtype),
        grid=(pl.cdiv(M, TM),),
        in_specs=[
            pl.BlockSpec((TM, C), lambda i: (i, 0)),
            pl.BlockSpec((1, C), lambda i: (0, 0)),
            pl.BlockSpec((1, C), lambda i: (0, 0)),
        ],
        out_specs=pl.BlockSpec((TM, C), lambda i: (i, 0)),
        compiler_params=pltpu.CompilerParams(
            dimension_semantics=("parallel",), vmem_limit_bytes=VMEM_LIMIT),
    )(x2d, gamma.reshape(1, C), beta.reshape(1, C))


def window_attention(xw, rel_bias, mask, wqkv, bqkv, wproj, bproj, gamma1, beta1,
                     *, num_heads, scale, apply_ln, w_blk):
    nW_tot, N, C = xw.shape
    assert nW_tot % w_blk == 0
    grid = (nW_tot // w_blk,)

    mask_nw = mask.shape[0]
    if mask_nw == 1:
        mask_spec = pl.BlockSpec((1, N, N), lambda w: (0, 0, 0))
    else:
        assert mask_nw % w_blk == 0
        nblk = mask_nw // w_blk
        mask_spec = pl.BlockSpec((w_blk, N, N), lambda w: (w % nblk, 0, 0))

    in_specs = [
        pl.BlockSpec((w_blk, N, C), lambda w: (w, 0, 0)),        # windows
        pl.BlockSpec((num_heads, N, N), lambda w: (0, 0, 0)),    # rel bias (resident)
        mask_spec,                                               # shift mask
        pl.BlockSpec((C, 3 * C), lambda w: (0, 0)),
        pl.BlockSpec((1, 3 * C), lambda w: (0, 0)),
        pl.BlockSpec((C, C), lambda w: (0, 0)),
        pl.BlockSpec((1, C), lambda w: (0, 0)),
    ]
    args = [xw, rel_bias, mask, wqkv, bqkv.reshape(1, 3 * C), wproj, bproj.reshape(1, C)]
    if apply_ln:
        in_specs += [pl.BlockSpec((1, C), lambda w: (0, 0)),
                     pl.BlockSpec((1, C), lambda w: (0, 0))]
        args += [gamma1.reshape(1, C), beta1.reshape(1, C)]

    kern = functools.partial(window_attn_kernel, num_heads=num_heads,
                             scale=scale, apply_ln=apply_ln)
    return pl.pallas_call(
        kern,
        out_shape=jax.ShapeDtypeStruct((nW_tot, N, C), xw.dtype),
        grid=grid,
        in_specs=in_specs,
        out_specs=pl.BlockSpec((w_blk, N, C), lambda w: (w, 0, 0)),
        compiler_params=pltpu.CompilerParams(
            dimension_semantics=("parallel",), vmem_limit_bytes=VMEM_LIMIT),
    )(*args)


def ln_ffn(y2d, id2d, gamma, beta, w1, b1, w2, b2):
    M, C = y2d.shape
    F = w1.shape[1]
    TM = _row_tile(M)
    return pl.pallas_call(
        ln_ffn_kernel,
        out_shape=jax.ShapeDtypeStruct((M, C), y2d.dtype),
        grid=(pl.cdiv(M, TM),),
        in_specs=[
            pl.BlockSpec((TM, C), lambda i: (i, 0)),
            pl.BlockSpec((TM, C), lambda i: (i, 0)),
            pl.BlockSpec((1, C), lambda i: (0, 0)),
            pl.BlockSpec((1, C), lambda i: (0, 0)),
            pl.BlockSpec((C, F), lambda i: (0, 0)),
            pl.BlockSpec((1, F), lambda i: (0, 0)),
            pl.BlockSpec((F, C), lambda i: (0, 0)),
            pl.BlockSpec((1, C), lambda i: (0, 0)),
        ],
        out_specs=pl.BlockSpec((TM, C), lambda i: (i, 0)),
        compiler_params=pltpu.CompilerParams(
            dimension_semantics=("parallel",), vmem_limit_bytes=VMEM_LIMIT),
    )(y2d, id2d, gamma.reshape(1, C), beta.reshape(1, C),
      w1, b1.reshape(1, F), w2, b2.reshape(1, C))


# ------------------------------- JAX glue ----------------------------------

def window_partition(x, ws):
    B, H, W, C = x.shape
    x = x.reshape(B, H // ws, ws, W // ws, ws, C)
    x = jnp.transpose(x, (0, 1, 3, 2, 4, 5))
    return x.reshape(-1, ws, ws, C)


def window_reverse(windows, H, W, ws):
    B = windows.shape[0] // ((H // ws) * (W // ws))
    x = windows.reshape(B, H // ws, W // ws, ws, ws, -1)
    x = jnp.transpose(x, (0, 1, 3, 2, 4, 5))
    return x.reshape(B, H, W, -1)


def relative_position_index(ws):
    # Mirrors WindowMSA.doublestepseq + flip(1)
    Wh = Ww = ws
    seq1 = jnp.arange(0, (2 * Ww - 1) * Wh, 2 * Ww - 1)
    seq2 = jnp.arange(0, Ww, 1)
    coords = (seq1[:, None] + seq2[None, :]).reshape(1, -1)       # (1, N)
    idx = coords + coords.T                                       # (N, N)
    return jnp.flip(idx, axis=1)


def relative_position_bias(table, ws, num_heads):
    N = ws * ws
    idx = relative_position_index(ws).reshape(-1)
    bias = table[idx].reshape(N, N, num_heads)
    return jnp.transpose(bias, (2, 0, 1)).astype(jnp.float32)     # (nH, N, N)


def make_shift_mask(Hp, Wp, ws, shift):
    img_mask = jnp.zeros((1, Hp, Wp, 1), jnp.float32)
    h_slices = [(0, Hp - ws), (Hp - ws, Hp - shift), (Hp - shift, Hp)]
    w_slices = [(0, Wp - ws), (Wp - ws, Wp - shift), (Wp - shift, Wp)]
    cnt = 0
    for h0, h1 in h_slices:
        for w0, w1 in w_slices:
            img_mask = img_mask.at[:, h0:h1, w0:w1, :].set(float(cnt))
            cnt += 1
    mask_windows = window_partition(img_mask, ws).reshape(-1, ws * ws)
    diff = mask_windows[:, None, :] - mask_windows[:, :, None]    # (nW, N, N)
    return jnp.where(diff != 0.0, -100.0, 0.0)


def pick_wblk(nW, N, target_rows=256, max_rows=1024):
    """Largest divisor of nW such that wblk*N reaches ~target_rows (MXU-sized)
    without exceeding max_rows (VMEM safety on v7x)."""
    divs = [d for d in range(1, nW + 1) if nW % d == 0]
    best = divs[0]
    for d in divs:
        if d * N <= max_rows:
            best = d
        if d * N >= target_rows:
            break
    return best


def swin_block_forward(x, hw_shape, p, *, num_heads, window_size, shift):
    B, L, C = x.shape
    H, W = hw_shape
    assert L == H * W
    ws = window_size
    N = ws * ws
    scale = (C // num_heads) ** (-0.5)

    identity = x

    pad_r = (ws - W % ws) % ws
    pad_b = (ws - H % ws) % ws
    needs_pad = (pad_r > 0) or (pad_b > 0)

    if needs_pad:
        # Zero padding must happen AFTER norm1 (as in PyTorch), so LN cannot be
        # fused into the attention kernel on this path.
        xn = layernorm(x.reshape(B * L, C), p["g1"], p["b1"]).reshape(B, H, W, C)
        y = jnp.pad(xn, ((0, 0), (0, pad_b), (0, pad_r), (0, 0)))
        apply_ln = False
    else:
        y = x.reshape(B, H, W, C)
        apply_ln = True          # norm1 fused into the attention kernel
    Hp, Wp = H + pad_b, W + pad_r

    if shift > 0:
        y = jnp.roll(y, shift=(-shift, -shift), axis=(1, 2))
        mask = make_shift_mask(Hp, Wp, ws, shift)                 # (nW, N, N)
    else:
        mask = jnp.zeros((1, N, N), jnp.float32)

    # TODO(synk): window partition/reverse stay as XLA transposes; expressing
    # them purely via BlockSpec index_maps needs an in-kernel window transpose
    # that is fragile for small ws, so it was not moved into the kernel.
    xw = window_partition(y, ws).reshape(-1, N, C)                # (nW_tot, N, C)
    nW = (Hp // ws) * (Wp // ws)
    w_blk = pick_wblk(nW, N)

    rel_bias = relative_position_bias(p["rel_table"], ws, num_heads)   # (nH, N, N)

    attn = window_attention(xw, rel_bias, mask,
                            p["wqkv"], p["bqkv"], p["wproj"], p["bproj"],
                            p["g1"], p["b1"],
                            num_heads=num_heads, scale=scale,
                            apply_ln=apply_ln, w_blk=w_blk)

    attn = attn.reshape(-1, ws, ws, C)
    yr = window_reverse(attn, Hp, Wp, ws)
    if shift > 0:
        yr = jnp.roll(yr, shift=(shift, shift), axis=(1, 2))
    yr = yr[:, :H, :W, :].reshape(B * L, C)

    # Fused: x = attn_out + identity ; out = FFN(norm2(x)) + x
    out = ln_ffn(yr, identity.reshape(B * L, C), p["g2"], p["b2"],
                 p["w1"], p["b1f"], p["w2"], p["b2f"])
    return out.reshape(B, L, C)


def swin_block_sequence_forward(x, hw_shape, params, *, num_heads, window_size):
    # downsample=None -> returns (x, hw_shape, x, hw_shape)
    for i, p in enumerate(params):
        shift = 0 if i % 2 == 0 else window_size // 2
        x = swin_block_forward(x, hw_shape, p, num_heads=num_heads,
                               window_size=window_size, shift=shift)
    return x, hw_shape, x, hw_shape


# ------------------------------ param init ---------------------------------

def init_block_params(key, C, F, num_heads, window_size):
    ks = jax.random.split(key, 5)
    return {
        "g1": jnp.ones((C,), jnp.float32), "b1": jnp.zeros((C,), jnp.float32),
        "wqkv": 0.02 * jax.random.normal(ks[0], (C, 3 * C), jnp.float32),
        "bqkv": jnp.zeros((3 * C,), jnp.float32),
        "wproj": 0.02 * jax.random.normal(ks[1], (C, C), jnp.float32),
        "bproj": jnp.zeros((C,), jnp.float32),
        "rel_table": 0.02 * jax.random.normal(
            ks[2], ((2 * window_size - 1) ** 2, num_heads), jnp.float32),
        "g2": jnp.ones((C,), jnp.float32), "b2": jnp.zeros((C,), jnp.float32),
        "w1": 0.02 * jax.random.normal(ks[3], (C, F), jnp.float32),
        "b1f": jnp.zeros((F,), jnp.float32),
        "w2": 0.02 * jax.random.normal(ks[4], (F, C), jnp.float32),
        "b2f": jnp.zeros((C,), jnp.float32),
    }


if __name__ == "__main__":
    # Small config: embed_dims=32, num_heads=4, feedforward_channels=64,
    # depth=2 (block 0 regular, block 1 shifted), window_size=4, H=W=8, B=2.
    B, H, W = 2, 8, 8
    C, num_heads, F, depth, window_size = 32, 4, 64, 2, 4

    key = jax.random.PRNGKey(0)
    k_x, k_p = jax.random.split(key)
    x = jax.random.normal(k_x, (B, H * W, C), jnp.float32)

    block_keys = jax.random.split(k_p, depth)
    params = [init_block_params(block_keys[i], C, F, num_heads, window_size)
              for i in range(depth)]

    out, out_hw, x_pre, pre_hw = swin_block_sequence_forward(
        x, (H, W), params, num_heads=num_heads, window_size=window_size)
    jax.block_until_ready(out)

    assert out.shape == (B, H * W, C)
    assert out_hw == (H, W) and pre_hw == (H, W)
    assert bool(jnp.all(jnp.isfinite(out)))
    print("KERNEL_OK")
</pallas_src>

<mosaic_0001>
module attributes {stable_mosaic.version = 11 : i64} {
  func.func @window_attn_kernel(%arg0: i32, %arg1: memref<4x16x32xf32, #tpu.memory_space<vmem>>, %arg2: memref<4x16x16xf32, #tpu.memory_space<vmem>>, %arg3: memref<1x16x16xf32, #tpu.memory_space<vmem>>, %arg4: memref<32x96xf32, #tpu.memory_space<vmem>>, %arg5: memref<1x96xf32, #tpu.memory_space<vmem>>, %arg6: memref<32x32xf32, #tpu.memory_space<vmem>>, %arg7: memref<1x32xf32, #tpu.memory_space<vmem>>, %arg8: memref<1x32xf32, #tpu.memory_space<vmem>>, %arg9: memref<1x32xf32, #tpu.memory_space<vmem>>, %arg10: memref<4x16x32xf32, #tpu.memory_space<vmem>>) attributes {dimension_semantics = [#tpu.dimension_semantics<parallel>], iteration_bounds = array<i64: 2>, scalar_prefetch = 0 : i64, scratch_operands = 0 : i64, tpu.core_type = #tpu.core_type<tc>, window_params = [{transform_indices = @transform_0, window_bounds = array<i64: 4, 16, 32>}, {pipeline_mode = #tpu.pipeline_mode<synchronous>, transform_indices = @transform_1, window_bounds = array<i64: 4, 16, 16>}, {pipeline_mode = #tpu.pipeline_mode<synchronous>, transform_indices = @transform_2, window_bounds = array<i64: 1, 16, 16>}, {pipeline_mode = #tpu.pipeline_mode<synchronous>, transform_indices = @transform_3, window_bounds = array<i64: 32, 96>}, {pipeline_mode = #tpu.pipeline_mode<synchronous>, transform_indices = @transform_4, window_bounds = array<i64: 1, 96>}, {pipeline_mode = #tpu.pipeline_mode<synchronous>, transform_indices = @transform_5, window_bounds = array<i64: 32, 32>}, {pipeline_mode = #tpu.pipeline_mode<synchronous>, transform_indices = @transform_6, window_bounds = array<i64: 1, 32>}, {pipeline_mode = #tpu.pipeline_mode<synchronous>, transform_indices = @transform_7, window_bounds = array<i64: 1, 32>}, {pipeline_mode = #tpu.pipeline_mode<synchronous>, transform_indices = @transform_8, window_bounds = array<i64: 1, 32>}, {transform_indices = @transform_9, window_bounds = array<i64: 4, 16, 32>}]} {
    %c0 = arith.constant 0 : index
    %c0_0 = arith.constant 0 : index
    %c0_1 = arith.constant 0 : index
    %0 = vector.load %arg1[%c0, %c0_0, %c0_1] : memref<4x16x32xf32, #tpu.memory_space<vmem>>, vector<4x16x32xf32>
    %1 = vector.shape_cast %0 : vector<4x16x32xf32> to vector<64x32xf32>
    %cst = arith.constant dense<0.000000e+00> : vector<64xf32>
    %2 = vector.multi_reduction <add>, %1, %cst [1] : vector<64x32xf32> to vector<64xf32>
    %3 = vector.shape_cast %2 : vector<64xf32> to vector<64x1xf32>
    %cst_2 = arith.constant 3.200000e+01 : f32
    %4 = vector.broadcast %cst_2 : f32 to vector<64x1xf32>
    %5 = arith.divf %3, %4 : vector<64x1xf32>
    %6 = vector.broadcast %5 : vector<64x1xf32> to vector<64x32xf32>
    %7 = arith.subf %1, %6 : vector<64x32xf32>
    %8 = arith.mulf %7, %7 : vector<64x32xf32>
    %cst_3 = arith.constant dense<0.000000e+00> : vector<64xf32>
    %9 = vector.multi_reduction <add>, %8, %cst_3 [1] : vector<64x32xf32> to vector<64xf32>
    %10 = vector.shape_cast %9 : vector<64xf32> to vector<64x1xf32>
    %cst_4 = arith.constant 3.200000e+01 : f32
    %11 = vector.broadcast %cst_4 : f32 to vector<64x1xf32>
    %12 = arith.divf %10, %11 : vector<64x1xf32>
    %13 = vector.broadcast %5 : vector<64x1xf32> to vector<64x32xf32>
    %14 = arith.subf %1, %13 : vector<64x32xf32>
    %cst_5 = arith.constant 9.99999974E-6 : f32
    %15 = vector.broadcast %cst_5 : f32 to vector<64x1xf32>
    %16 = arith.addf %12, %15 : vector<64x1xf32>
    %17 = math.rsqrt %16 : vector<64x1xf32>
    %18 = vector.broadcast %17 : vector<64x1xf32> to vector<64x32xf32>
    %19 = arith.mulf %14, %18 : vector<64x32xf32>
    %c0_6 = arith.constant 0 : index
    %c0_7 = arith.constant 0 : index
    %20 = vector.load %arg8[%c0_6, %c0_7] : memref<1x32xf32, #tpu.memory_space<vmem>>, vector<1x32xf32>
    %21 = vector.broadcast %20 : vector<1x32xf32> to vector<64x32xf32>
    %22 = arith.mulf %19, %21 : vector<64x32xf32>
    %c0_8 = arith.constant 0 : index
    %c0_9 = arith.constant 0 : index
    %23 = vector.load %arg9[%c0_8, %c0_9] : memref<1x32xf32, #tpu.memory_space<vmem>>, vector<1x32xf32>
    %24 = vector.broadcast %23 : vector<1x32xf32> to vector<64x32xf32>
    %25 = arith.addf %22, %24 : vector<64x32xf32>
    %26 = arith.truncf %25 : vector<64x32xf32> to vector<64x32xbf16>
    %c0_10 = arith.constant 0 : index
    %c0_11 = arith.constant 0 : index
    %27 = vector.load %arg4[%c0_10, %c0_11] : memref<32x96xf32, #tpu.memory_space<vmem>>, vector<32x96xf32>
    %28 = arith.truncf %27 : vector<32x96xf32> to vector<32x96xbf16>
    %cst_12 = arith.constant dense<0.000000e+00> : vector<64x96xf32>
    %29 = tpu.matmul %26, %28, %cst_12 {dimension_numbers = #tpu.dot_dimension_numbers<[1], [0], [0], [1], [0, 0, 1, 1], [], []>} : vector<64x32xbf16>, vector<32x96xbf16>, vector<64x96xf32> -> vector<64x96xf32>
    %c0_13 = arith.constant 0 : index
    %c0_14 = arith.constant 0 : index
    %30 = vector.load %arg5[%c0_13, %c0_14] : memref<1x96xf32, #tpu.memory_space<vmem>>, vector<1x96xf32>
    %31 = vector.broadcast %30 : vector<1x96xf32> to vector<64x96xf32>
    %32 = arith.addf %29, %31 : vector<64x96xf32>
    %c0_15 = arith.constant 0 : index
    %c0_16 = arith.constant 0 : index
    %c0_17 = arith.constant 0 : index
    %33 = vector.load %arg2[%c0_15, %c0_16, %c0_17] : memref<4x16x16xf32, #tpu.memory_space<vmem>>, vector<4x16x16xf32>
    %c0_18 = arith.constant 0 : index
    %c0_19 = arith.constant 0 : index
    %c0_20 = arith.constant 0 : index
    %34 = vector.load %arg3[%c0_18, %c0_19, %c0_20] : memref<1x16x16xf32, #tpu.memory_space<vmem>>, vector<1x16x16xf32>
    %35 = vector.extract_strided_slice %32 {offsets = [0, 0], sizes = [64, 8], strides = [1, 1]} : vector<64x96xf32> to vector<64x8xf32>
    %36 = vector.shape_cast %35 : vector<64x8xf32> to vector<4x16x8xf32>
    %37 = arith.truncf %36 : vector<4x16x8xf32> to vector<4x16x8xbf16>
    %38 = vector.extract_strided_slice %32 {offsets = [0, 32], sizes = [64, 8], strides = [1, 1]} : vector<64x96xf32> to vector<64x8xf32>
    %39 = vector.shape_cast %38 : vector<64x8xf32> to vector<4x16x8xf32>
    %40 = arith.truncf %39 : vector<4x16x8xf32> to vector<4x16x8xbf16>
    %41 = vector.extract_strided_slice %32 {offsets = [0, 64], sizes = [64, 8], strides = [1, 1]} : vector<64x96xf32> to vector<64x8xf32>
    %42 = vector.shape_cast %41 : vector<64x8xf32> to vector<4x16x8xf32>
    %43 = arith.truncf %42 : vector<4x16x8xf32> to vector<4x16x8xbf16>
    "tpu.trace_start"() <{level = 10 : i32, message = "wqd,wkd->wqk"}> : () -> ()
    %cst_21 = arith.constant dense<0.000000e+00> : vector<4x16x16xf32>
    %44 = tpu.matmul %37, %40, %cst_21 {dimension_numbers = #tpu.dot_dimension_numbers<[2], [2], [1], [1], [0, 0, 0, 1, 1, 1], [0], [0]>} : vector<4x16x8xbf16>, vector<4x16x8xbf16>, vector<4x16x16xf32> -> vector<4x16x16xf32>
    "tpu.trace_stop"() : () -> ()
    %cst_22 = arith.constant 0.353553385 : f32
    %45 = vector.broadcast %cst_22 : f32 to vector<4x16x16xf32>
    %46 = arith.mulf %44, %45 : vector<4x16x16xf32>
    %47 = vector.extract_strided_slice %33 {offsets = [0, 0, 0], sizes = [1, 16, 16], strides = [1, 1, 1]} : vector<4x16x16xf32> to vector<1x16x16xf32>
    %48 = vector.shape_cast %47 : vector<1x16x16xf32> to vector<16x16xf32>
    %49 = vector.shape_cast %48 : vector<16x16xf32> to vector<1x16x16xf32>
    %50 = vector.broadcast %49 : vector<1x16x16xf32> to vector<4x16x16xf32>
    %51 = arith.addf %46, %50 : vector<4x16x16xf32>
    %52 = vector.broadcast %34 : vector<1x16x16xf32> to vector<4x16x16xf32>
    %53 = arith.addf %51, %52 : vector<4x16x16xf32>
    %cst_23 = arith.constant dense<0xFF800000> : vector<4x16xf32>
    %54 = vector.multi_reduction <maximumf>, %53, %cst_23 [2] : vector<4x16x16xf32> to vector<4x16xf32>
    %55 = vector.shape_cast %54 : vector<4x16xf32> to vector<4x16x1xf32>
    %56 = vector.broadcast %55 : vector<4x16x1xf32> to vector<4x16x16xf32>
    %57 = arith.subf %53, %56 : vector<4x16x16xf32>
    %58 = math.exp %57 : vector<4x16x16xf32>
    %cst_24 = arith.constant dense<0.000000e+00> : vector<4x16xf32>
    %59 = vector.multi_reduction <add>, %58, %cst_24 [2] : vector<4x16x16xf32> to vector<4x16xf32>
    %60 = vector.shape_cast %59 : vector<4x16xf32> to vector<4x16x1xf32>
    %61 = tpu.reciprocal %60 {approx = true} : vector<4x16x1xf32> -> vector<4x16x1xf32>
    %62 = vector.broadcast %61 : vector<4x16x1xf32> to vector<4x16x16xf32>
    %63 = arith.mulf %58, %62 : vector<4x16x16xf32>
    %64 = arith.truncf %63 : vector<4x16x16xf32> to vector<4x16x16xbf16>
    "tpu.trace_start"() <{level = 10 : i32, message = "wqk,wkd->wqd"}> : () -> ()
    %cst_25 = arith.constant dense<0.000000e+00> : vector<4x16x8xf32>
    %65 = tpu.matmul %64, %43, %cst_25 {dimension_numbers = #tpu.dot_dimension_numbers<[2], [1], [1], [2], [0, 0, 0, 1, 1, 2], [0], [0]>} : vector<4x16x16xbf16>, vector<4x16x8xbf16>, vector<4x16x8xf32> -> vector<4x16x8xf32>
    "tpu.trace_stop"() : () -> ()
    %66 = vector.shape_cast %65 : vector<4x16x8xf32> to vector<64x8xf32>
    %67 = vector.extract_strided_slice %32 {offsets = [0, 8], sizes = [64, 8], strides = [1, 1]} : vector<64x96xf32> to vector<64x8xf32>
    %68 = vector.shape_cast %67 : vector<64x8xf32> to vector<4x16x8xf32>
    %69 = arith.truncf %68 : vector<4x16x8xf32> to vector<4x16x8xbf16>
    %70 = vector.extract_strided_slice %32 {offsets = [0, 40], sizes = [64, 8], strides = [1, 1]} : vector<64x96xf32> to vector<64x8xf32>
    %71 = vector.shape_cast %70 : vector<64x8xf32> to vector<4x16x8xf32>
    %72 = arith.truncf %71 : vector<4x16x8xf32> to vector<4x16x8xbf16>
    %73 = vector.extract_strided_slice %32 {offsets = [0, 72], sizes = [64, 8], strides = [1, 1]} : vector<64x96xf32> to vector<64x8xf32>
    %74 = vector.shape_cast %73 : vector<64x8xf32> to vector<4x16x8xf32>
    %75 = arith.truncf %74 : vector<4x16x8xf32> to vector<4x16x8xbf16>
    "tpu.trace_start"() <{level = 10 : i32, message = "wqd,wkd->wqk"}> : () -> ()
    %cst_26 = arith.constant dense<0.000000e+00> : vector<4x16x16xf32>
    %76 = tpu.matmul %69, %72, %cst_26 {dimension_numbers = #tpu.dot_dimension_numbers<[2], [2], [1], [1], [0, 0, 0, 1, 1, 1], [0], [0]>} : vector<4x16x8xbf16>, vector<4x16x8xbf16>, vector<4x16x16xf32> -> vector<4x16x16xf32>
    "tpu.trace_stop"() : () -> ()
    %cst_27 = arith.constant 0.353553385 : f32
    %77 = vector.broadcast %cst_27 : f32 to vector<4x16x16xf32>
    %78 = arith.mulf %76, %77 : vector<4x16x16xf32>
    %79 = vector.extract_strided_slice %33 {offsets = [1, 0, 0], sizes = [1, 16, 16], strides = [1, 1, 1]} : vector<4x16x16xf32> to vector<1x16x16xf32>
    %80 = vector.shape_cast %79 : vector<1x16x16xf32> to vector<16x16xf32>
    %81 = vector.shape_cast %80 : vector<16x16xf32> to vector<1x16x16xf32>
    %82 = vector.broadcast %81 : vector<1x16x16xf32> to vector<4x16x16xf32>
    %83 = arith.addf %78, %82 : vector<4x16x16xf32>
    %84 = vector.broadcast %34 : vector<1x16x16xf32> to vector<4x16x16xf32>
    %85 = arith.addf %83, %84 : vector<4x16x16xf32>
    %cst_28 = arith.constant dense<0xFF800000> : vector<4x16xf32>
    %86 = vector.multi_reduction <maximumf>, %85, %cst_28 [2] : vector<4x16x16xf32> to vector<4x16xf32>
    %87 = vector.shape_cast %86 : vector<4x16xf32> to vector<4x16x1xf32>
    %88 = vector.broadcast %87 : vector<4x16x1xf32> to vector<4x16x16xf32>
    %89 = arith.subf %85, %88 : vector<4x16x16xf32>
    %90 = math.exp %89 : vector<4x16x16xf32>
    %cst_29 = arith.constant dense<0.000000e+00> : vector<4x16xf32>
    %91 = vector.multi_reduction <add>, %90, %cst_29 [2] : vector<4x16x16xf32> to vector<4x16xf32>
    %92 = vector.shape_cast %91 : vector<4x16xf32> to vector<4x16x1xf32>
    %93 = tpu.reciprocal %92 {approx = true} : vector<4x16x1xf32> -> vector<4x16x1xf32>
    %94 = vector.broadcast %93 : vector<4x16x1xf32> to vector<4x16x16xf32>
    %95 = arith.mulf %90, %94 : vector<4x16x16xf32>
    %96 = arith.truncf %95 : vector<4x16x16xf32> to vector<4x16x16xbf16>
    "tpu.trace_start"() <{level = 10 : i32, message = "wqk,wkd->wqd"}> : () -> ()
    %cst_30 = arith.constant dense<0.000000e+00> : vector<4x16x8xf32>
    %97 = tpu.matmul %96, %75, %cst_30 {dimension_numbers = #tpu.dot_dimension_numbers<[2], [1], [1], [2], [0, 0, 0, 1, 1, 2], [0], [0]>} : vector<4x16x16xbf16>, vector<4x16x8xbf16>, vector<4x16x8xf32> -> vector<4x16x8xf32>
    "tpu.trace_stop"() : () -> ()
    %98 = vector.shape_cast %97 : vector<4x16x8xf32> to vector<64x8xf32>
    %99 = vector.extract_strided_slice %32 {offsets = [0, 16], sizes = [64, 8], strides = [1, 1]} : vector<64x96xf32> to vector<64x8xf32>
    %100 = vector.shape_cast %99 : vector<64x8xf32> to vector<4x16x8xf32>
    %101 = arith.truncf %100 : vector<4x16x8xf32> to vector<4x16x8xbf16>
    %102 = vector.extract_strided_slice %32 {offsets = [0, 48], sizes = [64, 8], strides = [1, 1]} : vector<64x96xf32> to vector<64x8xf32>
    %103 = vector.shape_cast %102 : vector<64x8xf32> to vector<4x16x8xf32>
    %104 = arith.truncf %103 : vector<4x16x8xf32> to vector<4x16x8xbf16>
    %105 = vector.extract_strided_slice %32 {offsets = [0, 80], sizes = [64, 8], strides = [1, 1]} : vector<64x96xf32> to vector<64x8xf32>
    %106 = vector.shape_cast %105 : vector<64x8xf32> to vector<4x16x8xf32>
    %107 = arith.truncf %106 : vector<4x16x8xf32> to vector<4x16x8xbf16>
    "tpu.trace_start"() <{level = 10 : i32, message = "wqd,wkd->wqk"}> : () -> ()
    %cst_31 = arith.constant dense<0.000000e+00> : vector<4x16x16xf32>
    %108 = tpu.matmul %101, %104, %cst_31 {dimension_numbers = #tpu.dot_dimension_numbers<[2], [2], [1], [1], [0, 0, 0, 1, 1, 1], [0], [0]>} : vector<4x16x8xbf16>, vector<4x16x8xbf16>, vector<4x16x16xf32> -> vector<4x16x16xf32>
    "tpu.trace_stop"() : () -> ()
    %cst_32 = arith.constant 0.353553385 : f32
    %109 = vector.broadcast %cst_32 : f32 to vector<4x16x16xf32>
    %110 = arith.mulf %108, %109 : vector<4x16x16xf32>
    %111 = vector.extract_strided_slice %33 {offsets = [2, 0, 0], sizes = [1, 16, 16], strides = [1, 1, 1]} : vector<4x16x16xf32> to vector<1x16x16xf32>
    %112 = vector.shape_cast %111 : vector<1x16x16xf32> to vector<16x16xf32>
    %113 = vector.shape_cast %112 : vector<16x16xf32> to vector<1x16x16xf32>
    %114 = vector.broadcast %113 : vector<1x16x16xf32> to vector<4x16x16xf32>
    %115 = arith.addf %110, %114 : vector<4x16x16xf32>
    %116 = vector.broadcast %34 : vector<1x16x16xf32> to vector<4x16x16xf32>
    %117 = arith.addf %115, %116 : vector<4x16x16xf32>
    %cst_33 = arith.constant dense<0xFF800000> : vector<4x16xf32>
    %118 = vector.multi_reduction <maximumf>, %117, %cst_33 [2] : vector<4x16x16xf32> to vector<4x16xf32>
    %119 = vector.shape_cast %118 : vector<4x16xf32> to vector<4x16x1xf32>
    %120 = vector.broadcast %119 : vector<4x16x1xf32> to vector<4x16x16xf32>
    %121 = arith.subf %117, %120 : vector<4x16x16xf32>
    %122 = math.exp %121 : vector<4x16x16xf32>
    %cst_34 = arith.constant dense<0.000000e+00> : vector<4x16xf32>
    %123 = vector.multi_reduction <add>, %122, %cst_34 [2] : vector<4x16x16xf32> to vector<4x16xf32>
    %124 = vector.shape_cast %123 : vector<4x16xf32> to vector<4x16x1xf32>
    %125 = tpu.reciprocal %124 {approx = true} : vector<4x16x1xf32> -> vector<4x16x1xf32>
    %126 = vector.broadcast %125 : vector<4x16x1xf32> to vector<4x16x16xf32>
    %127 = arith.mulf %122, %126 : vector<4x16x16xf32>
    %128 = arith.truncf %127 : vector<4x16x16xf32> to vector<4x16x16xbf16>
    "tpu.trace_start"() <{level = 10 : i32, message = "wqk,wkd->wqd"}> : () -> ()
    %cst_35 = arith.constant dense<0.000000e+00> : vector<4x16x8xf32>
    %129 = tpu.matmul %128, %107, %cst_35 {dimension_numbers = #tpu.dot_dimension_numbers<[2], [1], [1], [2], [0, 0, 0, 1, 1, 2], [0], [0]>} : vector<4x16x16xbf16>, vector<4x16x8xbf16>, vector<4x16x8xf32> -> vector<4x16x8xf32>
    "tpu.trace_stop"() : () -> ()
    %130 = vector.shape_cast %129 : vector<4x16x8xf32> to vector<64x8xf32>
    %131 = vector.extract_strided_slice %32 {offsets = [0, 24], sizes = [64, 8], strides = [1, 1]} : vector<64x96xf32> to vector<64x8xf32>
    %132 = vector.shape_cast %131 : vector<64x8xf32> to vector<4x16x8xf32>
    %133 = arith.truncf %132 : vector<4x16x8xf32> to vector<4x16x8xbf16>
    %134 = vector.extract_strided_slice %32 {offsets = [0, 56], sizes = [64, 8], strides = [1, 1]} : vector<64x96xf32> to vector<64x8xf32>
    %135 = vector.shape_cast %134 : vector<64x8xf32> to vector<4x16x8xf32>
    %136 = arith.truncf %135 : vector<4x16x8xf32> to vector<4x16x8xbf16>
    %137 = vector.extract_strided_slice %32 {offsets = [0, 88], sizes = [64, 8], strides = [1, 1]} : vector<64x96xf32> to vector<64x8xf32>
    %138 = vector.shape_cast %137 : vector<64x8xf32> to vector<4x16x8xf32>
    %139 = arith.truncf %138 : vector<4x16x8xf32> to vector<4x16x8xbf16>
    "tpu.trace_start"() <{level = 10 : i32, message = "wqd,wkd->wqk"}> : () -> ()
    %cst_36 = arith.constant dense<0.000000e+00> : vector<4x16x16xf32>
    %140 = tpu.matmul %133, %136, %cst_36 {dimension_numbers = #tpu.dot_dimension_numbers<[2], [2], [1], [1], [0, 0, 0, 1, 1, 1], [0], [0]>} : vector<4x16x8xbf16>, vector<4x16x8xbf16>, vector<4x16x16xf32> -> vector<4x16x16xf32>
    "tpu.trace_stop"() : () -> ()
    %cst_37 = arith.constant 0.353553385 : f32
    %141 = vector.broadcast %cst_37 : f32 to vector<4x16x16xf32>
    %142 = arith.mulf %140, %141 : vector<4x16x16xf32>
    %143 = vector.extract_strided_slice %33 {offsets = [3, 0, 0], sizes = [1, 16, 16], strides = [1, 1, 1]} : vector<4x16x16xf32> to vector<1x16x16xf32>
    %144 = vector.shape_cast %143 : vector<1x16x16xf32> to vector<16x16xf32>
    %145 = vector.shape_cast %144 : vector<16x16xf32> to vector<1x16x16xf32>
    %146 = vector.broadcast %145 : vector<1x16x16xf32> to vector<4x16x16xf32>
    %147 = arith.addf %142, %146 : vector<4x16x16xf32>
    %148 = vector.broadcast %34 : vector<1x16x16xf32> to vector<4x16x16xf32>
    %149 = arith.addf %147, %148 : vector<4x16x16xf32>
    %cst_38 = arith.constant dense<0xFF800000> : vector<4x16xf32>
    %150 = vector.multi_reduction <maximumf>, %149, %cst_38 [2] : vector<4x16x16xf32> to vector<4x16xf32>
    %151 = vector.shape_cast %150 : vector<4x16xf32> to vector<4x16x1xf32>
    %152 = vector.broadcast %151 : vector<4x16x1xf32> to vector<4x16x16xf32>
    %153 = arith.subf %149, %152 : vector<4x16x16xf32>
    %154 = math.exp %153 : vector<4x16x16xf32>
    %cst_39 = arith.constant dense<0.000000e+00> : vector<4x16xf32>
    %155 = vector.multi_reduction <add>, %154, %cst_39 [2] : vector<4x16x16xf32> to vector<4x16xf32>
    %156 = vector.shape_cast %155 : vector<4x16xf32> to vector<4x16x1xf32>
    %157 = tpu.reciprocal %156 {approx = true} : vector<4x16x1xf32> -> vector<4x16x1xf32>
    %158 = vector.broadcast %157 : vector<4x16x1xf32> to vector<4x16x16xf32>
    %159 = arith.mulf %154, %158 : vector<4x16x16xf32>
    %160 = arith.truncf %159 : vector<4x16x16xf32> to vector<4x16x16xbf16>
    "tpu.trace_start"() <{level = 10 : i32, message = "wqk,wkd->wqd"}> : () -> ()
    %cst_40 = arith.constant dense<0.000000e+00> : vector<4x16x8xf32>
    %161 = tpu.matmul %160, %139, %cst_40 {dimension_numbers = #tpu.dot_dimension_numbers<[2], [1], [1], [2], [0, 0, 0, 1, 1, 2], [0], [0]>} : vector<4x16x16xbf16>, vector<4x16x8xbf16>, vector<4x16x8xf32> -> vector<4x16x8xf32>
    "tpu.trace_stop"() : () -> ()
    %162 = vector.shape_cast %161 : vector<4x16x8xf32> to vector<64x8xf32>
    %163 = tpu.concatenate %66, %98, %130, %162 in 1 : vector<64x8xf32>, vector<64x8xf32>, vector<64x8xf32>, vector<64x8xf32> -> vector<64x32xf32>
    %164 = arith.truncf %163 : vector<64x32xf32> to vector<64x32xbf16>
    %c0_41 = arith.constant 0 : index
    %c0_42 = arith.constant 0 : index
    %165 = vector.load %arg6[%c0_41, %c0_42] : memref<32x32xf32, #tpu.memory_space<vmem>>, vector<32x32xf32>
    %166 = arith.truncf %165 : vector<32x32xf32> to vector<32x32xbf16>
    %cst_43 = arith.constant dense<0.000000e+00> : vector<64x32xf32>
    %167 = tpu.matmul %164, %166, %cst_43 {dimension_numbers = #tpu.dot_dimension_numbers<[1], [0], [0], [1], [0, 0, 1, 1], [], []>} : vector<64x32xbf16>, vector<32x32xbf16>, vector<64x32xf32> -> vector<64x32xf32>
    %c0_44 = arith.constant 0 : index
    %c0_45 = arith.constant 0 : index
    %168 = vector.load %arg7[%c0_44, %c0_45] : memref<1x32xf32, #tpu.memory_space<vmem>>, vector<1x32xf32>
    %169 = vector.broadcast %168 : vector<1x32xf32> to vector<64x32xf32>
    %170 = arith.addf %167, %169 : vector<64x32xf32>
    %171 = vector.shape_cast %170 : vector<64x32xf32> to vector<4x16x32xf32>
    %c0_46 = arith.constant 0 : index
    %c0_47 = arith.constant 0 : index
    %c0_48 = arith.constant 0 : index
    %172 = vector.load %arg10[%c0_46, %c0_47, %c0_48] : memref<4x16x32xf32, #tpu.memory_space<vmem>>, vector<4x16x32xf32>
    tpu.vector_store %arg10[%c0_46, %c0_47, %c0_48], %171 {strides = array<i32>} : memref<4x16x32xf32, #tpu.memory_space<vmem>>, vector<4x16x32xf32>,
    return
  }
  func.func @transform_0(%arg0: i32) -> (i32, i32, i32) {
    %c0_i32 = arith.constant 0 : i32
    %c0_i32_0 = arith.constant 0 : i32
    %c0_i32_1 = arith.constant 0 : i32
    return %arg0, %c0_i32, %c0_i32_0 : i32, i32, i32
  }
  func.func @transform_1(%arg0: i32) -> (i32, i32, i32) {
    %c0_i32 = arith.constant 0 : i32
    %c0_i32_0 = arith.constant 0 : i32
    %c0_i32_1 = arith.constant 0 : i32
    %c0_i32_2 = arith.constant 0 : i32
    return %c0_i32, %c0_i32_0, %c0_i32_1 : i32, i32, i32
  }
  func.func @transform_2(%arg0: i32) -> (i32, i32, i32) {
    %c0_i32 = arith.constant 0 : i32
    %c0_i32_0 = arith.constant 0 : i32
    %c0_i32_1 = arith.constant 0 : i32
    %c0_i32_2 = arith.constant 0 : i32
    return %c0_i32, %c0_i32_0, %c0_i32_1 : i32, i32, i32
  }
  func.func @transform_3(%arg0: i32) -> (i32, i32) {
    %c0_i32 = arith.constant 0 : i32
    %c0_i32_0 = arith.constant 0 : i32
    %c0_i32_1 = arith.constant 0 : i32
    return %c0_i32, %c0_i32_0 : i32, i32
  }
  func.func @transform_4(%arg0: i32) -> (i32, i32) {
    %c0_i32 = arith.constant 0 : i32
    %c0_i32_0 = arith.constant 0 : i32
    %c0_i32_1 = arith.constant 0 : i32
    return %c0_i32, %c0_i32_0 : i32, i32
  }
  func.func @transform_5(%arg0: i32) -> (i32, i32) {
    %c0_i32 = arith.constant 0 : i32
    %c0_i32_0 = arith.constant 0 : i32
    %c0_i32_1 = arith.constant 0 : i32
    return %c0_i32, %c0_i32_0 : i32, i32
  }
  func.func @transform_6(%arg0: i32) -> (i32, i32) {
    %c0_i32 = arith.constant 0 : i32
    %c0_i32_0 = arith.constant 0 : i32
    %c0_i32_1 = arith.constant 0 : i32
    return %c0_i32, %c0_i32_0 : i32, i32
  }
  func.func @transform_7(%arg0: i32) -> (i32, i32) {
    %c0_i32 = arith.constant 0 : i32
    %c0_i32_0 = arith.constant 0 : i32
    %c0_i32_1 = arith.constant 0 : i32
    return %c0_i32, %c0_i32_0 : i32, i32
  }
  func.func @transform_8(%arg0: i32) -> (i32, i32) {
    %c0_i32 = arith.constant 0 : i32
    %c0_i32_0 = arith.constant 0 : i32
    %c0_i32_1 = arith.constant 0 : i32
    return %c0_i32, %c0_i32_0 : i32, i32
  }
  func.func @transform_9(%arg0: i32) -> (i32, i32, i32) {
    %c0_i32 = arith.constant 0 : i32
    %c0_i32_0 = arith.constant 0 : i32
    %c0_i32_1 = arith.constant 0 : i32
    return %arg0, %c0_i32, %c0_i32_0 : i32, i32, i32
  }
}

</mosaic_0001>

<llo_original>
// kernel: tpu_custom_call.1
$region0: #{tpu_custom_call.1}
  #allocation0 [shape = 'u32[]', space=smem, size = 0x4, offset = 0x4, fixed_abs, tag = 'smem constant byte address 0x4 - core index']
  #allocation1 [shape = 'u32[144,128]{1,0:T(1,128)}', space=vmem, size = 0x12000, scoped, tag = 'internal scratch']
  %s0 = inlined_call_operand.hbm [shape: f32[8,16,32], index: 0, kind: input, shape index: {}]
  %s1 = inlined_call_operand.hbm [shape: f32[4,16,16], index: 1, kind: input, shape index: {}]
  %s2 = inlined_call_operand.hbm [shape: f32[1,16,16], index: 2, kind: input, shape index: {}]
  %s3 = inlined_call_operand.hbm [shape: f32[32,96], index: 3, kind: input, shape index: {}]
  %s4 = inlined_call_operand.vmem [shape: f32[1,96], index: 4, kind: input, shape index: {}]
  %s5 = inlined_call_operand.hbm [shape: f32[32,32], index: 5, kind: input, shape index: {}]
  %s6 = inlined_call_operand.vmem [shape: f32[1,32], index: 6, kind: input, shape index: {}]
  %s7 = inlined_call_operand.vmem [shape: f32[1,32], index: 7, kind: input, shape index: {}]
  %s8 = inlined_call_operand.vmem [shape: f32[1,32], index: 8, kind: input, shape index: {}]
  %s9 = inlined_call_operand.hbm [shape: f32[8,16,32], index: 9, kind: output, shape index: {}]
  %s10 = sld [smem:[#allocation0]]
  $region89: #{tpu_custom_call.1} parent=0
    _
  %s12 = ssub.s32 1, %s10
  %s13 = scalar_select 0, %s12, %s10
  $region1: #{tpu_custom_call.1} parent=0
    #allocation2 [shape = 'u8[65536]{0}', space=vmem, size = 0x10000, scoped, tag = 'input window, operand 0']
    #allocation3 [shape = 's32[2]{0}', space=sflag, size = 0x8, scoped, tag = 'scoped memory for tpu_custom_call.1']
    #allocation4 [shape = 's32[2]{0}', space=sflag, size = 0x8, scoped, tag = 'scoped memory for tpu_custom_call.1']
    #allocation5 [shape = 'u8[32768]{0}', space=vmem, size = 0x8000, scoped, tag = 'input window, operand 1, single buffered']
    #allocation6 [shape = 's32[1]{0}', space=sflag, size = 0x4, scoped, tag = 'scoped memory for tpu_custom_call.1']
    #allocation7 [shape = 'u8[8192]{0}', space=vmem, size = 0x2000, scoped, tag = 'input window, operand 2, single buffered']
    #allocation8 [shape = 'u8[16384]{0}', space=vmem, size = 0x4000, scoped, tag = 'input window, operand 3, single buffered']
    #allocation9 [shape = 's32[1]{0}', space=sflag, size = 0x4, scoped, tag = 'scoped memory for tpu_custom_call.1']
    #allocation10 [shape = 'u8[16384]{0}', space=vmem, size = 0x4000, scoped, tag = 'input window, operand 5, single buffered']
    #allocation11 [shape = 'u8[65536]{0}', space=vmem, size = 0x10000, scoped, tag = 'output window, operand 0']
    %14 = vsyncpa [#allocation3], 0
    %s15 = scalar_lea.sflag [#allocation3], 1
    %16 = vsyncpa %s15, 0
    %17 = vsyncpa [#allocation6], 0
    %18 = vsyncpa [#allocation9], 0
    %19 = vsyncpa [#allocation4], 0
    %s20 = scalar_lea.sflag [#allocation4], 1
    %21 = vsyncpa %s20, 0
    loop: start=0, step=1, limit=4
    $region2: #{tpu_custom_call.1} parent=1 // loop_pre_header
      _
    $region3: #{tpu_custom_call.1} parent=1 // loop_header
      %s23 = sphi 0, %s27
      %p24 = scmp.ge.s32.totalorder %s23, 4
      %s33 = sphi 0, %s35
      %s36 = sphi 0, %s33
      %s37 = sphi 0, %s36
      %s53 = sphi 0, %s37
      %s57 = sphi 0, %s57
      %s59 = sphi 0, %s57
      %s60 = sphi 0, %s59
      %s74 = sphi 0, %s60
      %s78 = sphi 0, %s78
      %s80 = sphi 0, %s78
      %s81 = sphi 0, %s80
      %s95 = sphi 0, %s81
      %s99 = sphi 0, %s99
      %s101 = sphi 0, %s99
      %s102 = sphi 0, %s101
      %s116 = sphi 0, %s102
      %s120 = sphi 0, %s120
      %s122 = sphi 0, %s120
      %s123 = sphi 0, %s122
      %s137 = sphi 0, %s123
      %s141 = sphi 0, %s141
      %s143 = sphi 0, %s141
      %s144 = sphi 0, %s143
      %s158 = sphi 0, %s144
      %s162 = sphi 0, %s162
      %s164 = sphi 0, %s162
      %s165 = sphi 0, %s164
      %s179 = sphi 0, %s165
      %s183 = sphi 0, %s183
      %s185 = sphi 0, %s183
      %s186 = sphi 0, %s185
      %s200 = sphi 0, %s186
      %s204 = sphi 0, %s204
      %s206 = sphi 0, %s204
      %s207 = sphi 0, %s206
      %s221 = sphi 0, %s207
      %s227 = sphi 0, %s229
      %s230 = sphi 0, %s227
      %s231 = sphi 0, %s230
      %s247 = sphi 0, %s231
    $region4: #{tpu_custom_call.1} parent=1 // loop_header_branch
      %26 = sbr.rel (%p24) target = $region8
    $region5: #{tpu_custom_call.1} parent=1 // loop_body
      %s28 = ssub.s32 %s23, 1
      %s29 = ssub.s32 %s23, 2
      %s30 = sadd.s32 %s23, 1
      %s31 = ssub.s32 %s23, %s30
      %p32 = scmp.eq.s32.totalorder %s31, 0
      %s34 = sadd.s32 %s33, 1
      %s35 = scalar_select %p32, %s33, %s34
      %p38 = pneg %p32
      %p39 = scmp.eq.s32.totalorder %s23, 1
      %p40 = por %p38, %p39
      %p41 = scmp.ne.s32.totalorder %s33, %s36
      %p42 = scmp.eq.s32.totalorder %s23, 0
      %p43 = por %p41, %p42
      %p44 = scmp.ne.s32.totalorder %s33, %s36
      %p45 = scmp.eq.s32.totalorder %s28, 1
      %p46 = por %p44, %p45
      %p47 = scmp.ne.s32.totalorder %s36, %s37
      %p48 = scmp.eq.s32.totalorder %s28, 0
      %p49 = por %p47, %p48
      %p50 = scmp.ne.s32.totalorder %s36, %s37
      %p51 = scmp.eq.s32.totalorder %s29, 1
      %p52 = por %p50, %p51
      %p54 = scmp.ne.s32.totalorder %s37, %s53
      %p55 = scmp.eq.s32.totalorder %s29, 0
      %p56 = por %p54, %p55
      %s58 = sadd.s32 %s57, 1
      %p61 = scmp.eq.s32.totalorder %s23, 1
      %p62 = scmp.ne.s32.totalorder %s57, %s59
      %p63 = scmp.eq.s32.totalorder %s23, 0
      %p64 = por %p62, %p63
      %p65 = scmp.ne.s32.totalorder %s57, %s59
      %p66 = scmp.eq.s32.totalorder %s28, 1
      %p67 = por %p65, %p66
      %p68 = scmp.ne.s32.totalorder %s59, %s60
      %p69 = scmp.eq.s32.totalorder %s28, 0
      %p70 = por %p68, %p69
      %p71 = scmp.ne.s32.totalorder %s59, %s60
      %p72 = scmp.eq.s32.totalorder %s29, 1
      %p73 = por %p71, %p72
      %p75 = scmp.ne.s32.totalorder %s60, %s74
      %p76 = scmp.eq.s32.totalorder %s29, 0
      %p77 = por %p75, %p76
      %s79 = sadd.s32 %s78, 1
      %p82 = scmp.eq.s32.totalorder %s23, 1
      %p83 = scmp.ne.s32.totalorder %s78, %s80
      %p84 = scmp.eq.s32.totalorder %s23, 0
      %p85 = por %p83, %p84
      %p86 = scmp.ne.s32.totalorder %s78, %s80
      %p87 = scmp.eq.s32.totalorder %s28, 1
      %p88 = por %p86, %p87
      %p89 = scmp.ne.s32.totalorder %s80, %s81
      %p90 = scmp.eq.s32.totalorder %s28, 0
      %p91 = por %p89, %p90
      %p92 = scmp.ne.s32.totalorder %s80, %s81
      %p93 = scmp.eq.s32.totalorder %s29, 1
      %p94 = por %p92, %p93
      %p96 = scmp.ne.s32.totalorder %s81, %s95
      %p97 = scmp.eq.s32.totalorder %s29, 0
      %p98 = por %p96, %p97
      %s100 = sadd.s32 %s99, 1
      %p103 = scmp.eq.s32.totalorder %s23, 1
      %p104 = scmp.ne.s32.totalorder %s99, %s101
      %p105 = scmp.eq.s32.totalorder %s23, 0
      %p106 = por %p104, %p105
      %p107 = scmp.ne.s32.totalorder %s99, %s101
      %p108 = scmp.eq.s32.totalorder %s28, 1
      %p109 = por %p107, %p108
      %p110 = scmp.ne.s32.totalorder %s101, %s102
      %p111 = scmp.eq.s32.totalorder %s28, 0
      %p112 = por %p110, %p111
      %p113 = scmp.ne.s32.totalorder %s101, %s102
      %p114 = scmp.eq.s32.totalorder %s29, 1
      %p115 = por %p113, %p114
      %p117 = scmp.ne.s32.totalorder %s102, %s116
      %p118 = scmp.eq.s32.totalorder %s29, 0
      %p119 = por %p117, %p118
      %s121 = sadd.s32 %s120, 1
      %p124 = scmp.eq.s32.totalorder %s23, 1
      %p125 = scmp.ne.s32.totalorder %s120, %s122
      %p126 = scmp.eq.s32.totalorder %s23, 0
      %p127 = por %p125, %p126
      %p128 = scmp.ne.s32.totalorder %s120, %s122
      %p129 = scmp.eq.s32.totalorder %s28, 1
      %p130 = por %p128, %p129
      %p131 = scmp.ne.s32.totalorder %s122, %s123
      %p132 = scmp.eq.s32.totalorder %s28, 0
      %p133 = por %p131, %p132
      %p134 = scmp.ne.s32.totalorder %s122, %s123
      %p135 = scmp.eq.s32.totalorder %s29, 1
      %p136 = por %p134, %p135
      %p138 = scmp.ne.s32.totalorder %s123, %s137
      %p139 = scmp.eq.s32.totalorder %s29, 0
      %p140 = por %p138, %p139
      %s142 = sadd.s32 %s141, 1
      %p145 = scmp.eq.s32.totalorder %s23, 1
      %p146 = scmp.ne.s32.totalorder %s141, %s143
      %p147 = scmp.eq.s32.totalorder %s23, 0
      %p148 = por %p146, %p147
      %p149 = scmp.ne.s32.totalorder %s141, %s143
      %p150 = scmp.eq.s32.totalorder %s28, 1
      %p151 = por %p149, %p150
      %p152 = scmp.ne.s32.totalorder %s143, %s144
      %p153 = scmp.eq.s32.totalorder %s28, 0
      %p154 = por %p152, %p153
      %p155 = scmp.ne.s32.totalorder %s143, %s144
      %p156 = scmp.eq.s32.totalorder %s29, 1
      %p157 = por %p155, %p156
      %p159 = scmp.ne.s32.totalorder %s144, %s158
      %p160 = scmp.eq.s32.totalorder %s29, 0
      %p161 = por %p159, %p160
      %s163 = sadd.s32 %s162, 1
      %p166 = scmp.eq.s32.totalorder %s23, 1
      %p167 = scmp.ne.s32.totalorder %s162, %s164
      %p168 = scmp.eq.s32.totalorder %s23, 0
      %p169 = por %p167, %p168
      %p170 = scmp.ne.s32.totalorder %s162, %s164
      %p171 = scmp.eq.s32.totalorder %s28, 1
      %p172 = por %p170, %p171
      %p173 = scmp.ne.s32.totalorder %s164, %s165
      %p174 = scmp.eq.s32.totalorder %s28, 0
      %p175 = por %p173, %p174
      %p176 = scmp.ne.s32.totalorder %s164, %s165
      %p177 = scmp.eq.s32.totalorder %s29, 1
      %p178 = por %p176, %p177
      %p180 = scmp.ne.s32.totalorder %s165, %s179
      %p181 = scmp.eq.s32.totalorder %s29, 0
      %p182 = por %p180, %p181
      %s184 = sadd.s32 %s183, 1
      %p187 = scmp.eq.s32.totalorder %s23, 1
      %p188 = scmp.ne.s32.totalorder %s183, %s185
      %p189 = scmp.eq.s32.totalorder %s23, 0
      %p190 = por %p188, %p189
      %p191 = scmp.ne.s32.totalorder %s183, %s185
      %p192 = scmp.eq.s32.totalorder %s28, 1
      %p193 = por %p191, %p192
      %p194 = scmp.ne.s32.totalorder %s185, %s186
      %p195 = scmp.eq.s32.totalorder %s28, 0
      %p196 = por %p194, %p195
      %p197 = scmp.ne.s32.totalorder %s185, %s186
      %p198 = scmp.eq.s32.totalorder %s29, 1
      %p199 = por %p197, %p198
      %p201 = scmp.ne.s32.totalorder %s186, %s200
      %p202 = scmp.eq.s32.totalorder %s29, 0
      %p203 = por %p201, %p202
      %s205 = sadd.s32 %s204, 1
      %p208 = scmp.eq.s32.totalorder %s23, 1
      %p209 = scmp.ne.s32.totalorder %s204, %s206
      %p210 = scmp.eq.s32.totalorder %s23, 0
      %p211 = por %p209, %p210
      %p212 = scmp.ne.s32.totalorder %s204, %s206
      %p213 = scmp.eq.s32.totalorder %s28, 1
      %p214 = por %p212, %p213
      %p215 = scmp.ne.s32.totalorder %s206, %s207
      %p216 = scmp.eq.s32.totalorder %s28, 0
      %p217 = por %p215, %p216
      %p218 = scmp.ne.s32.totalorder %s206, %s207
      %p219 = scmp.eq.s32.totalorder %s29, 1
      %p220 = por %p218, %p219
      %p222 = scmp.ne.s32.totalorder %s207, %s221
      %p223 = scmp.eq.s32.totalorder %s29, 0
      %p224 = por %p222, %p223
      %s225 = ssub.s32 %s23, %s30
      %p226 = scmp.eq.s32.totalorder %s225, 0
      %s228 = sadd.s32 %s227, 1
      %s229 = scalar_select %p226, %s227, %s228
      %p232 = pneg %p226
      %p233 = scmp.eq.s32.totalorder %s23, 1
      %p234 = por %p232, %p233
      %p235 = scmp.ne.s32.totalorder %s227, %s230
      %p236 = scmp.eq.s32.totalorder %s23, 0
      %p237 = por %p235, %p236
      %p238 = scmp.ne.s32.totalorder %s227, %s230
      %p239 = scmp.eq.s32.totalorder %s28, 1
      %p240 = por %p238, %p239
      %p241 = scmp.ne.s32.totalorder %s230, %s231
      %p242 = scmp.eq.s32.totalorder %s28, 0
      %p243 = por %p241, %p242
      %p244 = scmp.ne.s32.totalorder %s230, %s231
      %p245 = scmp.eq.s32.totalorder %s29, 1
      %p246 = por %p244, %p245
      %p248 = scmp.ne.s32.totalorder %s231, %s247
      %p249 = scmp.eq.s32.totalorder %s29, 0
      %p250 = por %p248, %p249
      %p251 = scmp.le.s32.totalorder 1, %s23
      %p252 = scmp.lt.s32.totalorder %s23, 3
      %p253 = pnand %p251, %p252
      %p254 = pneg %p253
      // Predicated region
      $region9: #{tpu_custom_call.1} parent=5 // pred_check
        _
      $region10: #{tpu_custom_call.1} parent=5 // pred_check_branch
        %256 = sbr.rel (%p253) target = $region12
      $region11: #{tpu_custom_call.1} parent=5 // pred_region
        %s257 = ssub.s32 %s23, 1
        // Predicated region
        $region13: #{tpu_custom_call.1} parent=11 // pred_check
          %p258 = pneg %p70
        $region14: #{tpu_custom_call.1} parent=11 // pred_check_branch
          %260 = sbr.rel (%p258) target = $region16
        $region15: #{tpu_custom_call.1} parent=11 // pred_region
          %s262 = ssub.s32 1024, 1024
          %263 = vsyncadd [#allocation6], %s262
          %s264 = sshll.u32 [#allocation5], 4
          %s265 = int_to_ptr.vmem [resolvable:$true] %s264
          %270 = dma.hbm_to_vmem [thread:$0]  %s1, 1024, %s265, [#allocation6], 128, 128, 8
        $region16: #{tpu_custom_call.1} parent=11 // pred_fallthru
          _
        // Predicated region
        $region17: #{tpu_custom_call.1} parent=11 // pred_check
          %p271 = pneg %p91
        $region18: #{tpu_custom_call.1} parent=11 // pred_check_branch
          %273 = sbr.rel (%p271) target = $region20
        $region19: #{tpu_custom_call.1} parent=11 // pred_region
          %s275 = ssub.s32 256, 256
          %276 = vsyncadd [#allocation6], %s275
          %s277 = sshll.u32 [#allocation7], 4
          %s278 = int_to_ptr.vmem [resolvable:$true] %s277
          %283 = dma.hbm_to_vmem [thread:$0]  %s2, 256, %s278, [#allocation6], 128, 128, 8
        $region20: #{tpu_custom_call.1} parent=11 // pred_fallthru
          _
        // Predicated region
        $region21: #{tpu_custom_call.1} parent=11 // pred_check
          %p284 = pneg %p112
        $region22: #{tpu_custom_call.1} parent=11 // pred_check_branch
          %286 = sbr.rel (%p284) target = $region24
        $region23: #{tpu_custom_call.1} parent=11 // pred_region
          %s288 = ssub.s32 512, 512
          %289 = vsyncadd [#allocation9], %s288
          %s290 = sshll.u32 [#allocation8], 4
          %s291 = int_to_ptr.vmem [resolvable:$true] %s290
          %296 = dma.hbm_to_vmem [thread:$0]  %s3, 512, %s291, [#allocation9], 128, 128, 8
        $region24: #{tpu_custom_call.1} parent=11 // pred_fallthru
          _
        // Predicated region
        $region25: #{tpu_custom_call.1} parent=11 // pred_check
          %p297 = pneg %p133
        $region26: #{tpu_custom_call.1} parent=11 // pred_check_branch
          %299 = sbr.rel (%p297) target = $region28
        $region27: #{tpu_custom_call.1} parent=11 // pred_region
          _
        $region28: #{tpu_custom_call.1} parent=11 // pred_fallthru
          _
        // Predicated region
        $region29: #{tpu_custom_call.1} parent=11 // pred_check
          %p300 = pneg %p154
        $region30: #{tpu_custom_call.1} parent=11 // pred_check_branch
          %302 = sbr.rel (%p300) target = $region32
        $region31: #{tpu_custom_call.1} parent=11 // pred_region
          %s304 = ssub.s32 512, 512
          %305 = vsyncadd [#allocation9], %s304
          %s306 = sshll.u32 [#allocation10], 4
          %s307 = int_to_ptr.vmem [resolvable:$true] %s306
          %312 = dma.hbm_to_vmem [thread:$0]  %s5, 512, %s307, [#allocation9], 128, 128, 8
        $region32: #{tpu_custom_call.1} parent=11 // pred_fallthru
          _
        // Predicated region
        $region33: #{tpu_custom_call.1} parent=11 // pred_check
          %p313 = pneg %p175
        $region34: #{tpu_custom_call.1} parent=11 // pred_check_branch
          %315 = sbr.rel (%p313) target = $region36
        $region35: #{tpu_custom_call.1} parent=11 // pred_region
          _
        $region36: #{tpu_custom_call.1} parent=11 // pred_fallthru
          _
        // Predicated region
        $region37: #{tpu_custom_call.1} parent=11 // pred_check
          %p316 = pneg %p196
        $region38: #{tpu_custom_call.1} parent=11 // pred_check_branch
          %318 = sbr.rel (%p316) target = $region40
        $region39: #{tpu_custom_call.1} parent=11 // pred_region
          _
        $region40: #{tpu_custom_call.1} parent=11 // pred_fallthru
          _
        // Predicated region
        $region41: #{tpu_custom_call.1} parent=11 // pred_check
          %p319 = pneg %p217
        $region42: #{tpu_custom_call.1} parent=11 // pred_check_branch
          %321 = sbr.rel (%p319) target = $region44
        $region43: #{tpu_custom_call.1} parent=11 // pred_region
          _
        $region44: #{tpu_custom_call.1} parent=11 // pred_fallthru
          _
      $region12: #{tpu_custom_call.1} parent=5 // pred_fallthru
        _
      %p322 = scmp.lt.s32.totalorder %s23, 2
      // Predicated region
      $region45: #{tpu_custom_call.1} parent=5 // pred_check
        %p323 = pneg %p322
      $region46: #{tpu_custom_call.1} parent=5 // pred_check_branch
        %325 = sbr.rel (%p323) target = $region48
      $region47: #{tpu_custom_call.1} parent=5 // pred_region
        // Predicated region
        $region49: #{tpu_custom_call.1} parent=47 // pred_check
          %p326 = pneg %p43
        $region50: #{tpu_custom_call.1} parent=47 // pred_check_branch
          %328 = sbr.rel (%p326) target = $region52
        $region51: #{tpu_custom_call.1} parent=47 // pred_region
          %s329 = sand.u32 %s33, 1
          %s330 = scalar_lea.sflag [#allocation3], %s329
          %s331 = sand.u32 %s33, 1
          %s332 = smul.addr %s331, 64
          %s333 = scalar_lea.vmem [#allocation2], %s332
          %s334 = smul.u32 4, %s23
          %s336 = ssub.s32 1024, 1024
          %337 = vsyncadd %s330, %s336
          %s338 = smul.addr %s334, 2
          %s339 = smul.addr %s338, 128
          %s340 = scalar_lea.hbm %s0, %s339
          %s341 = sshll.u32 %s333, 4
          %s342 = int_to_ptr.vmem [resolvable:$true] %s341
          %347 = dma.hbm_to_vmem [thread:$0]  %s340, 1024, %s342, %s330, 128, 128, 8
        $region52: #{tpu_custom_call.1} parent=47 // pred_fallthru
          _
      $region48: #{tpu_custom_call.1} parent=5 // pred_fallthru
        _
      %p348 = scmp.le.s32.totalorder 1, %s23
      %p349 = scmp.lt.s32.totalorder %s23, 3
      %p350 = pnand %p348, %p349
      %p351 = pneg %p350
      // Predicated region
      $region53: #{tpu_custom_call.1} parent=5 // pred_check
        _
      $region54: #{tpu_custom_call.1} parent=5 // pred_check_branch
        %353 = sbr.rel (%p350) target = $region56
      $region55: #{tpu_custom_call.1} parent=5 // pred_region
        %s354 = ssub.s32 %s23, 1
        %s355 = sand.u32 %s36, 1
        %s356 = scalar_lea.sflag [#allocation3], %s355
        %s357 = sand.u32 %s36, 1
        %s358 = smul.addr %s357, 64
        %s359 = scalar_lea.vmem [#allocation2], %s358
        // Predicated region
        $region57: #{tpu_custom_call.1} parent=55 // pred_check
          %p360 = pneg %p49
        $region58: #{tpu_custom_call.1} parent=55 // pred_check_branch
          %362 = sbr.rel (%p360) target = $region60
        $region59: #{tpu_custom_call.1} parent=55 // pred_region
          %363 = dma.done %s356, 1024
        $region60: #{tpu_custom_call.1} parent=55 // pred_fallthru
          _
        // Predicated region
        $region61: #{tpu_custom_call.1} parent=55 // pred_check
          %p364 = pneg %p70
        $region62: #{tpu_custom_call.1} parent=55 // pred_check_branch
          %366 = sbr.rel (%p364) target = $region64
        $region63: #{tpu_custom_call.1} parent=55 // pred_region
          %367 = dma.done [#allocation6], 1024
        $region64: #{tpu_custom_call.1} parent=55 // pred_fallthru
          _
        // Predicated region
        $region65: #{tpu_custom_call.1} parent=55 // pred_check
          %p368 = pneg %p91
        $region66: #{tpu_custom_call.1} parent=55 // pred_check_branch
          %370 = sbr.rel (%p368) target = $region68
        $region67: #{tpu_custom_call.1} parent=55 // pred_region
          %371 = dma.done [#allocation6], 256
        $region68: #{tpu_custom_call.1} parent=55 // pred_fallthru
          _
        // Predicated region
        $region69: #{tpu_custom_call.1} parent=55 // pred_check
          %p372 = pneg %p112
        $region70: #{tpu_custom_call.1} parent=55 // pred_check_branch
          %374 = sbr.rel (%p372) target = $region72
        $region71: #{tpu_custom_call.1} parent=55 // pred_region
          %375 = dma.done [#allocation9], 512
        $region72: #{tpu_custom_call.1} parent=55 // pred_fallthru
          _
        // Predicated region
        $region73: #{tpu_custom_call.1} parent=55 // pred_check
          %p376 = pneg %p154
        $region74: #{tpu_custom_call.1} parent=55 // pred_check_branch
          %378 = sbr.rel (%p376) target = $region76
        $region75: #{tpu_custom_call.1} parent=55 // pred_region
          %379 = dma.done [#allocation9], 512
        $region76: #{tpu_custom_call.1} parent=55 // pred_fallthru
          _
        %s380 = sand.u32 %s36, 1
        %s381 = scalar_lea.sflag [#allocation3], %s380
        %s382 = sand.u32 %s36, 1
        %s383 = smul.addr %s382, 64
        %s384 = scalar_lea.vmem [#allocation2], %s383
        %p385 = pneg %p49
        %p386 = pneg %p46
        %p387 = pneg %p70
        %p388 = pneg %p67
        %p389 = pneg %p91
        %p390 = pneg %p88
        %p391 = pneg %p112
        %p392 = pneg %p109
        %p393 = pneg %p133
        %p394 = pneg %p130
        %p395 = pneg %p154
        %p396 = pneg %p151
        %p397 = pneg %p175
        %p398 = pneg %p172
        %p399 = pneg %p196
        %p400 = pneg %p193
        %p401 = pneg %p217
        %p402 = pneg %p214
        %p403 = pneg %p243
        %p404 = pneg %p240
        %s405 = sand.u32 %s230, 1
        %s406 = scalar_lea.sflag [#allocation4], %s405
        %s407 = sand.u32 %s230, 1
        %s408 = smul.addr %s407, 64
        %s409 = scalar_lea.vmem [#allocation11], %s408
        %s410 = smul.u32 4, %s28
        %s411 = smul.u32 4, %s28
        %v413 = vld [vmem:[%s359] sm:$0xff]
        %v414 = vld [vmem:[%s359 + $0x8] sm:$0xff]
        %v415 = vld [vmem:[%s359 + $0x10] sm:$0xff]
        %v416 = vld [vmem:[%s359 + $0x18] sm:$0xff]
        %v417 = vld [vmem:[%s359 + $0x20] sm:$0xff]
        %v418 = vld [vmem:[%s359 + $0x28] sm:$0xff]
        %v419 = vld [vmem:[%s359 + $0x30] sm:$0xff]
        %v420 = vld [vmem:[%s359 + $0x38] sm:$0xff]
        %vm421 = vcmask 261120
        %v422 = vsel %vm421, %v413, 0.0
        %423 = vadd.xlane.f32.xlu0 %v422
        %v424 = vpop.xlane.xlu0 %423
        %v425 = vsel %vm421, %v414, 0.0
        %426 = vadd.xlane.f32.xlu0 %v425
        %v427 = vpop.xlane.xlu0 %426
        %v428 = vsel %vm421, %v415, 0.0
        %429 = vadd.xlane.f32.xlu0 %v428
        %v430 = vpop.xlane.xlu0 %429
        %v431 = vsel %vm421, %v416, 0.0
        %432 = vadd.xlane.f32.xlu0 %v431
        %v433 = vpop.xlane.xlu0 %432
        %v434 = vsel %vm421, %v417, 0.0
        %435 = vadd.xlane.f32.xlu0 %v434
        %v436 = vpop.xlane.xlu0 %435
        %v437 = vsel %vm421, %v418, 0.0
        %438 = vadd.xlane.f32.xlu0 %v437
        %v439 = vpop.xlane.xlu0 %438
        %v440 = vsel %vm421, %v419, 0.0
        %441 = vadd.xlane.f32.xlu0 %v440
        %v442 = vpop.xlane.xlu0 %441
        %v443 = vsel %vm421, %v420, 0.0
        %444 = vadd.xlane.f32.xlu0 %v443
        %v445 = vpop.xlane.xlu0 %444
        %v446 = vrcp.pop 32.0
        %v447 = vmul.f32 %v424, %v446
        %v448 = vmul.f32 %v427, %v446
        %v449 = vmul.f32 %v430, %v446
        %v450 = vmul.f32 %v433, %v446
        %v451 = vmul.f32 %v436, %v446
        %v452 = vmul.f32 %v439, %v446
        %v453 = vmul.f32 %v442, %v446
        %v454 = vmul.f32 %v445, %v446
        %v455 = vsub.f32 %v413, %v447
        %v456 = vsub.f32 %v414, %v448
        %v457 = vsub.f32 %v415, %v449
        %v458 = vsub.f32 %v416, %v450
        %v459 = vsub.f32 %v417, %v451
        %v460 = vsub.f32 %v418, %v452
        %v461 = vsub.f32 %v419, %v453
        %v462 = vsub.f32 %v420, %v454
        %v463 = vmul.f32 %v455, %v455
        %v464 = vmul.f32 %v456, %v456
        %v465 = vmul.f32 %v457, %v457
        %v466 = vmul.f32 %v458, %v458
        %v467 = vmul.f32 %v459, %v459
        %v468 = vmul.f32 %v460, %v460
        %v469 = vmul.f32 %v461, %v461
        %v470 = vmul.f32 %v462, %v462
        %v471 = vsel %vm421, %v463, 0.0
        %472 = vadd.xlane.f32.xlu0 %v471
        %v473 = vpop.xlane.xlu0 %472
        %v474 = vsel %vm421, %v464, 0.0
        %475 = vadd.xlane.f32.xlu0 %v474
        %v476 = vpop.xlane.xlu0 %475
        %v477 = vsel %vm421, %v465, 0.0
        %478 = vadd.xlane.f32.xlu0 %v477
        %v479 = vpop.xlane.xlu0 %478
        %v480 = vsel %vm421, %v466, 0.0
        %481 = vadd.xlane.f32.xlu0 %v480
        %v482 = vpop.xlane.xlu0 %481
        %v483 = vsel %vm421, %v467, 0.0
        %484 = vadd.xlane.f32.xlu0 %v483
        %v485 = vpop.xlane.xlu0 %484
        %v486 = vsel %vm421, %v468, 0.0
        %487 = vadd.xlane.f32.xlu0 %v486
        %v488 = vpop.xlane.xlu0 %487
        %v489 = vsel %vm421, %v469, 0.0
        %490 = vadd.xlane.f32.xlu0 %v489
        %v491 = vpop.xlane.xlu0 %490
        %v492 = vsel %vm421, %v470, 0.0
        %493 = vadd.xlane.f32.xlu0 %v492
        %v494 = vpop.xlane.xlu0 %493
        %v495 = vmul.f32 %v473, %v446
        %v496 = vmul.f32 %v476, %v446
        %v497 = vmul.f32 %v479, %v446
        %v498 = vmul.f32 %v482, %v446
        %v499 = vmul.f32 %v485, %v446
        %v500 = vmul.f32 %v488, %v446
        %v501 = vmul.f32 %v491, %v446
        %v502 = vmul.f32 %v494, %v446
        %v503 = vadd.f32 %v495, 1e-05
        %v504 = vadd.f32 %v496, 1e-05
        %v505 = vadd.f32 %v497, 1e-05
        %v506 = vadd.f32 %v498, 1e-05
        %v507 = vadd.f32 %v499, 1e-05
        %v508 = vadd.f32 %v500, 1e-05
        %v509 = vadd.f32 %v501, 1e-05
        %v510 = vadd.f32 %v502, 1e-05
        %v511 = vrsqrt.pop %v503
        %v512 = vrsqrt.pop %v504
        %v513 = vrsqrt.pop %v505
        %v514 = vrsqrt.pop %v506
        %v515 = vrsqrt.pop %v507
        %v516 = vrsqrt.pop %v508
        %v517 = vrsqrt.pop %v509
        %v518 = vrsqrt.pop %v510
        %v519 = vmul.f32 %v455, %v511
        %v520 = vmul.f32 %v456, %v512
        %v521 = vmul.f32 %v457, %v513
        %v522 = vmul.f32 %v458, %v514
        %v523 = vmul.f32 %v459, %v515
        %v524 = vmul.f32 %v460, %v516
        %v525 = vmul.f32 %v461, %v517
        %v526 = vmul.f32 %v462, %v518
        %v527 = vld [vmem:[%s7] sm:$0x1]
        %v529 = vlaneseq
        %v530 = vshrl.u32 %v529, 7
        %v531 = vsub.s32 0, %v530
        %v532 = vrot.slane %v527, %v531
        %v534 = vmul.f32 %v519, %v532
        %v535 = vmul.f32 %v520, %v532
        %v536 = vmul.f32 %v521, %v532
        %v537 = vmul.f32 %v522, %v532
        %v538 = vmul.f32 %v523, %v532
        %v539 = vmul.f32 %v524, %v532
        %v540 = vmul.f32 %v525, %v532
        %v541 = vmul.f32 %v526, %v532
        %v542 = vld [vmem:[%s8] sm:$0x1]
        %v544 = vlaneseq
        %v545 = vshrl.u32 %v544, 7
        %v546 = vsub.s32 0, %v545
        %v547 = vrot.slane %v542, %v546
        %v549 = vadd.f32 %v534, %v547
        %v550 = vadd.f32 %v535, %v547
        %v551 = vadd.f32 %v536, %v547
        %v552 = vadd.f32 %v537, %v547
        %v553 = vadd.f32 %v538, %v547
        %v554 = vadd.f32 %v539, %v547
        %v555 = vadd.f32 %v540, %v547
        %v556 = vadd.f32 %v541, %v547
        %v557 = vpack.c.bf16 %v550, %v549
        %v558 = vpack.c.bf16 %v552, %v551
        %v559 = vpack.c.bf16 %v554, %v553
        %v560 = vpack.c.bf16 %v556, %v555
        %v561 = vld [vmem:[#allocation8] sm:$0xff]
        %v562 = vld [vmem:[#allocation8 + $0x8] sm:$0xff]
        %v563 = vld [vmem:[#allocation8 + $0x10] sm:$0xff]
        %v564 = vld [vmem:[#allocation8 + $0x18] sm:$0xff]
        %v565 = vpack.c.bf16 %v562, %v561
        %v566 = vpack.c.bf16 %v564, %v563
        %v567 = vld [vmem:[%s4] sm:$0x1]
        %v569 = vlaneseq
        %v570 = vshrl.u32 %v569, 7
        %v571 = vsub.s32 0, %v570
        %v572 = vrot.slane %v567, %v571
        %v575 = vsel %vm421, %v557, 0
        %v578 = vsel %vm421, %v558, 0
        %v581 = vsel %vm421, %v559, 0
        %v584 = vsel %vm421, %v560, 0
        %586 = vmatprep.subr.bf16.mxu0 0
        %587 = vmatpush1.bf16.msra.mxu0 0
        %588 = vmatprep.subr.bf16.mxu0 0
        %589 = vmatpush1.bf16.msra.mxu0 0
        %590 = vmatprep.subr.bf16.mxu0 0
        %591 = vmatpush1.bf16.msra.mxu0 0
        %592 = vmatprep.subr.bf16.mxu0 0
        %593 = vmatpush1.bf16.msra.mxu0 0
        %594 = vmatprep.subr.bf16.mxu0 0
        %595 = vmatpush1.bf16.msra.mxu0 0
        %596 = vmatprep.subr.bf16.mxu0 0
        %597 = vmatpush1.bf16.msra.mxu0 0
        %598 = vmatprep.subr.bf16.mxu0 0
        %599 = vmatpush1.bf16.msra.mxu0 %v566
        %600 = vmatprep.subr.bf16.mxu0 0
        %601 = vmatpush1.bf16.msra.mxu0 %v565
        %602 = vmatprep.subr.bf16.mxu0 0
        %603 = vmatpush2.bf16.msra.mxu0 0
        %604 = vmatprep.subr.bf16.mxu0 0
        %605 = vmatpush2.bf16.msra.mxu0 0
        %606 = vmatprep.subr.bf16.mxu0 0
        %607 = vmatpush2.bf16.msra.mxu0 0
        %608 = vmatprep.subr.bf16.mxu0 0
        %609 = vmatpush2.bf16.msra.mxu0 0
        %610 = vmatprep.subr.bf16.mxu0 0
        %611 = vmatpush2.bf16.msra.mxu0 0
        %612 = vmatprep.subr.bf16.mxu0 0
        %613 = vmatpush2.bf16.msra.mxu0 0
        %614 = vmatprep.subr.bf16.mxu0 0
        %615 = vmatpush2.bf16.msra.mxu0 0
        %616 = vmatprep.subr.bf16.mxu0 0
        %617 = vmatpush2.bf16.msra.mxu0 0
        %618 = vmatprep.mubr.bf16.mxu0 0
        %619 = vmatmul.mubr.bf16.gmra.mxu0 %v575
        %v620 = vpop.f32.mrf.mxu0
        %v621 = vadd.f32 %v572, %v620
        %v622 = vpop.f32.mrf.mxu0
        %v623 = vpop.f32.mrf.mxu0
        %v624 = vadd.f32 %v572, %v623
        %v625 = vpop.f32.mrf.mxu0
        %626 = vmatprep.mubr.bf16.mxu0 0
        %627 = vmatmul.mubr.bf16.gmra.mxu0 %v578
        %v628 = vpop.f32.mrf.mxu0
        %v629 = vadd.f32 %v572, %v628
        %v630 = vpop.f32.mrf.mxu0
        %v631 = vpop.f32.mrf.mxu0
        %v632 = vadd.f32 %v572, %v631
        %v633 = vpop.f32.mrf.mxu0
        %634 = vmatprep.mubr.bf16.mxu0 0
        %635 = vmatmul.mubr.bf16.gmra.mxu0 %v581
        %v636 = vpop.f32.mrf.mxu0
        %v637 = vadd.f32 %v572, %v636
        %v638 = vpop.f32.mrf.mxu0
        %v639 = vpop.f32.mrf.mxu0
        %v640 = vadd.f32 %v572, %v639
        %v641 = vpop.f32.mrf.mxu0
        %642 = vmatprep.mubr.bf16.mxu0 0
        %643 = vmatmul.mubr.bf16.gmra.mxu0 %v584
        %v644 = vpop.f32.mrf.mxu0
        %v645 = vadd.f32 %v572, %v644
        %v646 = vpop.f32.mrf.mxu0
        %v647 = vpop.f32.mrf.mxu0
        %v648 = vadd.f32 %v572, %v647
        %v649 = vpop.f32.mrf.mxu0
        %650 = vdwg.mxu0
        %v651 = vld [vmem:[#allocation5] sm:$0xff]
        %v652 = vld [vmem:[#allocation5 + $0x8] sm:$0xff]
        %v653 = vld [vmem:[#allocation5 + $0x10] sm:$0xff]
        %v654 = vld [vmem:[#allocation5 + $0x18] sm:$0xff]
        %v655 = vld [vmem:[#allocation5 + $0x20] sm:$0xff]
        %v656 = vld [vmem:[#allocation5 + $0x28] sm:$0xff]
        %v657 = vld [vmem:[#allocation5 + $0x30] sm:$0xff]
        %v658 = vld [vmem:[#allocation5 + $0x38] sm:$0xff]
        %v659 = vld [vmem:[#allocation7] sm:$0xff]
        %v660 = vld [vmem:[#allocation7 + $0x8] sm:$0xff]
        %v661 = vpack.c.bf16 %v624, %v621
        %v662 = vpack.c.bf16 %v632, %v629
        %v663 = vpack.c.bf16 %v640, %v637
        %v664 = vpack.c.bf16 %v648, %v645
        %666 = vrot.lane.b32.xlu0 %v661, 96
        %v667 = vpop.permute.xlu0 %666
        %vm668 = vcmask 64512
        %v670 = vsel %vm668, %v661, 0
        %v673 = vsel %vm668, %v667, 0
        %675 = vmatprep.subr.bf16.mxu0 0
        %676 = vmatpush1.bf16.xpose.msra.mxu0 0
        %677 = vmatprep.subr.bf16.mxu0 0
        %678 = vmatpush1.bf16.xpose.msra.mxu0 0
        %679 = vmatprep.subr.bf16.mxu0 0
        %680 = vmatpush1.bf16.xpose.msra.mxu0 0
        %681 = vmatprep.subr.bf16.mxu0 0
        %682 = vmatpush1.bf16.xpose.msra.mxu0 0
        %683 = vmatprep.subr.bf16.mxu0 0
        %684 = vmatpush1.bf16.xpose.msra.mxu0 0
        %685 = vmatprep.subr.bf16.mxu0 0
        %686 = vmatpush1.bf16.xpose.msra.mxu0 0
        %687 = vmatprep.subr.bf16.mxu0 0
        %688 = vmatpush1.bf16.xpose.msra.mxu0 0
        %689 = vmatprep.subr.bf16.mxu0 0
        %690 = vmatpush1.bf16.xpose.msra.mxu0 %v673
        %691 = vmatprep.subr.bf16.mxu0 0
        %692 = vmatpush2.bf16.xpose.msra.mxu0 0
        %693 = vmatprep.subr.bf16.mxu0 0
        %694 = vmatpush2.bf16.xpose.msra.mxu0 0
        %695 = vmatprep.subr.bf16.mxu0 0
        %696 = vmatpush2.bf16.xpose.msra.mxu0 0
        %697 = vmatprep.subr.bf16.mxu0 0
        %698 = vmatpush2.bf16.xpose.msra.mxu0 0
        %699 = vmatprep.subr.bf16.mxu0 0
        %700 = vmatpush2.bf16.xpose.msra.mxu0 0
        %701 = vmatprep.subr.bf16.mxu0 0
        %702 = vmatpush2.bf16.xpose.msra.mxu0 0
        %703 = vmatprep.subr.bf16.mxu0 0
        %704 = vmatpush2.bf16.xpose.msra.mxu0 0
        %705 = vmatprep.subr.bf16.mxu0 0
        %706 = vmatpush2.bf16.xpose.msra.mxu0 0
        %707 = vmatprep.mubr.bf16.mxu0 0
        %708 = vmatmul.mubr.bf16.gmra.mxu0 %v670
        %v709 = vpop.f32.mrf.mxu0
        %v710 = vadd.f32 0.0, %v709
        %v711 = vpop.f32.mrf.mxu0
        %v712 = vpop.f32.mrf.mxu0
        %v713 = vadd.f32 0.0, %v712
        %v714 = vpop.f32.mrf.mxu0
        %715 = vdwg.mxu0
        %717 = vrot.lane.b32.xlu0 %v662, 96
        %v718 = vpop.permute.xlu0 %717
        %v720 = vsel %vm668, %v662, 0
        %v723 = vsel %vm668, %v718, 0
        %725 = vmatprep.subr.bf16.mxu0 0
        %726 = vmatpush1.bf16.xpose.msra.mxu0 0
        %727 = vmatprep.subr.bf16.mxu0 0
        %728 = vmatpush1.bf16.xpose.msra.mxu0 0
        %729 = vmatprep.subr.bf16.mxu0 0
        %730 = vmatpush1.bf16.xpose.msra.mxu0 0
        %731 = vmatprep.subr.bf16.mxu0 0
        %732 = vmatpush1.bf16.xpose.msra.mxu0 0
        %733 = vmatprep.subr.bf16.mxu0 0
        %734 = vmatpush1.bf16.xpose.msra.mxu0 0
        %735 = vmatprep.subr.bf16.mxu0 0
        %736 = vmatpush1.bf16.xpose.msra.mxu0 0
        %737 = vmatprep.subr.bf16.mxu0 0
        %738 = vmatpush1.bf16.xpose.msra.mxu0 0
        %739 = vmatprep.subr.bf16.mxu0 0
        %740 = vmatpush1.bf16.xpose.msra.mxu0 %v723
        %741 = vmatprep.subr.bf16.mxu0 0
        %742 = vmatpush2.bf16.xpose.msra.mxu0 0
        %743 = vmatprep.subr.bf16.mxu0 0
        %744 = vmatpush2.bf16.xpose.msra.mxu0 0
        %745 = vmatprep.subr.bf16.mxu0 0
        %746 = vmatpush2.bf16.xpose.msra.mxu0 0
        %747 = vmatprep.subr.bf16.mxu0 0
        %748 = vmatpush2.bf16.xpose.msra.mxu0 0
        %749 = vmatprep.subr.bf16.mxu0 0
        %750 = vmatpush2.bf16.xpose.msra.mxu0 0
        %751 = vmatprep.subr.bf16.mxu0 0
        %752 = vmatpush2.bf16.xpose.msra.mxu0 0
        %753 = vmatprep.subr.bf16.mxu0 0
        %754 = vmatpush2.bf16.xpose.msra.mxu0 0
        %755 = vmatprep.subr.bf16.mxu0 0
        %756 = vmatpush2.bf16.xpose.msra.mxu0 0
        %757 = vmatprep.mubr.bf16.mxu0 0
        %758 = vmatmul.mubr.bf16.gmra.mxu0 %v720
        %v759 = vpop.f32.mrf.mxu0
        %v760 = vadd.f32 0.0, %v759
        %v761 = vpop.f32.mrf.mxu0
        %v762 = vpop.f32.mrf.mxu0
        %v763 = vadd.f32 0.0, %v762
        %v764 = vpop.f32.mrf.mxu0
        %765 = vdwg.mxu0
        %767 = vrot.lane.b32.xlu0 %v663, 96
        %v768 = vpop.permute.xlu0 %767
        %v770 = vsel %vm668, %v663, 0
        %v773 = vsel %vm668, %v768, 0
        %775 = vmatprep.subr.bf16.mxu0 0
        %776 = vmatpush1.bf16.xpose.msra.mxu0 0
        %777 = vmatprep.subr.bf16.mxu0 0
        %778 = vmatpush1.bf16.xpose.msra.mxu0 0
        %779 = vmatprep.subr.bf16.mxu0 0
        %780 = vmatpush1.bf16.xpose.msra.mxu0 0
        %781 = vmatprep.subr.bf16.mxu0 0
        %782 = vmatpush1.bf16.xpose.msra.mxu0 0
        %783 = vmatprep.subr.bf16.mxu0 0
        %784 = vmatpush1.bf16.xpose.msra.mxu0 0
        %785 = vmatprep.subr.bf16.mxu0 0
        %786 = vmatpush1.bf16.xpose.msra.mxu0 0
        %787 = vmatprep.subr.bf16.mxu0 0
        %788 = vmatpush1.bf16.xpose.msra.mxu0 0
        %789 = vmatprep.subr.bf16.mxu0 0
        %790 = vmatpush1.bf16.xpose.msra.mxu0 %v773
        %791 = vmatprep.subr.bf16.mxu0 0
        %792 = vmatpush2.bf16.xpose.msra.mxu0 0
        %793 = vmatprep.subr.bf16.mxu0 0
        %794 = vmatpush2.bf16.xpose.msra.mxu0 0
        %795 = vmatprep.subr.bf16.mxu0 0
        %796 = vmatpush2.bf16.xpose.msra.mxu0 0
        %797 = vmatprep.subr.bf16.mxu0 0
        %798 = vmatpush2.bf16.xpose.msra.mxu0 0
        %799 = vmatprep.subr.bf16.mxu0 0
        %800 = vmatpush2.bf16.xpose.msra.mxu0 0
        %801 = vmatprep.subr.bf16.mxu0 0
        %802 = vmatpush2.bf16.xpose.msra.mxu0 0
        %803 = vmatprep.subr.bf16.mxu0 0
        %804 = vmatpush2.bf16.xpose.msra.mxu0 0
        %805 = vmatprep.subr.bf16.mxu0 0
        %806 = vmatpush2.bf16.xpose.msra.mxu0 0
        %807 = vmatprep.mubr.bf16.mxu0 0
        %808 = vmatmul.mubr.bf16.gmra.mxu0 %v770
        %v809 = vpop.f32.mrf.mxu0
        %v810 = vadd.f32 0.0, %v809
        %v811 = vpop.f32.mrf.mxu0
        %v812 = vpop.f32.mrf.mxu0
        %v813 = vadd.f32 0.0, %v812
        %v814 = vpop.f32.mrf.mxu0
        %815 = vdwg.mxu0
        %817 = vrot.lane.b32.xlu0 %v664, 96
        %v818 = vpop.permute.xlu0 %817
        %v820 = vsel %vm668, %v664, 0
        %v823 = vsel %vm668, %v818, 0
        %825 = vmatprep.subr.bf16.mxu0 0
        %826 = vmatpush1.bf16.xpose.msra.mxu0 0
        %827 = vmatprep.subr.bf16.mxu0 0
        %828 = vmatpush1.bf16.xpose.msra.mxu0 0
        %829 = vmatprep.subr.bf16.mxu0 0
        %830 = vmatpush1.bf16.xpose.msra.mxu0 0
        %831 = vmatprep.subr.bf16.mxu0 0
        %832 = vmatpush1.bf16.xpose.msra.mxu0 0
        %833 = vmatprep.subr.bf16.mxu0 0
        %834 = vmatpush1.bf16.xpose.msra.mxu0 0
        %835 = vmatprep.subr.bf16.mxu0 0
        %836 = vmatpush1.bf16.xpose.msra.mxu0 0
        %837 = vmatprep.subr.bf16.mxu0 0
        %838 = vmatpush1.bf16.xpose.msra.mxu0 0
        %839 = vmatprep.subr.bf16.mxu0 0
        %840 = vmatpush1.bf16.xpose.msra.mxu0 %v823
        %841 = vmatprep.subr.bf16.mxu0 0
        %842 = vmatpush2.bf16.xpose.msra.mxu0 0
        %843 = vmatprep.subr.bf16.mxu0 0
        %844 = vmatpush2.bf16.xpose.msra.mxu0 0
        %845 = vmatprep.subr.bf16.mxu0 0
        %846 = vmatpush2.bf16.xpose.msra.mxu0 0
        %847 = vmatprep.subr.bf16.mxu0 0
        %848 = vmatpush2.bf16.xpose.msra.mxu0 0
        %849 = vmatprep.subr.bf16.mxu0 0
        %850 = vmatpush2.bf16.xpose.msra.mxu0 0
        %851 = vmatprep.subr.bf16.mxu0 0
        %852 = vmatpush2.bf16.xpose.msra.mxu0 0
        %853 = vmatprep.subr.bf16.mxu0 0
        %854 = vmatpush2.bf16.xpose.msra.mxu0 0
        %855 = vmatprep.subr.bf16.mxu0 0
        %856 = vmatpush2.bf16.xpose.msra.mxu0 0
        %857 = vmatprep.mubr.bf16.mxu0 0
        %858 = vmatmul.mubr.bf16.gmra.mxu0 %v820
        %v859 = vpop.f32.mrf.mxu0
        %v860 = vadd.f32 0.0, %v859
        %v861 = vpop.f32.mrf.mxu0
        %v862 = vpop.f32.mrf.mxu0
        %v863 = vadd.f32 0.0, %v862
        %v864 = vpop.f32.mrf.mxu0
        %865 = vdwg.mxu0
        %v866 = vmul.f32 %v710, 0.35355338
        %v867 = vmul.f32 %v713, 0.35355338
        %v868 = vmul.f32 %v760, 0.35355338
        %v869 = vmul.f32 %v763, 0.35355338
        %v870 = vmul.f32 %v810, 0.35355338
        %v871 = vmul.f32 %v813, 0.35355338
        %v872 = vmul.f32 %v860, 0.35355338
        %v873 = vmul.f32 %v863, 0.35355338
        %v874 = vadd.f32 %v866, %v651
        %v875 = vadd.f32 %v867, %v652
        %v876 = vadd.f32 %v868, %v651
        %v877 = vadd.f32 %v869, %v652
        %v878 = vadd.f32 %v870, %v651
        %v879 = vadd.f32 %v871, %v652
        %v880 = vadd.f32 %v872, %v651
        %v881 = vadd.f32 %v873, %v652
        %v882 = vadd.f32 %v874, %v659
        %v883 = vadd.f32 %v875, %v660
        %v884 = vadd.f32 %v876, %v659
        %v885 = vadd.f32 %v877, %v660
        %v886 = vadd.f32 %v878, %v659
        %v887 = vadd.f32 %v879, %v660
        %v888 = vadd.f32 %v880, %v659
        %v889 = vadd.f32 %v881, %v660
        %vm890 = vcmask 130048
        %v891 = vsel %vm890, %v882, -inf
        %892 = vmax.xlane.f32.xlu0 %v891
        %v893 = vpop.xlane.xlu0 %892
        %v894 = vsel %vm890, %v883, -inf
        %895 = vmax.xlane.f32.xlu0 %v894
        %v896 = vpop.xlane.xlu0 %895
        %v897 = vsel %vm890, %v884, -inf
        %898 = vmax.xlane.f32.xlu0 %v897
        %v899 = vpop.xlane.xlu0 %898
        %v900 = vsel %vm890, %v885, -inf
        %901 = vmax.xlane.f32.xlu0 %v900
        %v902 = vpop.xlane.xlu0 %901
        %v903 = vsel %vm890, %v886, -inf
        %904 = vmax.xlane.f32.xlu0 %v903
        %v905 = vpop.xlane.xlu0 %904
        %v906 = vsel %vm890, %v887, -inf
        %907 = vmax.xlane.f32.xlu0 %v906
        %v908 = vpop.xlane.xlu0 %907
        %v909 = vsel %vm890, %v888, -inf
        %910 = vmax.xlane.f32.xlu0 %v909
        %v911 = vpop.xlane.xlu0 %910
        %v912 = vsel %vm890, %v889, -inf
        %913 = vmax.xlane.f32.xlu0 %v912
        %v914 = vpop.xlane.xlu0 %913
        %v915 = vsub.f32 %v882, %v893
        %v916 = vsub.f32 %v883, %v896
        %v917 = vsub.f32 %v884, %v899
        %v918 = vsub.f32 %v885, %v902
        %v919 = vsub.f32 %v886, %v905
        %v920 = vsub.f32 %v887, %v908
        %v921 = vsub.f32 %v888, %v911
        %v922 = vsub.f32 %v889, %v914
        %v923 = vmul.f32 %v915, 1.442695
        %v924 = vpow.pop %v923
        %v925 = vmul.f32 %v916, 1.442695
        %v926 = vpow.pop %v925
        %v927 = vmul.f32 %v917, 1.442695
        %v928 = vpow.pop %v927
        %v929 = vmul.f32 %v918, 1.442695
        %v930 = vpow.pop %v929
        %v931 = vmul.f32 %v919, 1.442695
        %v932 = vpow.pop %v931
        %v933 = vmul.f32 %v920, 1.442695
        %v934 = vpow.pop %v933
        %v935 = vmul.f32 %v921, 1.442695
        %v936 = vpow.pop %v935
        %v937 = vmul.f32 %v922, 1.442695
        %v938 = vpow.pop %v937
        %v939 = vsel %vm890, %v924, 0.0
        %940 = vadd.xlane.f32.xlu0 %v939
        %v941 = vpop.xlane.xlu0 %940
        %v942 = vsel %vm890, %v926, 0.0
        %943 = vadd.xlane.f32.xlu0 %v942
        %v944 = vpop.xlane.xlu0 %943
        %v945 = vsel %vm890, %v928, 0.0
        %946 = vadd.xlane.f32.xlu0 %v945
        %v947 = vpop.xlane.xlu0 %946
        %v948 = vsel %vm890, %v930, 0.0
        %949 = vadd.xlane.f32.xlu0 %v948
        %v950 = vpop.xlane.xlu0 %949
        %v951 = vsel %vm890, %v932, 0.0
        %952 = vadd.xlane.f32.xlu0 %v951
        %v953 = vpop.xlane.xlu0 %952
        %v954 = vsel %vm890, %v934, 0.0
        %955 = vadd.xlane.f32.xlu0 %v954
        %v956 = vpop.xlane.xlu0 %955
        %v957 = vsel %vm890, %v936, 0.0
        %958 = vadd.xlane.f32.xlu0 %v957
        %v959 = vpop.xlane.xlu0 %958
        %v960 = vsel %vm890, %v938, 0.0
        %961 = vadd.xlane.f32.xlu0 %v960
        %v962 = vpop.xlane.xlu0 %961
        %v963 = vrcp.pop %v941
        %v964 = vrcp.pop %v944
        %v965 = vrcp.pop %v947
        %v966 = vrcp.pop %v950
        %v967 = vrcp.pop %v953
        %v968 = vrcp.pop %v956
        %v969 = vrcp.pop %v959
        %v970 = vrcp.pop %v962
        %v971 = vmul.f32 %v924, %v963
        %v972 = vmul.f32 %v926, %v964
        %v973 = vmul.f32 %v928, %v965
        %v974 = vmul.f32 %v930, %v966
        %v975 = vmul.f32 %v932, %v967
        %v976 = vmul.f32 %v934, %v968
        %v977 = vmul.f32 %v936, %v969
        %v978 = vmul.f32 %v938, %v970
        %v979 = vpack.c.bf16 %v972, %v971
        %v980 = vpack.c.bf16 %v974, %v973
        %v981 = vpack.c.bf16 %v976, %v975
        %v982 = vpack.c.bf16 %v978, %v977
        %983 = vrot.lane.b32.xlu0 %v661, 64
        %v984 = vpop.permute.xlu0 %983
        %v987 = vsel %vm890, %v979, 0
        %989 = vmatprep.subr.bf16.mxu0 0
        %990 = vmatpush1.bf16.msra.mxu0 0
        %991 = vmatprep.subr.bf16.mxu0 0
        %992 = vmatpush1.bf16.msra.mxu0 0
        %993 = vmatprep.subr.bf16.mxu0 0
        %994 = vmatpush1.bf16.msra.mxu0 0
        %995 = vmatprep.subr.bf16.mxu0 0
        %996 = vmatpush1.bf16.msra.mxu0 0
        %997 = vmatprep.subr.bf16.mxu0 0
        %998 = vmatpush1.bf16.msra.mxu0 0
        %999 = vmatprep.subr.bf16.mxu0 0
        %1000 = vmatpush1.bf16.msra.mxu0 0
        %1001 = vmatprep.subr.bf16.mxu0 0
        %1002 = vmatpush1.bf16.msra.mxu0 0
        %1003 = vmatprep.subr.bf16.mxu0 0
        %1004 = vmatpush1.bf16.msra.mxu0 %v984
        %1005 = vmatprep.subr.bf16.mxu0 0
        %1006 = vmatpush2.bf16.msra.mxu0 0
        %1007 = vmatprep.subr.bf16.mxu0 0
        %1008 = vmatpush2.bf16.msra.mxu0 0
        %1009 = vmatprep.subr.bf16.mxu0 0
        %1010 = vmatpush2.bf16.msra.mxu0 0
        %1011 = vmatprep.subr.bf16.mxu0 0
        %1012 = vmatpush2.bf16.msra.mxu0 0
        %1013 = vmatprep.subr.bf16.mxu0 0
        %1014 = vmatpush2.bf16.msra.mxu0 0
        %1015 = vmatprep.subr.bf16.mxu0 0
        %1016 = vmatpush2.bf16.msra.mxu0 0
        %1017 = vmatprep.subr.bf16.mxu0 0
        %1018 = vmatpush2.bf16.msra.mxu0 0
        %1019 = vmatprep.subr.bf16.mxu0 0
        %1020 = vmatpush2.bf16.msra.mxu0 0
        %1021 = vmatprep.mubr.bf16.mxu0 0
        %1022 = vmatmul.mubr.bf16.gmra.mxu0 %v987
        %v1023 = vpop.f32.mrf.mxu0
        %v1024 = vadd.f32 0.0, %v1023
        %v1025 = vpop.f32.mrf.mxu0
        %v1026 = vpop.f32.mrf.mxu0
        %v1027 = vadd.f32 0.0, %v1026
        %v1028 = vpop.f32.mrf.mxu0
        %1029 = vdwg.mxu0
        %1030 = vrot.lane.b32.xlu0 %v662, 64
        %v1031 = vpop.permute.xlu0 %1030
        %v1034 = vsel %vm890, %v980, 0
        %1036 = vmatprep.subr.bf16.mxu0 0
        %1037 = vmatpush1.bf16.msra.mxu0 0
        %1038 = vmatprep.subr.bf16.mxu0 0
        %1039 = vmatpush1.bf16.msra.mxu0 0
        %1040 = vmatprep.subr.bf16.mxu0 0
        %1041 = vmatpush1.bf16.msra.mxu0 0
        %1042 = vmatprep.subr.bf16.mxu0 0
        %1043 = vmatpush1.bf16.msra.mxu0 0
        %1044 = vmatprep.subr.bf16.mxu0 0
        %1045 = vmatpush1.bf16.msra.mxu0 0
        %1046 = vmatprep.subr.bf16.mxu0 0
        %1047 = vmatpush1.bf16.msra.mxu0 0
        %1048 = vmatprep.subr.bf16.mxu0 0
        %1049 = vmatpush1.bf16.msra.mxu0 0
        %1050 = vmatprep.subr.bf16.mxu0 0
        %1051 = vmatpush1.bf16.msra.mxu0 %v1031
        %1052 = vmatprep.subr.bf16.mxu0 0
        %1053 = vmatpush2.bf16.msra.mxu0 0
        %1054 = vmatprep.subr.bf16.mxu0 0
        %1055 = vmatpush2.bf16.msra.mxu0 0
        %1056 = vmatprep.subr.bf16.mxu0 0
        %1057 = vmatpush2.bf16.msra.mxu0 0
        %1058 = vmatprep.subr.bf16.mxu0 0
        %1059 = vmatpush2.bf16.msra.mxu0 0
        %1060 = vmatprep.subr.bf16.mxu0 0
        %1061 = vmatpush2.bf16.msra.mxu0 0
        %1062 = vmatprep.subr.bf16.mxu0 0
        %1063 = vmatpush2.bf16.msra.mxu0 0
        %1064 = vmatprep.subr.bf16.mxu0 0
        %1065 = vmatpush2.bf16.msra.mxu0 0
        %1066 = vmatprep.subr.bf16.mxu0 0
        %1067 = vmatpush2.bf16.msra.mxu0 0
        %1068 = vmatprep.mubr.bf16.mxu0 0
        %1069 = vmatmul.mubr.bf16.gmra.mxu0 %v1034
        %v1070 = vpop.f32.mrf.mxu0
        %v1071 = vadd.f32 0.0, %v1070
        %v1072 = vpop.f32.mrf.mxu0
        %v1073 = vpop.f32.mrf.mxu0
        %v1074 = vadd.f32 0.0, %v1073
        %v1075 = vpop.f32.mrf.mxu0
        %1076 = vdwg.mxu0
        %1077 = vrot.lane.b32.xlu0 %v663, 64
        %v1078 = vpop.permute.xlu0 %1077
        %v1081 = vsel %vm890, %v981, 0
        %1083 = vmatprep.subr.bf16.mxu0 0
        %1084 = vmatpush1.bf16.msra.mxu0 0
        %1085 = vmatprep.subr.bf16.mxu0 0
        %1086 = vmatpush1.bf16.msra.mxu0 0
        %1087 = vmatprep.subr.bf16.mxu0 0
        %1088 = vmatpush1.bf16.msra.mxu0 0
        %1089 = vmatprep.subr.bf16.mxu0 0
        %1090 = vmatpush1.bf16.msra.mxu0 0
        %1091 = vmatprep.subr.bf16.mxu0 0
        %1092 = vmatpush1.bf16.msra.mxu0 0
        %1093 = vmatprep.subr.bf16.mxu0 0
        %1094 = vmatpush1.bf16.msra.mxu0 0
        %1095 = vmatprep.subr.bf16.mxu0 0
        %1096 = vmatpush1.bf16.msra.mxu0 0
        %1097 = vmatprep.subr.bf16.mxu0 0
        %1098 = vmatpush1.bf16.msra.mxu0 %v1078
        %1099 = vmatprep.subr.bf16.mxu0 0
        %1100 = vmatpush2.bf16.msra.mxu0 0
        %1101 = vmatprep.subr.bf16.mxu0 0
        %1102 = vmatpush2.bf16.msra.mxu0 0
        %1103 = vmatprep.subr.bf16.mxu0 0
        %1104 = vmatpush2.bf16.msra.mxu0 0
        %1105 = vmatprep.subr.bf16.mxu0 0
        %1106 = vmatpush2.bf16.msra.mxu0 0
        %1107 = vmatprep.subr.bf16.mxu0 0
        %1108 = vmatpush2.bf16.msra.mxu0 0
        %1109 = vmatprep.subr.bf16.mxu0 0
        %1110 = vmatpush2.bf16.msra.mxu0 0
        %1111 = vmatprep.subr.bf16.mxu0 0
        %1112 = vmatpush2.bf16.msra.mxu0 0
        %1113 = vmatprep.subr.bf16.mxu0 0
        %1114 = vmatpush2.bf16.msra.mxu0 0
        %1115 = vmatprep.mubr.bf16.mxu0 0
        %1116 = vmatmul.mubr.bf16.gmra.mxu0 %v1081
        %v1117 = vpop.f32.mrf.mxu0
        %v1118 = vadd.f32 0.0, %v1117
        %v1119 = vpop.f32.mrf.mxu0
        %v1120 = vpop.f32.mrf.mxu0
        %v1121 = vadd.f32 0.0, %v1120
        %v1122 = vpop.f32.mrf.mxu0
        %1123 = vdwg.mxu0
        %1124 = vrot.lane.b32.xlu0 %v664, 64
        %v1125 = vpop.permute.xlu0 %1124
        %v1128 = vsel %vm890, %v982, 0
        %1130 = vmatprep.subr.bf16.mxu0 0
        %1131 = vmatpush1.bf16.msra.mxu0 0
        %1132 = vmatprep.subr.bf16.mxu0 0
        %1133 = vmatpush1.bf16.msra.mxu0 0
        %1134 = vmatprep.subr.bf16.mxu0 0
        %1135 = vmatpush1.bf16.msra.mxu0 0
        %1136 = vmatprep.subr.bf16.mxu0 0
        %1137 = vmatpush1.bf16.msra.mxu0 0
        %1138 = vmatprep.subr.bf16.mxu0 0
        %1139 = vmatpush1.bf16.msra.mxu0 0
        %1140 = vmatprep.subr.bf16.mxu0 0
        %1141 = vmatpush1.bf16.msra.mxu0 0
        %1142 = vmatprep.subr.bf16.mxu0 0
        %1143 = vmatpush1.bf16.msra.mxu0 0
        %1144 = vmatprep.subr.bf16.mxu0 0
        %1145 = vmatpush1.bf16.msra.mxu0 %v1125
        %1146 = vmatprep.subr.bf16.mxu0 0
        %1147 = vmatpush2.bf16.msra.mxu0 0
        %1148 = vmatprep.subr.bf16.mxu0 0
        %1149 = vmatpush2.bf16.msra.mxu0 0
        %1150 = vmatprep.subr.bf16.mxu0 0
        %1151 = vmatpush2.bf16.msra.mxu0 0
        %1152 = vmatprep.subr.bf16.mxu0 0
        %1153 = vmatpush2.bf16.msra.mxu0 0
        %1154 = vmatprep.subr.bf16.mxu0 0
        %1155 = vmatpush2.bf16.msra.mxu0 0
        %1156 = vmatprep.subr.bf16.mxu0 0
        %1157 = vmatpush2.bf16.msra.mxu0 0
        %1158 = vmatprep.subr.bf16.mxu0 0
        %1159 = vmatpush2.bf16.msra.mxu0 0
        %1160 = vmatprep.subr.bf16.mxu0 0
        %1161 = vmatpush2.bf16.msra.mxu0 0
        %1162 = vmatprep.mubr.bf16.mxu0 0
        %1163 = vmatmul.mubr.bf16.gmra.mxu0 %v1128
        %v1164 = vpop.f32.mrf.mxu0
        %v1165 = vadd.f32 0.0, %v1164
        %v1166 = vpop.f32.mrf.mxu0
        %v1167 = vpop.f32.mrf.mxu0
        %v1168 = vadd.f32 0.0, %v1167
        %v1169 = vpop.f32.mrf.mxu0
        %1170 = vdwg.mxu0
        %1171 = vrot.lane.b32.xlu0 %v661, 120
        %v1172 = vpop.permute.xlu0 %1171
        %1173 = vrot.lane.b32.xlu0 %v661, 88
        %v1174 = vpop.permute.xlu0 %1173
        %v1176 = vsel %vm668, %v1172, 0
        %v1179 = vsel %vm668, %v1174, 0
        %1181 = vmatprep.subr.bf16.mxu0 0
        %1182 = vmatpush1.bf16.xpose.msra.mxu0 0
        %1183 = vmatprep.subr.bf16.mxu0 0
        %1184 = vmatpush1.bf16.xpose.msra.mxu0 0
        %1185 = vmatprep.subr.bf16.mxu0 0
        %1186 = vmatpush1.bf16.xpose.msra.mxu0 0
        %1187 = vmatprep.subr.bf16.mxu0 0
        %1188 = vmatpush1.bf16.xpose.msra.mxu0 0
        %1189 = vmatprep.subr.bf16.mxu0 0
        %1190 = vmatpush1.bf16.xpose.msra.mxu0 0
        %1191 = vmatprep.subr.bf16.mxu0 0
        %1192 = vmatpush1.bf16.xpose.msra.mxu0 0
        %1193 = vmatprep.subr.bf16.mxu0 0
        %1194 = vmatpush1.bf16.xpose.msra.mxu0 0
        %1195 = vmatprep.subr.bf16.mxu0 0
        %1196 = vmatpush1.bf16.xpose.msra.mxu0 %v1179
        %1197 = vmatprep.subr.bf16.mxu0 0
        %1198 = vmatpush2.bf16.xpose.msra.mxu0 0
        %1199 = vmatprep.subr.bf16.mxu0 0
        %1200 = vmatpush2.bf16.xpose.msra.mxu0 0
        %1201 = vmatprep.subr.bf16.mxu0 0
        %1202 = vmatpush2.bf16.xpose.msra.mxu0 0
        %1203 = vmatprep.subr.bf16.mxu0 0
        %1204 = vmatpush2.bf16.xpose.msra.mxu0 0
        %1205 = vmatprep.subr.bf16.mxu0 0
        %1206 = vmatpush2.bf16.xpose.msra.mxu0 0
        %1207 = vmatprep.subr.bf16.mxu0 0
        %1208 = vmatpush2.bf16.xpose.msra.mxu0 0
        %1209 = vmatprep.subr.bf16.mxu0 0
        %1210 = vmatpush2.bf16.xpose.msra.mxu0 0
        %1211 = vmatprep.subr.bf16.mxu0 0
        %1212 = vmatpush2.bf16.xpose.msra.mxu0 0
        %1213 = vmatprep.mubr.bf16.mxu0 0
        %1214 = vmatmul.mubr.bf16.gmra.mxu0 %v1176
        %v1215 = vpop.f32.mrf.mxu0
        %v1216 = vadd.f32 0.0, %v1215
        %v1217 = vpop.f32.mrf.mxu0
        %v1218 = vpop.f32.mrf.mxu0
        %v1219 = vadd.f32 0.0, %v1218
        %v1220 = vpop.f32.mrf.mxu0
        %1221 = vdwg.mxu0
        %1222 = vrot.lane.b32.xlu0 %v662, 120
        %v1223 = vpop.permute.xlu0 %1222
        %1224 = vrot.lane.b32.xlu0 %v662, 88
        %v1225 = vpop.permute.xlu0 %1224
        %v1227 = vsel %vm668, %v1223, 0
        %v1230 = vsel %vm668, %v1225, 0
        %1232 = vmatprep.subr.bf16.mxu0 0
        %1233 = vmatpush1.bf16.xpose.msra.mxu0 0
        %1234 = vmatprep.subr.bf16.mxu0 0
        %1235 = vmatpush1.bf16.xpose.msra.mxu0 0
        %1236 = vmatprep.subr.bf16.mxu0 0
        %1237 = vmatpush1.bf16.xpose.msra.mxu0 0
        %1238 = vmatprep.subr.bf16.mxu0 0
        %1239 = vmatpush1.bf16.xpose.msra.mxu0 0
        %1240 = vmatprep.subr.bf16.mxu0 0
        %1241 = vmatpush1.bf16.xpose.msra.mxu0 0
        %1242 = vmatprep.subr.bf16.mxu0 0
        %1243 = vmatpush1.bf16.xpose.msra.mxu0 0
        %1244 = vmatprep.subr.bf16.mxu0 0
        %1245 = vmatpush1.bf16.xpose.msra.mxu0 0
        %1246 = vmatprep.subr.bf16.mxu0 0
        %1247 = vmatpush1.bf16.xpose.msra.mxu0 %v1230
        %1248 = vmatprep.subr.bf16.mxu0 0
        %1249 = vmatpush2.bf16.xpose.msra.mxu0 0
        %1250 = vmatprep.subr.bf16.mxu0 0
        %1251 = vmatpush2.bf16.xpose.msra.mxu0 0
        %1252 = vmatprep.subr.bf16.mxu0 0
        %1253 = vmatpush2.bf16.xpose.msra.mxu0 0
        %1254 = vmatprep.subr.bf16.mxu0 0
        %1255 = vmatpush2.bf16.xpose.msra.mxu0 0
        %1256 = vmatprep.subr.bf16.mxu0 0
        %1257 = vmatpush2.bf16.xpose.msra.mxu0 0
        %1258 = vmatprep.subr.bf16.mxu0 0
        %1259 = vmatpush2.bf16.xpose.msra.mxu0 0
        %1260 = vmatprep.subr.bf16.mxu0 0
        %1261 = vmatpush2.bf16.xpose.msra.mxu0 0
        %1262 = vmatprep.subr.bf16.mxu0 0
        %1263 = vmatpush2.bf16.xpose.msra.mxu0 0
        %1264 = vmatprep.mubr.bf16.mxu0 0
        %1265 = vmatmul.mubr.bf16.gmra.mxu0 %v1227
        %v1266 = vpop.f32.mrf.mxu0
        %v1267 = vadd.f32 0.0, %v1266
        %v1268 = vpop.f32.mrf.mxu0
        %v1269 = vpop.f32.mrf.mxu0
        %v1270 = vadd.f32 0.0, %v1269
        %v1271 = vpop.f32.mrf.mxu0
        %1272 = vdwg.mxu0
        %1273 = vrot.lane.b32.xlu0 %v663, 120
        %v1274 = vpop.permute.xlu0 %1273
        %1275 = vrot.lane.b32.xlu0 %v663, 88
        %v1276 = vpop.permute.xlu0 %1275
        %v1278 = vsel %vm668, %v1274, 0
        %v1281 = vsel %vm668, %v1276, 0
        %1283 = vmatprep.subr.bf16.mxu0 0
        %1284 = vmatpush1.bf16.xpose.msra.mxu0 0
        %1285 = vmatprep.subr.bf16.mxu0 0
        %1286 = vmatpush1.bf16.xpose.msra.mxu0 0
        %1287 = vmatprep.subr.bf16.mxu0 0
        %1288 = vmatpush1.bf16.xpose.msra.mxu0 0
        %1289 = vmatprep.subr.bf16.mxu0 0
        %1290 = vmatpush1.bf16.xpose.msra.mxu0 0
        %1291 = vmatprep.subr.bf16.mxu0 0
        %1292 = vmatpush1.bf16.xpose.msra.mxu0 0
        %1293 = vmatprep.subr.bf16.mxu0 0
        %1294 = vmatpush1.bf16.xpose.msra.mxu0 0
        %1295 = vmatprep.subr.bf16.mxu0 0
        %1296 = vmatpush1.bf16.xpose.msra.mxu0 0
        %1297 = vmatprep.subr.bf16.mxu0 0
        %1298 = vmatpush1.bf16.xpose.msra.mxu0 %v1281
        %1299 = vmatprep.subr.bf16.mxu0 0
        %1300 = vmatpush2.bf16.xpose.msra.mxu0 0
        %1301 = vmatprep.subr.bf16.mxu0 0
        %1302 = vmatpush2.bf16.xpose.msra.mxu0 0
        %1303 = vmatprep.subr.bf16.mxu0 0
        %1304 = vmatpush2.bf16.xpose.msra.mxu0 0
        %1305 = vmatprep.subr.bf16.mxu0 0
        %1306 = vmatpush2.bf16.xpose.msra.mxu0 0
        %1307 = vmatprep.subr.bf16.mxu0 0
        %1308 = vmatpush2.bf16.xpose.msra.mxu0 0
        %1309 = vmatprep.subr.bf16.mxu0 0
        %1310 = vmatpush2.bf16.xpose.msra.mxu0 0
        %1311 = vmatprep.subr.bf16.mxu0 0
        %1312 = vmatpush2.bf16.xpose.msra.mxu0 0
        %1313 = vmatprep.subr.bf16.mxu0 0
        %1314 = vmatpush2.bf16.xpose.msra.mxu0 0
        %1315 = vmatprep.mubr.bf16.mxu0 0
        %1316 = vmatmul.mubr.bf16.gmra.mxu0 %v1278
        %v1317 = vpop.f32.mrf.mxu0
        %v1318 = vadd.f32 0.0, %v1317
        %v1319 = vpop.f32.mrf.mxu0
        %v1320 = vpop.f32.mrf.mxu0
        %v1321 = vadd.f32 0.0, %v1320
        %v1322 = vpop.f32.mrf.mxu0
        %1323 = vdwg.mxu0
        %1324 = vrot.lane.b32.xlu0 %v664, 120
        %v1325 = vpop.permute.xlu0 %1324
        %1326 = vrot.lane.b32.xlu0 %v664, 88
        %v1327 = vpop.permute.xlu0 %1326
        %v1329 = vsel %vm668, %v1325, 0
        %v1332 = vsel %vm668, %v1327, 0
        %1334 = vmatprep.subr.bf16.mxu0 0
        %1335 = vmatpush1.bf16.xpose.msra.mxu0 0
        %1336 = vmatprep.subr.bf16.mxu0 0
        %1337 = vmatpush1.bf16.xpose.msra.mxu0 0
        %1338 = vmatprep.subr.bf16.mxu0 0
        %1339 = vmatpush1.bf16.xpose.msra.mxu0 0
        %1340 = vmatprep.subr.bf16.mxu0 0
        %1341 = vmatpush1.bf16.xpose.msra.mxu0 0
        %1342 = vmatprep.subr.bf16.mxu0 0
        %1343 = vmatpush1.bf16.xpose.msra.mxu0 0
        %1344 = vmatprep.subr.bf16.mxu0 0
        %1345 = vmatpush1.bf16.xpose.msra.mxu0 0
        %1346 = vmatprep.subr.bf16.mxu0 0
        %1347 = vmatpush1.bf16.xpose.msra.mxu0 0
        %1348 = vmatprep.subr.bf16.mxu0 0
        %1349 = vmatpush1.bf16.xpose.msra.mxu0 %v1332
        %1350 = vmatprep.subr.bf16.mxu0 0
        %1351 = vmatpush2.bf16.xpose.msra.mxu0 0
        %1352 = vmatprep.subr.bf16.mxu0 0
        %1353 = vmatpush2.bf16.xpose.msra.mxu0 0
        %1354 = vmatprep.subr.bf16.mxu0 0
        %1355 = vmatpush2.bf16.xpose.msra.mxu0 0
        %1356 = vmatprep.subr.bf16.mxu0 0
        %1357 = vmatpush2.bf16.xpose.msra.mxu0 0
        %1358 = vmatprep.subr.bf16.mxu0 0
        %1359 = vmatpush2.bf16.xpose.msra.mxu0 0
        %1360 = vmatprep.subr.bf16.mxu0 0
        %1361 = vmatpush2.bf16.xpose.msra.mxu0 0
        %1362 = vmatprep.subr.bf16.mxu0 0
        %1363 = vmatpush2.bf16.xpose.msra.mxu0 0
        %1364 = vmatprep.subr.bf16.mxu0 0
        %1365 = vmatpush2.bf16.xpose.msra.mxu0 0
        %1366 = vmatprep.mubr.bf16.mxu0 0
        %1367 = vmatmul.mubr.bf16.gmra.mxu0 %v1329
        %v1368 = vpop.f32.mrf.mxu0
        %v1369 = vadd.f32 0.0, %v1368
        %v1370 = vpop.f32.mrf.mxu0
        %v1371 = vpop.f32.mrf.mxu0
        %v1372 = vadd.f32 0.0, %v1371
        %v1373 = vpop.f32.mrf.mxu0
        %1374 = vdwg.mxu0
        %v1375 = vmul.f32 %v1216, 0.35355338
        %v1376 = vmul.f32 %v1219, 0.35355338
        %v1377 = vmul.f32 %v1267, 0.35355338
        %v1378 = vmul.f32 %v1270, 0.35355338
        %v1379 = vmul.f32 %v1318, 0.35355338
        %v1380 = vmul.f32 %v1321, 0.35355338
        %v1381 = vmul.f32 %v1369, 0.35355338
        %v1382 = vmul.f32 %v1372, 0.35355338
        %v1383 = vadd.f32 %v1375, %v653
        %v1384 = vadd.f32 %v1376, %v654
        %v1385 = vadd.f32 %v1377, %v653
        %v1386 = vadd.f32 %v1378, %v654
        %v1387 = vadd.f32 %v1379, %v653
        %v1388 = vadd.f32 %v1380, %v654
        %v1389 = vadd.f32 %v1381, %v653
        %v1390 = vadd.f32 %v1382, %v654
        %v1391 = vadd.f32 %v1383, %v659
        %v1392 = vadd.f32 %v1384, %v660
        %v1393 = vadd.f32 %v1385, %v659
        %v1394 = vadd.f32 %v1386, %v660
        %v1395 = vadd.f32 %v1387, %v659
        %v1396 = vadd.f32 %v1388, %v660
        %v1397 = vadd.f32 %v1389, %v659
        %v1398 = vadd.f32 %v1390, %v660
        %v1399 = vsel %vm890, %v1391, -inf
        %1400 = vmax.xlane.f32.xlu0 %v1399
        %v1401 = vpop.xlane.xlu0 %1400
        %v1402 = vsel %vm890, %v1392, -inf
        %1403 = vmax.xlane.f32.xlu0 %v1402
        %v1404 = vpop.xlane.xlu0 %1403
        %v1405 = vsel %vm890, %v1393, -inf
        %1406 = vmax.xlane.f32.xlu0 %v1405
        %v1407 = vpop.xlane.xlu0 %1406
        %v1408 = vsel %vm890, %v1394, -inf
        %1409 = vmax.xlane.f32.xlu0 %v1408
        %v1410 = vpop.xlane.xlu0 %1409
        %v1411 = vsel %vm890, %v1395, -inf
        %1412 = vmax.xlane.f32.xlu0 %v1411
        %v1413 = vpop.xlane.xlu0 %1412
        %v1414 = vsel %vm890, %v1396, -inf
        %1415 = vmax.xlane.f32.xlu0 %v1414
        %v1416 = vpop.xlane.xlu0 %1415
        %v1417 = vsel %vm890, %v1397, -inf
        %1418 = vmax.xlane.f32.xlu0 %v1417
        %v1419 = vpop.xlane.xlu0 %1418
        %v1420 = vsel %vm890, %v1398, -inf
        %1421 = vmax.xlane.f32.xlu0 %v1420
        %v1422 = vpop.xlane.xlu0 %1421
        %v1423 = vsub.f32 %v1391, %v1401
        %v1424 = vsub.f32 %v1392, %v1404
        %v1425 = vsub.f32 %v1393, %v1407
        %v1426 = vsub.f32 %v1394, %v1410
        %v1427 = vsub.f32 %v1395, %v1413
        %v1428 = vsub.f32 %v1396, %v1416
        %v1429 = vsub.f32 %v1397, %v1419
        %v1430 = vsub.f32 %v1398, %v1422
        %v1431 = vmul.f32 %v1423, 1.442695
        %v1432 = vpow.pop %v1431
        %v1433 = vmul.f32 %v1424, 1.442695
        %v1434 = vpow.pop %v1433
        %v1435 = vmul.f32 %v1425, 1.442695
        %v1436 = vpow.pop %v1435
        %v1437 = vmul.f32 %v1426, 1.442695
        %v1438 = vpow.pop %v1437
        %v1439 = vmul.f32 %v1427, 1.442695
        %v1440 = vpow.pop %v1439
        %v1441 = vmul.f32 %v1428, 1.442695
        %v1442 = vpow.pop %v1441
        %v1443 = vmul.f32 %v1429, 1.442695
        %v1444 = vpow.pop %v1443
        %v1445 = vmul.f32 %v1430, 1.442695
        %v1446 = vpow.pop %v1445
        %v1447 = vsel %vm890, %v1432, 0.0
        %1448 = vadd.xlane.f32.xlu0 %v1447
        %v1449 = vpop.xlane.xlu0 %1448
        %v1450 = vsel %vm890, %v1434, 0.0
        %1451 = vadd.xlane.f32.xlu0 %v1450
        %v1452 = vpop.xlane.xlu0 %1451
        %v1453 = vsel %vm890, %v1436, 0.0
        %1454 = vadd.xlane.f32.xlu0 %v1453
        %v1455 = vpop.xlane.xlu0 %1454
        %v1456 = vsel %vm890, %v1438, 0.0
        %1457 = vadd.xlane.f32.xlu0 %v1456
        %v1458 = vpop.xlane.xlu0 %1457
        %v1459 = vsel %vm890, %v1440, 0.0
        %1460 = vadd.xlane.f32.xlu0 %v1459
        %v1461 = vpop.xlane.xlu0 %1460
        %v1462 = vsel %vm890, %v1442, 0.0
        %1463 = vadd.xlane.f32.xlu0 %v1462
        %v1464 = vpop.xlane.xlu0 %1463
        %v1465 = vsel %vm890, %v1444, 0.0
        %1466 = vadd.xlane.f32.xlu0 %v1465
        %v1467 = vpop.xlane.xlu0 %1466
        %v1468 = vsel %vm890, %v1446, 0.0
        %1469 = vadd.xlane.f32.xlu0 %v1468
        %v1470 = vpop.xlane.xlu0 %1469
        %v1471 = vrcp.pop %v1449
        %v1472 = vrcp.pop %v1452
        %v1473 = vrcp.pop %v1455
        %v1474 = vrcp.pop %v1458
        %v1475 = vrcp.pop %v1461
        %v1476 = vrcp.pop %v1464
        %v1477 = vrcp.pop %v1467
        %v1478 = vrcp.pop %v1470
        %v1479 = vmul.f32 %v1432, %v1471
        %v1480 = vmul.f32 %v1434, %v1472
        %v1481 = vmul.f32 %v1436, %v1473
        %v1482 = vmul.f32 %v1438, %v1474
        %v1483 = vmul.f32 %v1440, %v1475
        %v1484 = vmul.f32 %v1442, %v1476
        %v1485 = vmul.f32 %v1444, %v1477
        %v1486 = vmul.f32 %v1446, %v1478
        %v1487 = vpack.c.bf16 %v1480, %v1479
        %v1488 = vpack.c.bf16 %v1482, %v1481
        %v1489 = vpack.c.bf16 %v1484, %v1483
        %v1490 = vpack.c.bf16 %v1486, %v1485
        %1491 = vrot.lane.b32.xlu0 %v661, 56
        %v1492 = vpop.permute.xlu0 %1491
        %v1495 = vsel %vm890, %v1487, 0
        %1497 = vmatprep.subr.bf16.mxu0 0
        %1498 = vmatpush1.bf16.msra.mxu0 0
        %1499 = vmatprep.subr.bf16.mxu0 0
        %1500 = vmatpush1.bf16.msra.mxu0 0
        %1501 = vmatprep.subr.bf16.mxu0 0
        %1502 = vmatpush1.bf16.msra.mxu0 0
        %1503 = vmatprep.subr.bf16.mxu0 0
        %1504 = vmatpush1.bf16.msra.mxu0 0
        %1505 = vmatprep.subr.bf16.mxu0 0
        %1506 = vmatpush1.bf16.msra.mxu0 0
        %1507 = vmatprep.subr.bf16.mxu0 0
        %1508 = vmatpush1.bf16.msra.mxu0 0
        %1509 = vmatprep.subr.bf16.mxu0 0
        %1510 = vmatpush1.bf16.msra.mxu0 0
        %1511 = vmatprep.subr.bf16.mxu0 0
        %1512 = vmatpush1.bf16.msra.mxu0 %v1492
        %1513 = vmatprep.subr.bf16.mxu0 0
        %1514 = vmatpush2.bf16.msra.mxu0 0
        %1515 = vmatprep.subr.bf16.mxu0 0
        %1516 = vmatpush2.bf16.msra.mxu0 0
        %1517 = vmatprep.subr.bf16.mxu0 0
        %1518 = vmatpush2.bf16.msra.mxu0 0
        %1519 = vmatprep.subr.bf16.mxu0 0
        %1520 = vmatpush2.bf16.msra.mxu0 0
        %1521 = vmatprep.subr.bf16.mxu0 0
        %1522 = vmatpush2.bf16.msra.mxu0 0
        %1523 = vmatprep.subr.bf16.mxu0 0
        %1524 = vmatpush2.bf16.msra.mxu0 0
        %1525 = vmatprep.subr.bf16.mxu0 0
        %1526 = vmatpush2.bf16.msra.mxu0 0
        %1527 = vmatprep.subr.bf16.mxu0 0
        %1528 = vmatpush2.bf16.msra.mxu0 0
        %1529 = vmatprep.mubr.bf16.mxu0 0
        %1530 = vmatmul.mubr.bf16.gmra.mxu0 %v1495
        %v1531 = vpop.f32.mrf.mxu0
        %v1532 = vadd.f32 0.0, %v1531
        %v1533 = vpop.f32.mrf.mxu0
        %v1534 = vpop.f32.mrf.mxu0
        %v1535 = vadd.f32 0.0, %v1534
        %v1536 = vpop.f32.mrf.mxu0
        %1537 = vdwg.mxu0
        %1538 = vrot.lane.b32.xlu0 %v662, 56
        %v1539 = vpop.permute.xlu0 %1538
        %v1542 = vsel %vm890, %v1488, 0
        %1544 = vmatprep.subr.bf16.mxu0 0
        %1545 = vmatpush1.bf16.msra.mxu0 0
        %1546 = vmatprep.subr.bf16.mxu0 0
        %1547 = vmatpush1.bf16.msra.mxu0 0
        %1548 = vmatprep.subr.bf16.mxu0 0
        %1549 = vmatpush1.bf16.msra.mxu0 0
        %1550 = vmatprep.subr.bf16.mxu0 0
        %1551 = vmatpush1.bf16.msra.mxu0 0
        %1552 = vmatprep.subr.bf16.mxu0 0
        %1553 = vmatpush1.bf16.msra.mxu0 0
        %1554 = vmatprep.subr.bf16.mxu0 0
        %1555 = vmatpush1.bf16.msra.mxu0 0
        %1556 = vmatprep.subr.bf16.mxu0 0
        %1557 = vmatpush1.bf16.msra.mxu0 0
        %1558 = vmatprep.subr.bf16.mxu0 0
        %1559 = vmatpush1.bf16.msra.mxu0 %v1539
        %1560 = vmatprep.subr.bf16.mxu0 0
        %1561 = vmatpush2.bf16.msra.mxu0 0
        %1562 = vmatprep.subr.bf16.mxu0 0
        %1563 = vmatpush2.bf16.msra.mxu0 0
        %1564 = vmatprep.subr.bf16.mxu0 0
        %1565 = vmatpush2.bf16.msra.mxu0 0
        %1566 = vmatprep.subr.bf16.mxu0 0
        %1567 = vmatpush2.bf16.msra.mxu0 0
        %1568 = vmatprep.subr.bf16.mxu0 0
        %1569 = vmatpush2.bf16.msra.mxu0 0
        %1570 = vmatprep.subr.bf16.mxu0 0
        %1571 = vmatpush2.bf16.msra.mxu0 0
        %1572 = vmatprep.subr.bf16.mxu0 0
        %1573 = vmatpush2.bf16.msra.mxu0 0
        %1574 = vmatprep.subr.bf16.mxu0 0
        %1575 = vmatpush2.bf16.msra.mxu0 0
        %1576 = vmatprep.mubr.bf16.mxu0 0
        %1577 = vmatmul.mubr.bf16.gmra.mxu0 %v1542
        %v1578 = vpop.f32.mrf.mxu0
        %v1579 = vadd.f32 0.0, %v1578
        %v1580 = vpop.f32.mrf.mxu0
        %v1581 = vpop.f32.mrf.mxu0
        %v1582 = vadd.f32 0.0, %v1581
        %v1583 = vpop.f32.mrf.mxu0
        %1584 = vdwg.mxu0
        %1585 = vrot.lane.b32.xlu0 %v663, 56
        %v1586 = vpop.permute.xlu0 %1585
        %v1589 = vsel %vm890, %v1489, 0
        %1591 = vmatprep.subr.bf16.mxu0 0
        %1592 = vmatpush1.bf16.msra.mxu0 0
        %1593 = vmatprep.subr.bf16.mxu0 0
        %1594 = vmatpush1.bf16.msra.mxu0 0
        %1595 = vmatprep.subr.bf16.mxu0 0
        %1596 = vmatpush1.bf16.msra.mxu0 0
        %1597 = vmatprep.subr.bf16.mxu0 0
        %1598 = vmatpush1.bf16.msra.mxu0 0
        %1599 = vmatprep.subr.bf16.mxu0 0
        %1600 = vmatpush1.bf16.msra.mxu0 0
        %1601 = vmatprep.subr.bf16.mxu0 0
        %1602 = vmatpush1.bf16.msra.mxu0 0
        %1603 = vmatprep.subr.bf16.mxu0 0
        %1604 = vmatpush1.bf16.msra.mxu0 0
        %1605 = vmatprep.subr.bf16.mxu0 0
        %1606 = vmatpush1.bf16.msra.mxu0 %v1586
        %1607 = vmatprep.subr.bf16.mxu0 0
        %1608 = vmatpush2.bf16.msra.mxu0 0
        %1609 = vmatprep.subr.bf16.mxu0 0
        %1610 = vmatpush2.bf16.msra.mxu0 0
        %1611 = vmatprep.subr.bf16.mxu0 0
        %1612 = vmatpush2.bf16.msra.mxu0 0
        %1613 = vmatprep.subr.bf16.mxu0 0
        %1614 = vmatpush2.bf16.msra.mxu0 0
        %1615 = vmatprep.subr.bf16.mxu0 0
        %1616 = vmatpush2.bf16.msra.mxu0 0
        %1617 = vmatprep.subr.bf16.mxu0 0
        %1618 = vmatpush2.bf16.msra.mxu0 0
        %1619 = vmatprep.subr.bf16.mxu0 0
        %1620 = vmatpush2.bf16.msra.mxu0 0
        %1621 = vmatprep.subr.bf16.mxu0 0
        %1622 = vmatpush2.bf16.msra.mxu0 0
        %1623 = vmatprep.mubr.bf16.mxu0 0
        %1624 = vmatmul.mubr.bf16.gmra.mxu0 %v1589
        %v1625 = vpop.f32.mrf.mxu0
        %v1626 = vadd.f32 0.0, %v1625
        %v1627 = vpop.f32.mrf.mxu0
        %v1628 = vpop.f32.mrf.mxu0
        %v1629 = vadd.f32 0.0, %v1628
        %v1630 = vpop.f32.mrf.mxu0
        %1631 = vdwg.mxu0
        %1632 = vrot.lane.b32.xlu0 %v664, 56
        %v1633 = vpop.permute.xlu0 %1632
        %v1636 = vsel %vm890, %v1490, 0
        %1638 = vmatprep.subr.bf16.mxu0 0
        %1639 = vmatpush1.bf16.msra.mxu0 0
        %1640 = vmatprep.subr.bf16.mxu0 0
        %1641 = vmatpush1.bf16.msra.mxu0 0
        %1642 = vmatprep.subr.bf16.mxu0 0
        %1643 = vmatpush1.bf16.msra.mxu0 0
        %1644 = vmatprep.subr.bf16.mxu0 0
        %1645 = vmatpush1.bf16.msra.mxu0 0
        %1646 = vmatprep.subr.bf16.mxu0 0
        %1647 = vmatpush1.bf16.msra.mxu0 0
        %1648 = vmatprep.subr.bf16.mxu0 0
        %1649 = vmatpush1.bf16.msra.mxu0 0
        %1650 = vmatprep.subr.bf16.mxu0 0
        %1651 = vmatpush1.bf16.msra.mxu0 0
        %1652 = vmatprep.subr.bf16.mxu0 0
        %1653 = vmatpush1.bf16.msra.mxu0 %v1633
        %1654 = vmatprep.subr.bf16.mxu0 0
        %1655 = vmatpush2.bf16.msra.mxu0 0
        %1656 = vmatprep.subr.bf16.mxu0 0
        %1657 = vmatpush2.bf16.msra.mxu0 0
        %1658 = vmatprep.subr.bf16.mxu0 0
        %1659 = vmatpush2.bf16.msra.mxu0 0
        %1660 = vmatprep.subr.bf16.mxu0 0
        %1661 = vmatpush2.bf16.msra.mxu0 0
        %1662 = vmatprep.subr.bf16.mxu0 0
        %1663 = vmatpush2.bf16.msra.mxu0 0
        %1664 = vmatprep.subr.bf16.mxu0 0
        %1665 = vmatpush2.bf16.msra.mxu0 0
        %1666 = vmatprep.subr.bf16.mxu0 0
        %1667 = vmatpush2.bf16.msra.mxu0 0
        %1668 = vmatprep.subr.bf16.mxu0 0
        %1669 = vmatpush2.bf16.msra.mxu0 0
        %1670 = vmatprep.mubr.bf16.mxu0 0
        %1671 = vmatmul.mubr.bf16.gmra.mxu0 %v1636
        %v1672 = vpop.f32.mrf.mxu0
        %v1673 = vadd.f32 0.0, %v1672
        %v1674 = vpop.f32.mrf.mxu0
        %v1675 = vpop.f32.mrf.mxu0
        %v1676 = vadd.f32 0.0, %v1675
        %v1677 = vpop.f32.mrf.mxu0
        %1678 = vdwg.mxu0
        %1679 = vrot.lane.b32.xlu0 %v661, 112
        %v1680 = vpop.permute.xlu0 %1679
        %1681 = vrot.lane.b32.xlu0 %v661, 80
        %v1682 = vpop.permute.xlu0 %1681
        %v1684 = vsel %vm668, %v1680, 0
        %v1687 = vsel %vm668, %v1682, 0
        %1689 = vmatprep.subr.bf16.mxu0 0
        %1690 = vmatpush1.bf16.xpose.msra.mxu0 0
        %1691 = vmatprep.subr.bf16.mxu0 0
        %1692 = vmatpush1.bf16.xpose.msra.mxu0 0
        %1693 = vmatprep.subr.bf16.mxu0 0
        %1694 = vmatpush1.bf16.xpose.msra.mxu0 0
        %1695 = vmatprep.subr.bf16.mxu0 0
        %1696 = vmatpush1.bf16.xpose.msra.mxu0 0
        %1697 = vmatprep.subr.bf16.mxu0 0
        %1698 = vmatpush1.bf16.xpose.msra.mxu0 0
        %1699 = vmatprep.subr.bf16.mxu0 0
        %1700 = vmatpush1.bf16.xpose.msra.mxu0 0
        %1701 = vmatprep.subr.bf16.mxu0 0
        %1702 = vmatpush1.bf16.xpose.msra.mxu0 0
        %1703 = vmatprep.subr.bf16.mxu0 0
        %1704 = vmatpush1.bf16.xpose.msra.mxu0 %v1687
        %1705 = vmatprep.subr.bf16.mxu0 0
        %1706 = vmatpush2.bf16.xpose.msra.mxu0 0
        %1707 = vmatprep.subr.bf16.mxu0 0
        %1708 = vmatpush2.bf16.xpose.msra.mxu0 0
        %1709 = vmatprep.subr.bf16.mxu0 0
        %1710 = vmatpush2.bf16.xpose.msra.mxu0 0
        %1711 = vmatprep.subr.bf16.mxu0 0
        %1712 = vmatpush2.bf16.xpose.msra.mxu0 0
        %1713 = vmatprep.subr.bf16.mxu0 0
        %1714 = vmatpush2.bf16.xpose.msra.mxu0 0
        %1715 = vmatprep.subr.bf16.mxu0 0
        %1716 = vmatpush2.bf16.xpose.msra.mxu0 0
        %1717 = vmatprep.subr.bf16.mxu0 0
        %1718 = vmatpush2.bf16.xpose.msra.mxu0 0
        %1719 = vmatprep.subr.bf16.mxu0 0
        %1720 = vmatpush2.bf16.xpose.msra.mxu0 0
        %1721 = vmatprep.mubr.bf16.mxu0 0
        %1722 = vmatmul.mubr.bf16.gmra.mxu0 %v1684
        %v1723 = vpop.f32.mrf.mxu0
        %v1724 = vadd.f32 0.0, %v1723
        %v1725 = vpop.f32.mrf.mxu0
        %v1726 = vpop.f32.mrf.mxu0
        %v1727 = vadd.f32 0.0, %v1726
        %v1728 = vpop.f32.mrf.mxu0
        %1729 = vdwg.mxu0
        %1730 = vrot.lane.b32.xlu0 %v662, 112
        %v1731 = vpop.permute.xlu0 %1730
        %1732 = vrot.lane.b32.xlu0 %v662, 80
        %v1733 = vpop.permute.xlu0 %1732
        %v1735 = vsel %vm668, %v1731, 0
        %v1738 = vsel %vm668, %v1733, 0
        %1740 = vmatprep.subr.bf16.mxu0 0
        %1741 = vmatpush1.bf16.xpose.msra.mxu0 0
        %1742 = vmatprep.subr.bf16.mxu0 0
        %1743 = vmatpush1.bf16.xpose.msra.mxu0 0
        %1744 = vmatprep.subr.bf16.mxu0 0
        %1745 = vmatpush1.bf16.xpose.msra.mxu0 0
        %1746 = vmatprep.subr.bf16.mxu0 0
        %1747 = vmatpush1.bf16.xpose.msra.mxu0 0
        %1748 = vmatprep.subr.bf16.mxu0 0
        %1749 = vmatpush1.bf16.xpose.msra.mxu0 0
        %1750 = vmatprep.subr.bf16.mxu0 0
        %1751 = vmatpush1.bf16.xpose.msra.mxu0 0
        %1752 = vmatprep.subr.bf16.mxu0 0
        %1753 = vmatpush1.bf16.xpose.msra.mxu0 0
        %1754 = vmatprep.subr.bf16.mxu0 0
        %1755 = vmatpush1.bf16.xpose.msra.mxu0 %v1738
        %1756 = vmatprep.subr.bf16.mxu0 0
        %1757 = vmatpush2.bf16.xpose.msra.mxu0 0
        %1758 = vmatprep.subr.bf16.mxu0 0
        %1759 = vmatpush2.bf16.xpose.msra.mxu0 0
        %1760 = vmatprep.subr.bf16.mxu0 0
        %1761 = vmatpush2.bf16.xpose.msra.mxu0 0
        %1762 = vmatprep.subr.bf16.mxu0 0
        %1763 = vmatpush2.bf16.xpose.msra.mxu0 0
        %1764 = vmatprep.subr.bf16.mxu0 0
        %1765 = vmatpush2.bf16.xpose.msra.mxu0 0
        %1766 = vmatprep.subr.bf16.mxu0 0
        %1767 = vmatpush2.bf16.xpose.msra.mxu0 0
        %1768 = vmatprep.subr.bf16.mxu0 0
        %1769 = vmatpush2.bf16.xpose.msra.mxu0 0
        %1770 = vmatprep.subr.bf16.mxu0 0
        %1771 = vmatpush2.bf16.xpose.msra.mxu0 0
        %1772 = vmatprep.mubr.bf16.mxu0 0
        %1773 = vmatmul.mubr.bf16.gmra.mxu0 %v1735
        %v1774 = vpop.f32.mrf.mxu0
        %v1775 = vadd.f32 0.0, %v1774
        %v1776 = vpop.f32.mrf.mxu0
        %v1777 = vpop.f32.mrf.mxu0
        %v1778 = vadd.f32 0.0, %v1777
        %v1779 = vpop.f32.mrf.mxu0
        %1780 = vdwg.mxu0
        %1781 = vrot.lane.b32.xlu0 %v663, 112
        %v1782 = vpop.permute.xlu0 %1781
        %1783 = vrot.lane.b32.xlu0 %v663, 80
        %v1784 = vpop.permute.xlu0 %1783
        %v1786 = vsel %vm668, %v1782, 0
        %v1789 = vsel %vm668, %v1784, 0
        %1791 = vmatprep.subr.bf16.mxu0 0
        %1792 = vmatpush1.bf16.xpose.msra.mxu0 0
        %1793 = vmatprep.subr.bf16.mxu0 0
        %1794 = vmatpush1.bf16.xpose.msra.mxu0 0
        %1795 = vmatprep.subr.bf16.mxu0 0
        %1796 = vmatpush1.bf16.xpose.msra.mxu0 0
        %1797 = vmatprep.subr.bf16.mxu0 0
        %1798 = vmatpush1.bf16.xpose.msra.mxu0 0
        %1799 = vmatprep.subr.bf16.mxu0 0
        %1800 = vmatpush1.bf16.xpose.msra.mxu0 0
        %1801 = vmatprep.subr.bf16.mxu0 0
        %1802 = vmatpush1.bf16.xpose.msra.mxu0 0
        %1803 = vmatprep.subr.bf16.mxu0 0
        %1804 = vmatpush1.bf16.xpose.msra.mxu0 0
        %1805 = vmatprep.subr.bf16.mxu0 0
        %1806 = vmatpush1.bf16.xpose.msra.mxu0 %v1789
        %1807 = vmatprep.subr.bf16.mxu0 0
        %1808 = vmatpush2.bf16.xpose.msra.mxu0 0
        %1809 = vmatprep.subr.bf16.mxu0 0
        %1810 = vmatpush2.bf16.xpose.msra.mxu0 0
        %1811 = vmatprep.subr.bf16.mxu0 0
        %1812 = vmatpush2.bf16.xpose.msra.mxu0 0
        %1813 = vmatprep.subr.bf16.mxu0 0
        %1814 = vmatpush2.bf16.xpose.msra.mxu0 0
        %1815 = vmatprep.subr.bf16.mxu0 0
        %1816 = vmatpush2.bf16.xpose.msra.mxu0 0
        %1817 = vmatprep.subr.bf16.mxu0 0
        %1818 = vmatpush2.bf16.xpose.msra.mxu0 0
        %1819 = vmatprep.subr.bf16.mxu0 0
        %1820 = vmatpush2.bf16.xpose.msra.mxu0 0
        %1821 = vmatprep.subr.bf16.mxu0 0
        %1822 = vmatpush2.bf16.xpose.msra.mxu0 0
        %1823 = vmatprep.mubr.bf16.mxu0 0
        %1824 = vmatmul.mubr.bf16.gmra.mxu0 %v1786
        %v1825 = vpop.f32.mrf.mxu0
        %v1826 = vadd.f32 0.0, %v1825
        %v1827 = vpop.f32.mrf.mxu0
        %v1828 = vpop.f32.mrf.mxu0
        %v1829 = vadd.f32 0.0, %v1828
        %v1830 = vpop.f32.mrf.mxu0
        %1831 = vdwg.mxu0
        %1832 = vrot.lane.b32.xlu0 %v664, 112
        %v1833 = vpop.permute.xlu0 %1832
        %1834 = vrot.lane.b32.xlu0 %v664, 80
        %v1835 = vpop.permute.xlu0 %1834
        %v1837 = vsel %vm668, %v1833, 0
        %v1840 = vsel %vm668, %v1835, 0
        %1842 = vmatprep.subr.bf16.mxu0 0
        %1843 = vmatpush1.bf16.xpose.msra.mxu0 0
        %1844 = vmatprep.subr.bf16.mxu0 0
        %1845 = vmatpush1.bf16.xpose.msra.mxu0 0
        %1846 = vmatprep.subr.bf16.mxu0 0
        %1847 = vmatpush1.bf16.xpose.msra.mxu0 0
        %1848 = vmatprep.subr.bf16.mxu0 0
        %1849 = vmatpush1.bf16.xpose.msra.mxu0 0
        %1850 = vmatprep.subr.bf16.mxu0 0
        %1851 = vmatpush1.bf16.xpose.msra.mxu0 0
        %1852 = vmatprep.subr.bf16.mxu0 0
        %1853 = vmatpush1.bf16.xpose.msra.mxu0 0
        %1854 = vmatprep.subr.bf16.mxu0 0
        %1855 = vmatpush1.bf16.xpose.msra.mxu0 0
        %1856 = vmatprep.subr.bf16.mxu0 0
        %1857 = vmatpush1.bf16.xpose.msra.mxu0 %v1840
        %1858 = vmatprep.subr.bf16.mxu0 0
        %1859 = vmatpush2.bf16.xpose.msra.mxu0 0
        %1860 = vmatprep.subr.bf16.mxu0 0
        %1861 = vmatpush2.bf16.xpose.msra.mxu0 0
        %1862 = vmatprep.subr.bf16.mxu0 0
        %1863 = vmatpush2.bf16.xpose.msra.mxu0 0
        %1864 = vmatprep.subr.bf16.mxu0 0
        %1865 = vmatpush2.bf16.xpose.msra.mxu0 0
        %1866 = vmatprep.subr.bf16.mxu0 0
        %1867 = vmatpush2.bf16.xpose.msra.mxu0 0
        %1868 = vmatprep.subr.bf16.mxu0 0
        %1869 = vmatpush2.bf16.xpose.msra.mxu0 0
        %1870 = vmatprep.subr.bf16.mxu0 0
        %1871 = vmatpush2.bf16.xpose.msra.mxu0 0
        %1872 = vmatprep.subr.bf16.mxu0 0
        %1873 = vmatpush2.bf16.xpose.msra.mxu0 0
        %1874 = vmatprep.mubr.bf16.mxu0 0
        %1875 = vmatmul.mubr.bf16.gmra.mxu0 %v1837
        %v1876 = vpop.f32.mrf.mxu0
        %v1877 = vadd.f32 0.0, %v1876
        %v1878 = vpop.f32.mrf.mxu0
        %v1879 = vpop.f32.mrf.mxu0
        %v1880 = vadd.f32 0.0, %v1879
        %v1881 = vpop.f32.mrf.mxu0
        %1882 = vdwg.mxu0
        %v1883 = vmul.f32 %v1724, 0.35355338
        %v1884 = vmul.f32 %v1727, 0.35355338
        %v1885 = vmul.f32 %v1775, 0.35355338
        %v1886 = vmul.f32 %v1778, 0.35355338
        %v1887 = vmul.f32 %v1826, 0.35355338
        %v1888 = vmul.f32 %v1829, 0.35355338
        %v1889 = vmul.f32 %v1877, 0.35355338
        %v1890 = vmul.f32 %v1880, 0.35355338
        %v1891 = vadd.f32 %v1883, %v655
        %v1892 = vadd.f32 %v1884, %v656
        %v1893 = vadd.f32 %v1885, %v655
        %v1894 = vadd.f32 %v1886, %v656
        %v1895 = vadd.f32 %v1887, %v655
        %v1896 = vadd.f32 %v1888, %v656
        %v1897 = vadd.f32 %v1889, %v655
        %v1898 = vadd.f32 %v1890, %v656
        %v1899 = vadd.f32 %v1891, %v659
        %v1900 = vadd.f32 %v1892, %v660
        %v1901 = vadd.f32 %v1893, %v659
        %v1902 = vadd.f32 %v1894, %v660
        %v1903 = vadd.f32 %v1895, %v659
        %v1904 = vadd.f32 %v1896, %v660
        %v1905 = vadd.f32 %v1897, %v659
        %v1906 = vadd.f32 %v1898, %v660
        %v1907 = vsel %vm890, %v1899, -inf
        %1908 = vmax.xlane.f32.xlu0 %v1907
        %v1909 = vpop.xlane.xlu0 %1908
        %v1910 = vsel %vm890, %v1900, -inf
        %1911 = vmax.xlane.f32.xlu0 %v1910
        %v1912 = vpop.xlane.xlu0 %1911
        %v1913 = vsel %vm890, %v1901, -inf
        %1914 = vmax.xlane.f32.xlu0 %v1913
        %v1915 = vpop.xlane.xlu0 %1914
        %v1916 = vsel %vm890, %v1902, -inf
        %1917 = vmax.xlane.f32.xlu0 %v1916
        %v1918 = vpop.xlane.xlu0 %1917
        %v1919 = vsel %vm890, %v1903, -inf
        %1920 = vmax.xlane.f32.xlu0 %v1919
        %v1921 = vpop.xlane.xlu0 %1920
        %v1922 = vsel %vm890, %v1904, -inf
        %1923 = vmax.xlane.f32.xlu0 %v1922
        %v1924 = vpop.xlane.xlu0 %1923
        %v1925 = vsel %vm890, %v1905, -inf
        %1926 = vmax.xlane.f32.xlu0 %v1925
        %v1927 = vpop.xlane.xlu0 %1926
        %v1928 = vsel %vm890, %v1906, -inf
        %1929 = vmax.xlane.f32.xlu0 %v1928
        %v1930 = vpop.xlane.xlu0 %1929
        %v1931 = vsub.f32 %v1899, %v1909
        %v1932 = vsub.f32 %v1900, %v1912
        %v1933 = vsub.f32 %v1901, %v1915
        %v1934 = vsub.f32 %v1902, %v1918
        %v1935 = vsub.f32 %v1903, %v1921
        %v1936 = vsub.f32 %v1904, %v1924
        %v1937 = vsub.f32 %v1905, %v1927
        %v1938 = vsub.f32 %v1906, %v1930
        %v1939 = vmul.f32 %v1931, 1.442695
        %v1940 = vpow.pop %v1939
        %v1941 = vmul.f32 %v1932, 1.442695
        %v1942 = vpow.pop %v1941
        %v1943 = vmul.f32 %v1933, 1.442695
        %v1944 = vpow.pop %v1943
        %v1945 = vmul.f32 %v1934, 1.442695
        %v1946 = vpow.pop %v1945
        %v1947 = vmul.f32 %v1935, 1.442695
        %v1948 = vpow.pop %v1947
        %v1949 = vmul.f32 %v1936, 1.442695
        %v1950 = vpow.pop %v1949
        %v1951 = vmul.f32 %v1937, 1.442695
        %v1952 = vpow.pop %v1951
        %v1953 = vmul.f32 %v1938, 1.442695
        %v1954 = vpow.pop %v1953
        %v1955 = vsel %vm890, %v1940, 0.0
        %1956 = vadd.xlane.f32.xlu0 %v1955
        %v1957 = vpop.xlane.xlu0 %1956
        %v1958 = vsel %vm890, %v1942, 0.0
        %1959 = vadd.xlane.f32.xlu0 %v1958
        %v1960 = vpop.xlane.xlu0 %1959
        %v1961 = vsel %vm890, %v1944, 0.0
        %1962 = vadd.xlane.f32.xlu0 %v1961
        %v1963 = vpop.xlane.xlu0 %1962
        %v1964 = vsel %vm890, %v1946, 0.0
        %1965 = vadd.xlane.f32.xlu0 %v1964
        %v1966 = vpop.xlane.xlu0 %1965
        %v1967 = vsel %vm890, %v1948, 0.0
        %1968 = vadd.xlane.f32.xlu0 %v1967
        %v1969 = vpop.xlane.xlu0 %1968
        %v1970 = vsel %vm890, %v1950, 0.0
        %1971 = vadd.xlane.f32.xlu0 %v1970
        %v1972 = vpop.xlane.xlu0 %1971
        %v1973 = vsel %vm890, %v1952, 0.0
        %1974 = vadd.xlane.f32.xlu0 %v1973
        %v1975 = vpop.xlane.xlu0 %1974
        %v1976 = vsel %vm890, %v1954, 0.0
        %1977 = vadd.xlane.f32.xlu0 %v1976
        %v1978 = vpop.xlane.xlu0 %1977
        %v1979 = vrcp.pop %v1957
        %v1980 = vrcp.pop %v1960
        %v1981 = vrcp.pop %v1963
        %v1982 = vrcp.pop %v1966
        %v1983 = vrcp.pop %v1969
        %v1984 = vrcp.pop %v1972
        %v1985 = vrcp.pop %v1975
        %v1986 = vrcp.pop %v1978
        %v1987 = vmul.f32 %v1940, %v1979
        %v1988 = vmul.f32 %v1942, %v1980
        %v1989 = vmul.f32 %v1944, %v1981
        %v1990 = vmul.f32 %v1946, %v1982
        %v1991 = vmul.f32 %v1948, %v1983
        %v1992 = vmul.f32 %v1950, %v1984
        %v1993 = vmul.f32 %v1952, %v1985
        %v1994 = vmul.f32 %v1954, %v1986
        %v1995 = vpack.c.bf16 %v1988, %v1987
        %v1996 = vpack.c.bf16 %v1990, %v1989
        %v1997 = vpack.c.bf16 %v1992, %v1991
        %v1998 = vpack.c.bf16 %v1994, %v1993
        %1999 = vrot.lane.b32.xlu0 %v661, 48
        %v2000 = vpop.permute.xlu0 %1999
        %v2003 = vsel %vm890, %v1995, 0
        %2005 = vmatprep.subr.bf16.mxu0 0
        %2006 = vmatpush1.bf16.msra.mxu0 0
        %2007 = vmatprep.subr.bf16.mxu0 0
        %2008 = vmatpush1.bf16.msra.mxu0 0
        %2009 = vmatprep.subr.bf16.mxu0 0
        %2010 = vmatpush1.bf16.msra.mxu0 0
        %2011 = vmatprep.subr.bf16.mxu0 0
        %2012 = vmatpush1.bf16.msra.mxu0 0
        %2013 = vmatprep.subr.bf16.mxu0 0
        %2014 = vmatpush1.bf16.msra.mxu0 0
        %2015 = vmatprep.subr.bf16.mxu0 0
        %2016 = vmatpush1.bf16.msra.mxu0 0
        %2017 = vmatprep.subr.bf16.mxu0 0
        %2018 = vmatpush1.bf16.msra.mxu0 0
        %2019 = vmatprep.subr.bf16.mxu0 0
        %2020 = vmatpush1.bf16.msra.mxu0 %v2000
        %2021 = vmatprep.subr.bf16.mxu0 0
        %2022 = vmatpush2.bf16.msra.mxu0 0
        %2023 = vmatprep.subr.bf16.mxu0 0
        %2024 = vmatpush2.bf16.msra.mxu0 0
        %2025 = vmatprep.subr.bf16.mxu0 0
        %2026 = vmatpush2.bf16.msra.mxu0 0
        %2027 = vmatprep.subr.bf16.mxu0 0
        %2028 = vmatpush2.bf16.msra.mxu0 0
        %2029 = vmatprep.subr.bf16.mxu0 0
        %2030 = vmatpush2.bf16.msra.mxu0 0
        %2031 = vmatprep.subr.bf16.mxu0 0
        %2032 = vmatpush2.bf16.msra.mxu0 0
        %2033 = vmatprep.subr.bf16.mxu0 0
        %2034 = vmatpush2.bf16.msra.mxu0 0
        %2035 = vmatprep.subr.bf16.mxu0 0
        %2036 = vmatpush2.bf16.msra.mxu0 0
        %2037 = vmatprep.mubr.bf16.mxu0 0
        %2038 = vmatmul.mubr.bf16.gmra.mxu0 %v2003
        %v2039 = vpop.f32.mrf.mxu0
        %v2040 = vadd.f32 0.0, %v2039
        %v2041 = vpop.f32.mrf.mxu0
        %v2042 = vpop.f32.mrf.mxu0
        %v2043 = vadd.f32 0.0, %v2042
        %v2044 = vpop.f32.mrf.mxu0
        %2045 = vdwg.mxu0
        %2046 = vrot.lane.b32.xlu0 %v662, 48
        %v2047 = vpop.permute.xlu0 %2046
        %v2050 = vsel %vm890, %v1996, 0
        %2052 = vmatprep.subr.bf16.mxu0 0
        %2053 = vmatpush1.bf16.msra.mxu0 0
        %2054 = vmatprep.subr.bf16.mxu0 0
        %2055 = vmatpush1.bf16.msra.mxu0 0
        %2056 = vmatprep.subr.bf16.mxu0 0
        %2057 = vmatpush1.bf16.msra.mxu0 0
        %2058 = vmatprep.subr.bf16.mxu0 0
        %2059 = vmatpush1.bf16.msra.mxu0 0
        %2060 = vmatprep.subr.bf16.mxu0 0
        %2061 = vmatpush1.bf16.msra.mxu0 0
        %2062 = vmatprep.subr.bf16.mxu0 0
        %2063 = vmatpush1.bf16.msra.mxu0 0
        %2064 = vmatprep.subr.bf16.mxu0 0
        %2065 = vmatpush1.bf16.msra.mxu0 0
        %2066 = vmatprep.subr.bf16.mxu0 0
        %2067 = vmatpush1.bf16.msra.mxu0 %v2047
        %2068 = vmatprep.subr.bf16.mxu0 0
        %2069 = vmatpush2.bf16.msra.mxu0 0
        %2070 = vmatprep.subr.bf16.mxu0 0
        %2071 = vmatpush2.bf16.msra.mxu0 0
        %2072 = vmatprep.subr.bf16.mxu0 0
        %2073 = vmatpush2.bf16.msra.mxu0 0
        %2074 = vmatprep.subr.bf16.mxu0 0
        %2075 = vmatpush2.bf16.msra.mxu0 0
        %2076 = vmatprep.subr.bf16.mxu0 0
        %2077 = vmatpush2.bf16.msra.mxu0 0
        %2078 = vmatprep.subr.bf16.mxu0 0
        %2079 = vmatpush2.bf16.msra.mxu0 0
        %2080 = vmatprep.subr.bf16.mxu0 0
        %2081 = vmatpush2.bf16.msra.mxu0 0
        %2082 = vmatprep.subr.bf16.mxu0 0
        %2083 = vmatpush2.bf16.msra.mxu0 0
        %2084 = vmatprep.mubr.bf16.mxu0 0
        %2085 = vmatmul.mubr.bf16.gmra.mxu0 %v2050
        %v2086 = vpop.f32.mrf.mxu0
        %v2087 = vadd.f32 0.0, %v2086
        %v2088 = vpop.f32.mrf.mxu0
        %v2089 = vpop.f32.mrf.mxu0
        %v2090 = vadd.f32 0.0, %v2089
        %v2091 = vpop.f32.mrf.mxu0
        %2092 = vdwg.mxu0
        %2093 = vrot.lane.b32.xlu0 %v663, 48
        %v2094 = vpop.permute.xlu0 %2093
        %v2097 = vsel %vm890, %v1997, 0
        %2099 = vmatprep.subr.bf16.mxu0 0
        %2100 = vmatpush1.bf16.msra.mxu0 0
        %2101 = vmatprep.subr.bf16.mxu0 0
        %2102 = vmatpush1.bf16.msra.mxu0 0
        %2103 = vmatprep.subr.bf16.mxu0 0
        %2104 = vmatpush1.bf16.msra.mxu0 0
        %2105 = vmatprep.subr.bf16.mxu0 0
        %2106 = vmatpush1.bf16.msra.mxu0 0
        %2107 = vmatprep.subr.bf16.mxu0 0
        %2108 = vmatpush1.bf16.msra.mxu0 0
        %2109 = vmatprep.subr.bf16.mxu0 0
        %2110 = vmatpush1.bf16.msra.mxu0 0
        %2111 = vmatprep.subr.bf16.mxu0 0
        %2112 = vmatpush1.bf16.msra.mxu0 0
        %2113 = vmatprep.subr.bf16.mxu0 0
        %2114 = vmatpush1.bf16.msra.mxu0 %v2094
        %2115 = vmatprep.subr.bf16.mxu0 0
        %2116 = vmatpush2.bf16.msra.mxu0 0
        %2117 = vmatprep.subr.bf16.mxu0 0
        %2118 = vmatpush2.bf16.msra.mxu0 0
        %2119 = vmatprep.subr.bf16.mxu0 0
        %2120 = vmatpush2.bf16.msra.mxu0 0
        %2121 = vmatprep.subr.bf16.mxu0 0
        %2122 = vmatpush2.bf16.msra.mxu0 0
        %2123 = vmatprep.subr.bf16.mxu0 0
        %2124 = vmatpush2.bf16.msra.mxu0 0
        %2125 = vmatprep.subr.bf16.mxu0 0
        %2126 = vmatpush2.bf16.msra.mxu0 0
        %2127 = vmatprep.subr.bf16.mxu0 0
        %2128 = vmatpush2.bf16.msra.mxu0 0
        %2129 = vmatprep.subr.bf16.mxu0 0
        %2130 = vmatpush2.bf16.msra.mxu0 0
        %2131 = vmatprep.mubr.bf16.mxu0 0
        %2132 = vmatmul.mubr.bf16.gmra.mxu0 %v2097
        %v2133 = vpop.f32.mrf.mxu0
        %v2134 = vadd.f32 0.0, %v2133
        %v2135 = vpop.f32.mrf.mxu0
        %v2136 = vpop.f32.mrf.mxu0
        %v2137 = vadd.f32 0.0, %v2136
        %v2138 = vpop.f32.mrf.mxu0
        %2139 = vdwg.mxu0
        %2140 = vrot.lane.b32.xlu0 %v664, 48
        %v2141 = vpop.permute.xlu0 %2140
        %v2144 = vsel %vm890, %v1998, 0
        %2146 = vmatprep.subr.bf16.mxu0 0
        %2147 = vmatpush1.bf16.msra.mxu0 0
        %2148 = vmatprep.subr.bf16.mxu0 0
        %2149 = vmatpush1.bf16.msra.mxu0 0
        %2150 = vmatprep.subr.bf16.mxu0 0
        %2151 = vmatpush1.bf16.msra.mxu0 0
        %2152 = vmatprep.subr.bf16.mxu0 0
        %2153 = vmatpush1.bf16.msra.mxu0 0
        %2154 = vmatprep.subr.bf16.mxu0 0
        %2155 = vmatpush1.bf16.msra.mxu0 0
        %2156 = vmatprep.subr.bf16.mxu0 0
        %2157 = vmatpush1.bf16.msra.mxu0 0
        %2158 = vmatprep.subr.bf16.mxu0 0
        %2159 = vmatpush1.bf16.msra.mxu0 0
        %2160 = vmatprep.subr.bf16.mxu0 0
        %2161 = vmatpush1.bf16.msra.mxu0 %v2141
        %2162 = vmatprep.subr.bf16.mxu0 0
        %2163 = vmatpush2.bf16.msra.mxu0 0
        %2164 = vmatprep.subr.bf16.mxu0 0
        %2165 = vmatpush2.bf16.msra.mxu0 0
        %2166 = vmatprep.subr.bf16.mxu0 0
        %2167 = vmatpush2.bf16.msra.mxu0 0
        %2168 = vmatprep.subr.bf16.mxu0 0
        %2169 = vmatpush2.bf16.msra.mxu0 0
        %2170 = vmatprep.subr.bf16.mxu0 0
        %2171 = vmatpush2.bf16.msra.mxu0 0
        %2172 = vmatprep.subr.bf16.mxu0 0
        %2173 = vmatpush2.bf16.msra.mxu0 0
        %2174 = vmatprep.subr.bf16.mxu0 0
        %2175 = vmatpush2.bf16.msra.mxu0 0
        %2176 = vmatprep.subr.bf16.mxu0 0
        %2177 = vmatpush2.bf16.msra.mxu0 0
        %2178 = vmatprep.mubr.bf16.mxu0 0
        %2179 = vmatmul.mubr.bf16.gmra.mxu0 %v2144
        %v2180 = vpop.f32.mrf.mxu0
        %v2181 = vadd.f32 0.0, %v2180
        %v2182 = vpop.f32.mrf.mxu0
        %v2183 = vpop.f32.mrf.mxu0
        %v2184 = vadd.f32 0.0, %v2183
        %v2185 = vpop.f32.mrf.mxu0
        %2186 = vdwg.mxu0
        %2187 = vrot.lane.b32.xlu0 %v661, 104
        %v2188 = vpop.permute.xlu0 %2187
        %2189 = vrot.lane.b32.xlu0 %v661, 72
        %v2190 = vpop.permute.xlu0 %2189
        %v2192 = vsel %vm668, %v2188, 0
        %v2195 = vsel %vm668, %v2190, 0
        %2197 = vmatprep.subr.bf16.mxu0 0
        %2198 = vmatpush1.bf16.xpose.msra.mxu0 0
        %2199 = vmatprep.subr.bf16.mxu0 0
        %2200 = vmatpush1.bf16.xpose.msra.mxu0 0
        %2201 = vmatprep.subr.bf16.mxu0 0
        %2202 = vmatpush1.bf16.xpose.msra.mxu0 0
        %2203 = vmatprep.subr.bf16.mxu0 0
        %2204 = vmatpush1.bf16.xpose.msra.mxu0 0
        %2205 = vmatprep.subr.bf16.mxu0 0
        %2206 = vmatpush1.bf16.xpose.msra.mxu0 0
        %2207 = vmatprep.subr.bf16.mxu0 0
        %2208 = vmatpush1.bf16.xpose.msra.mxu0 0
        %2209 = vmatprep.subr.bf16.mxu0 0
        %2210 = vmatpush1.bf16.xpose.msra.mxu0 0
        %2211 = vmatprep.subr.bf16.mxu0 0
        %2212 = vmatpush1.bf16.xpose.msra.mxu0 %v2195
        %2213 = vmatprep.subr.bf16.mxu0 0
        %2214 = vmatpush2.bf16.xpose.msra.mxu0 0
        %2215 = vmatprep.subr.bf16.mxu0 0
        %2216 = vmatpush2.bf16.xpose.msra.mxu0 0
        %2217 = vmatprep.subr.bf16.mxu0 0
        %2218 = vmatpush2.bf16.xpose.msra.mxu0 0
        %2219 = vmatprep.subr.bf16.mxu0 0
        %2220 = vmatpush2.bf16.xpose.msra.mxu0 0
        %2221 = vmatprep.subr.bf16.mxu0 0
        %2222 = vmatpush2.bf16.xpose.msra.mxu0 0
        %2223 = vmatprep.subr.bf16.mxu0 0
        %2224 = vmatpush2.bf16.xpose.msra.mxu0 0
        %2225 = vmatprep.subr.bf16.mxu0 0
        %2226 = vmatpush2.bf16.xpose.msra.mxu0 0
        %2227 = vmatprep.subr.bf16.mxu0 0
        %2228 = vmatpush2.bf16.xpose.msra.mxu0 0
        %2229 = vmatprep.mubr.bf16.mxu0 0
        %2230 = vmatmul.mubr.bf16.gmra.mxu0 %v2192
        %v2231 = vpop.f32.mrf.mxu0
        %v2232 = vadd.f32 0.0, %v2231
        %v2233 = vpop.f32.mrf.mxu0
        %v2234 = vpop.f32.mrf.mxu0
        %v2235 = vadd.f32 0.0, %v2234
        %v2236 = vpop.f32.mrf.mxu0
        %2237 = vdwg.mxu0
        %2238 = vrot.lane.b32.xlu0 %v662, 104
        %v2239 = vpop.permute.xlu0 %2238
        %2240 = vrot.lane.b32.xlu0 %v662, 72
        %v2241 = vpop.permute.xlu0 %2240
        %v2243 = vsel %vm668, %v2239, 0
        %v2246 = vsel %vm668, %v2241, 0
        %2248 = vmatprep.subr.bf16.mxu0 0
        %2249 = vmatpush1.bf16.xpose.msra.mxu0 0
        %2250 = vmatprep.subr.bf16.mxu0 0
        %2251 = vmatpush1.bf16.xpose.msra.mxu0 0
        %2252 = vmatprep.subr.bf16.mxu0 0
        %2253 = vmatpush1.bf16.xpose.msra.mxu0 0
        %2254 = vmatprep.subr.bf16.mxu0 0
        %2255 = vmatpush1.bf16.xpose.msra.mxu0 0
        %2256 = vmatprep.subr.bf16.mxu0 0
        %2257 = vmatpush1.bf16.xpose.msra.mxu0 0
        %2258 = vmatprep.subr.bf16.mxu0 0
        %2259 = vmatpush1.bf16.xpose.msra.mxu0 0
        %2260 = vmatprep.subr.bf16.mxu0 0
        %2261 = vmatpush1.bf16.xpose.msra.mxu0 0
        %2262 = vmatprep.subr.bf16.mxu0 0
        %2263 = vmatpush1.bf16.xpose.msra.mxu0 %v2246
        %2264 = vmatprep.subr.bf16.mxu0 0
        %2265 = vmatpush2.bf16.xpose.msra.mxu0 0
        %2266 = vmatprep.subr.bf16.mxu0 0
        %2267 = vmatpush2.bf16.xpose.msra.mxu0 0
        %2268 = vmatprep.subr.bf16.mxu0 0
        %2269 = vmatpush2.bf16.xpose.msra.mxu0 0
        %2270 = vmatprep.subr.bf16.mxu0 0
        %2271 = vmatpush2.bf16.xpose.msra.mxu0 0
        %2272 = vmatprep.subr.bf16.mxu0 0
        %2273 = vmatpush2.bf16.xpose.msra.mxu0 0
        %2274 = vmatprep.subr.bf16.mxu0 0
        %2275 = vmatpush2.bf16.xpose.msra.mxu0 0
        %2276 = vmatprep.subr.bf16.mxu0 0
        %2277 = vmatpush2.bf16.xpose.msra.mxu0 0
        %2278 = vmatprep.subr.bf16.mxu0 0
        %2279 = vmatpush2.bf16.xpose.msra.mxu0 0
        %2280 = vmatprep.mubr.bf16.mxu0 0
        %2281 = vmatmul.mubr.bf16.gmra.mxu0 %v2243
        %v2282 = vpop.f32.mrf.mxu0
        %v2283 = vadd.f32 0.0, %v2282
        %v2284 = vpop.f32.mrf.mxu0
        %v2285 = vpop.f32.mrf.mxu0
        %v2286 = vadd.f32 0.0, %v2285
        %v2287 = vpop.f32.mrf.mxu0
        %2288 = vdwg.mxu0
        %2289 = vrot.lane.b32.xlu0 %v663, 104
        %v2290 = vpop.permute.xlu0 %2289
        %2291 = vrot.lane.b32.xlu0 %v663, 72
        %v2292 = vpop.permute.xlu0 %2291
        %v2294 = vsel %vm668, %v2290, 0
        %v2297 = vsel %vm668, %v2292, 0
        %2299 = vmatprep.subr.bf16.mxu0 0
        %2300 = vmatpush1.bf16.xpose.msra.mxu0 0
        %2301 = vmatprep.subr.bf16.mxu0 0
        %2302 = vmatpush1.bf16.xpose.msra.mxu0 0
        %2303 = vmatprep.subr.bf16.mxu0 0
        %2304 = vmatpush1.bf16.xpose.msra.mxu0 0
        %2305 = vmatprep.subr.bf16.mxu0 0
        %2306 = vmatpush1.bf16.xpose.msra.mxu0 0
        %2307 = vmatprep.subr.bf16.mxu0 0
        %2308 = vmatpush1.bf16.xpose.msra.mxu0 0
        %2309 = vmatprep.subr.bf16.mxu0 0
        %2310 = vmatpush1.bf16.xpose.msra.mxu0 0
        %2311 = vmatprep.subr.bf16.mxu0 0
        %2312 = vmatpush1.bf16.xpose.msra.mxu0 0
        %2313 = vmatprep.subr.bf16.mxu0 0
        %2314 = vmatpush1.bf16.xpose.msra.mxu0 %v2297
        %2315 = vmatprep.subr.bf16.mxu0 0
        %2316 = vmatpush2.bf16.xpose.msra.mxu0 0
        %2317 = vmatprep.subr.bf16.mxu0 0
        %2318 = vmatpush2.bf16.xpose.msra.mxu0 0
        %2319 = vmatprep.subr.bf16.mxu0 0
        %2320 = vmatpush2.bf16.xpose.msra.mxu0 0
        %2321 = vmatprep.subr.bf16.mxu0 0
        %2322 = vmatpush2.bf16.xpose.msra.mxu0 0
        %2323 = vmatprep.subr.bf16.mxu0 0
        %2324 = vmatpush2.bf16.xpose.msra.mxu0 0
        %2325 = vmatprep.subr.bf16.mxu0 0
        %2326 = vmatpush2.bf16.xpose.msra.mxu0 0
        %2327 = vmatprep.subr.bf16.mxu0 0
        %2328 = vmatpush2.bf16.xpose.msra.mxu0 0
        %2329 = vmatprep.subr.bf16.mxu0 0
        %2330 = vmatpush2.bf16.xpose.msra.mxu0 0
        %2331 = vmatprep.mubr.bf16.mxu0 0
        %2332 = vmatmul.mubr.bf16.gmra.mxu0 %v2294
        %v2333 = vpop.f32.mrf.mxu0
        %v2334 = vadd.f32 0.0, %v2333
        %v2335 = vpop.f32.mrf.mxu0
        %v2336 = vpop.f32.mrf.mxu0
        %v2337 = vadd.f32 0.0, %v2336
        %v2338 = vpop.f32.mrf.mxu0
        %2339 = vdwg.mxu0
        %2340 = vrot.lane.b32.xlu0 %v664, 104
        %v2341 = vpop.permute.xlu0 %2340
        %2342 = vrot.lane.b32.xlu0 %v664, 72
        %v2343 = vpop.permute.xlu0 %2342
        %v2345 = vsel %vm668, %v2341, 0
        %v2348 = vsel %vm668, %v2343, 0
        %2350 = vmatprep.subr.bf16.mxu0 0
        %2351 = vmatpush1.bf16.xpose.msra.mxu0 0
        %2352 = vmatprep.subr.bf16.mxu0 0
        %2353 = vmatpush1.bf16.xpose.msra.mxu0 0
        %2354 = vmatprep.subr.bf16.mxu0 0
        %2355 = vmatpush1.bf16.xpose.msra.mxu0 0
        %2356 = vmatprep.subr.bf16.mxu0 0
        %2357 = vmatpush1.bf16.xpose.msra.mxu0 0
        %2358 = vmatprep.subr.bf16.mxu0 0
        %2359 = vmatpush1.bf16.xpose.msra.mxu0 0
        %2360 = vmatprep.subr.bf16.mxu0 0
        %2361 = vmatpush1.bf16.xpose.msra.mxu0 0
        %2362 = vmatprep.subr.bf16.mxu0 0
        %2363 = vmatpush1.bf16.xpose.msra.mxu0 0
        %2364 = vmatprep.subr.bf16.mxu0 0
        %2365 = vmatpush1.bf16.xpose.msra.mxu0 %v2348
        %2366 = vmatprep.subr.bf16.mxu0 0
        %2367 = vmatpush2.bf16.xpose.msra.mxu0 0
        %2368 = vmatprep.subr.bf16.mxu0 0
        %2369 = vmatpush2.bf16.xpose.msra.mxu0 0
        %2370 = vmatprep.subr.bf16.mxu0 0
        %2371 = vmatpush2.bf16.xpose.msra.mxu0 0
        %2372 = vmatprep.subr.bf16.mxu0 0
        %2373 = vmatpush2.bf16.xpose.msra.mxu0 0
        %2374 = vmatprep.subr.bf16.mxu0 0
        %2375 = vmatpush2.bf16.xpose.msra.mxu0 0
        %2376 = vmatprep.subr.bf16.mxu0 0
        %2377 = vmatpush2.bf16.xpose.msra.mxu0 0
        %2378 = vmatprep.subr.bf16.mxu0 0
        %2379 = vmatpush2.bf16.xpose.msra.mxu0 0
        %2380 = vmatprep.subr.bf16.mxu0 0
        %2381 = vmatpush2.bf16.xpose.msra.mxu0 0
        %2382 = vmatprep.mubr.bf16.mxu0 0
        %2383 = vmatmul.mubr.bf16.gmra.mxu0 %v2345
        %v2384 = vpop.f32.mrf.mxu0
        %v2385 = vadd.f32 0.0, %v2384
        %v2386 = vpop.f32.mrf.mxu0
        %v2387 = vpop.f32.mrf.mxu0
        %v2388 = vadd.f32 0.0, %v2387
        %v2389 = vpop.f32.mrf.mxu0
        %2390 = vdwg.mxu0
        %v2391 = vmul.f32 %v2232, 0.35355338
        %v2392 = vmul.f32 %v2235, 0.35355338
        %v2393 = vmul.f32 %v2283, 0.35355338
        %v2394 = vmul.f32 %v2286, 0.35355338
        %v2395 = vmul.f32 %v2334, 0.35355338
        %v2396 = vmul.f32 %v2337, 0.35355338
        %v2397 = vmul.f32 %v2385, 0.35355338
        %v2398 = vmul.f32 %v2388, 0.35355338
        %v2399 = vadd.f32 %v2391, %v657
        %v2400 = vadd.f32 %v2392, %v658
        %v2401 = vadd.f32 %v2393, %v657
        %v2402 = vadd.f32 %v2394, %v658
        %v2403 = vadd.f32 %v2395, %v657
        %v2404 = vadd.f32 %v2396, %v658
        %v2405 = vadd.f32 %v2397, %v657
        %v2406 = vadd.f32 %v2398, %v658
        %v2407 = vadd.f32 %v2399, %v659
        %v2408 = vadd.f32 %v2400, %v660
        %v2409 = vadd.f32 %v2401, %v659
        %v2410 = vadd.f32 %v2402, %v660
        %v2411 = vadd.f32 %v2403, %v659
        %v2412 = vadd.f32 %v2404, %v660
        %v2413 = vadd.f32 %v2405, %v659
        %v2414 = vadd.f32 %v2406, %v660
        %v2415 = vsel %vm890, %v2407, -inf
        %2416 = vmax.xlane.f32.xlu0 %v2415
        %v2417 = vpop.xlane.xlu0 %2416
        %v2418 = vsel %vm890, %v2408, -inf
        %2419 = vmax.xlane.f32.xlu0 %v2418
        %v2420 = vpop.xlane.xlu0 %2419
        %v2421 = vsel %vm890, %v2409, -inf
        %2422 = vmax.xlane.f32.xlu0 %v2421
        %v2423 = vpop.xlane.xlu0 %2422
        %v2424 = vsel %vm890, %v2410, -inf
        %2425 = vmax.xlane.f32.xlu0 %v2424
        %v2426 = vpop.xlane.xlu0 %2425
        %v2427 = vsel %vm890, %v2411, -inf
        %2428 = vmax.xlane.f32.xlu0 %v2427
        %v2429 = vpop.xlane.xlu0 %2428
        %v2430 = vsel %vm890, %v2412, -inf
        %2431 = vmax.xlane.f32.xlu0 %v2430
        %v2432 = vpop.xlane.xlu0 %2431
        %v2433 = vsel %vm890, %v2413, -inf
        %2434 = vmax.xlane.f32.xlu0 %v2433
        %v2435 = vpop.xlane.xlu0 %2434
        %v2436 = vsel %vm890, %v2414, -inf
        %2437 = vmax.xlane.f32.xlu0 %v2436
        %v2438 = vpop.xlane.xlu0 %2437
        %v2439 = vsub.f32 %v2407, %v2417
        %v2440 = vsub.f32 %v2408, %v2420
        %v2441 = vsub.f32 %v2409, %v2423
        %v2442 = vsub.f32 %v2410, %v2426
        %v2443 = vsub.f32 %v2411, %v2429
        %v2444 = vsub.f32 %v2412, %v2432
        %v2445 = vsub.f32 %v2413, %v2435
        %v2446 = vsub.f32 %v2414, %v2438
        %v2447 = vmul.f32 %v2439, 1.442695
        %v2448 = vpow.pop %v2447
        %v2449 = vmul.f32 %v2440, 1.442695
        %v2450 = vpow.pop %v2449
        %v2451 = vmul.f32 %v2441, 1.442695
        %v2452 = vpow.pop %v2451
        %v2453 = vmul.f32 %v2442, 1.442695
        %v2454 = vpow.pop %v2453
        %v2455 = vmul.f32 %v2443, 1.442695
        %v2456 = vpow.pop %v2455
        %v2457 = vmul.f32 %v2444, 1.442695
        %v2458 = vpow.pop %v2457
        %v2459 = vmul.f32 %v2445, 1.442695
        %v2460 = vpow.pop %v2459
        %v2461 = vmul.f32 %v2446, 1.442695
        %v2462 = vpow.pop %v2461
        %v2463 = vsel %vm890, %v2448, 0.0
        %2464 = vadd.xlane.f32.xlu0 %v2463
        %v2465 = vpop.xlane.xlu0 %2464
        %v2466 = vsel %vm890, %v2450, 0.0
        %2467 = vadd.xlane.f32.xlu0 %v2466
        %v2468 = vpop.xlane.xlu0 %2467
        %v2469 = vsel %vm890, %v2452, 0.0
        %2470 = vadd.xlane.f32.xlu0 %v2469
        %v2471 = vpop.xlane.xlu0 %2470
        %v2472 = vsel %vm890, %v2454, 0.0
        %2473 = vadd.xlane.f32.xlu0 %v2472
        %v2474 = vpop.xlane.xlu0 %2473
        %v2475 = vsel %vm890, %v2456, 0.0
        %2476 = vadd.xlane.f32.xlu0 %v2475
        %v2477 = vpop.xlane.xlu0 %2476
        %v2478 = vsel %vm890, %v2458, 0.0
        %2479 = vadd.xlane.f32.xlu0 %v2478
        %v2480 = vpop.xlane.xlu0 %2479
        %v2481 = vsel %vm890, %v2460, 0.0
        %2482 = vadd.xlane.f32.xlu0 %v2481
        %v2483 = vpop.xlane.xlu0 %2482
        %v2484 = vsel %vm890, %v2462, 0.0
        %2485 = vadd.xlane.f32.xlu0 %v2484
        %v2486 = vpop.xlane.xlu0 %2485
        %v2487 = vrcp.pop %v2465
        %v2488 = vrcp.pop %v2468
        %v2489 = vrcp.pop %v2471
        %v2490 = vrcp.pop %v2474
        %v2491 = vrcp.pop %v2477
        %v2492 = vrcp.pop %v2480
        %v2493 = vrcp.pop %v2483
        %v2494 = vrcp.pop %v2486
        %v2495 = vmul.f32 %v2448, %v2487
        %v2496 = vmul.f32 %v2450, %v2488
        %v2497 = vmul.f32 %v2452, %v2489
        %v2498 = vmul.f32 %v2454, %v2490
        %v2499 = vmul.f32 %v2456, %v2491
        %v2500 = vmul.f32 %v2458, %v2492
        %v2501 = vmul.f32 %v2460, %v2493
        %v2502 = vmul.f32 %v2462, %v2494
        %v2503 = vpack.c.bf16 %v2496, %v2495
        %v2504 = vpack.c.bf16 %v2498, %v2497
        %v2505 = vpack.c.bf16 %v2500, %v2499
        %v2506 = vpack.c.bf16 %v2502, %v2501
        %2507 = vrot.lane.b32.xlu0 %v661, 40
        %v2508 = vpop.permute.xlu0 %2507
        %v2511 = vsel %vm890, %v2503, 0
        %2513 = vmatprep.subr.bf16.mxu0 0
        %2514 = vmatpush1.bf16.msra.mxu0 0
        %2515 = vmatprep.subr.bf16.mxu0 0
        %2516 = vmatpush1.bf16.msra.mxu0 0
        %2517 = vmatprep.subr.bf16.mxu0 0
        %2518 = vmatpush1.bf16.msra.mxu0 0
        %2519 = vmatprep.subr.bf16.mxu0 0
        %2520 = vmatpush1.bf16.msra.mxu0 0
        %2521 = vmatprep.subr.bf16.mxu0 0
        %2522 = vmatpush1.bf16.msra.mxu0 0
        %2523 = vmatprep.subr.bf16.mxu0 0
        %2524 = vmatpush1.bf16.msra.mxu0 0
        %2525 = vmatprep.subr.bf16.mxu0 0
        %2526 = vmatpush1.bf16.msra.mxu0 0
        %2527 = vmatprep.subr.bf16.mxu0 0
        %2528 = vmatpush1.bf16.msra.mxu0 %v2508
        %2529 = vmatprep.subr.bf16.mxu0 0
        %2530 = vmatpush2.bf16.msra.mxu0 0
        %2531 = vmatprep.subr.bf16.mxu0 0
        %2532 = vmatpush2.bf16.msra.mxu0 0
        %2533 = vmatprep.subr.bf16.mxu0 0
        %2534 = vmatpush2.bf16.msra.mxu0 0
        %2535 = vmatprep.subr.bf16.mxu0 0
        %2536 = vmatpush2.bf16.msra.mxu0 0
        %2537 = vmatprep.subr.bf16.mxu0 0
        %2538 = vmatpush2.bf16.msra.mxu0 0
        %2539 = vmatprep.subr.bf16.mxu0 0
        %2540 = vmatpush2.bf16.msra.mxu0 0
        %2541 = vmatprep.subr.bf16.mxu0 0
        %2542 = vmatpush2.bf16.msra.mxu0 0
        %2543 = vmatprep.subr.bf16.mxu0 0
        %2544 = vmatpush2.bf16.msra.mxu0 0
        %2545 = vmatprep.mubr.bf16.mxu0 0
        %2546 = vmatmul.mubr.bf16.gmra.mxu0 %v2511
        %v2547 = vpop.f32.mrf.mxu0
        %v2548 = vadd.f32 0.0, %v2547
        %v2549 = vpop.f32.mrf.mxu0
        %v2550 = vpop.f32.mrf.mxu0
        %v2551 = vadd.f32 0.0, %v2550
        %v2552 = vpop.f32.mrf.mxu0
        %2553 = vdwg.mxu0
        %2554 = vrot.lane.b32.xlu0 %v662, 40
        %v2555 = vpop.permute.xlu0 %2554
        %v2558 = vsel %vm890, %v2504, 0
        %2560 = vmatprep.subr.bf16.mxu0 0
        %2561 = vmatpush1.bf16.msra.mxu0 0
        %2562 = vmatprep.subr.bf16.mxu0 0
        %2563 = vmatpush1.bf16.msra.mxu0 0
        %2564 = vmatprep.subr.bf16.mxu0 0
        %2565 = vmatpush1.bf16.msra.mxu0 0
        %2566 = vmatprep.subr.bf16.mxu0 0
        %2567 = vmatpush1.bf16.msra.mxu0 0
        %2568 = vmatprep.subr.bf16.mxu0 0
        %2569 = vmatpush1.bf16.msra.mxu0 0
        %2570 = vmatprep.subr.bf16.mxu0 0
        %2571 = vmatpush1.bf16.msra.mxu0 0
        %2572 = vmatprep.subr.bf16.mxu0 0
        %2573 = vmatpush1.bf16.msra.mxu0 0
        %2574 = vmatprep.subr.bf16.mxu0 0
        %2575 = vmatpush1.bf16.msra.mxu0 %v2555
        %2576 = vmatprep.subr.bf16.mxu0 0
        %2577 = vmatpush2.bf16.msra.mxu0 0
        %2578 = vmatprep.subr.bf16.mxu0 0
        %2579 = vmatpush2.bf16.msra.mxu0 0
        %2580 = vmatprep.subr.bf16.mxu0 0
        %2581 = vmatpush2.bf16.msra.mxu0 0
        %2582 = vmatprep.subr.bf16.mxu0 0
        %2583 = vmatpush2.bf16.msra.mxu0 0
        %2584 = vmatprep.subr.bf16.mxu0 0
        %2585 = vmatpush2.bf16.msra.mxu0 0
        %2586 = vmatprep.subr.bf16.mxu0 0
        %2587 = vmatpush2.bf16.msra.mxu0 0
        %2588 = vmatprep.subr.bf16.mxu0 0
        %2589 = vmatpush2.bf16.msra.mxu0 0
        %2590 = vmatprep.subr.bf16.mxu0 0
        %2591 = vmatpush2.bf16.msra.mxu0 0
        %2592 = vmatprep.mubr.bf16.mxu0 0
        %2593 = vmatmul.mubr.bf16.gmra.mxu0 %v2558
        %v2594 = vpop.f32.mrf.mxu0
        %v2595 = vadd.f32 0.0, %v2594
        %v2596 = vpop.f32.mrf.mxu0
        %v2597 = vpop.f32.mrf.mxu0
        %v2598 = vadd.f32 0.0, %v2597
        %v2599 = vpop.f32.mrf.mxu0
        %2600 = vdwg.mxu0
        %2601 = vrot.lane.b32.xlu0 %v663, 40
        %v2602 = vpop.permute.xlu0 %2601
        %v2605 = vsel %vm890, %v2505, 0
        %2607 = vmatprep.subr.bf16.mxu0 0
        %2608 = vmatpush1.bf16.msra.mxu0 0
        %2609 = vmatprep.subr.bf16.mxu0 0
        %2610 = vmatpush1.bf16.msra.mxu0 0
        %2611 = vmatprep.subr.bf16.mxu0 0
        %2612 = vmatpush1.bf16.msra.mxu0 0
        %2613 = vmatprep.subr.bf16.mxu0 0
        %2614 = vmatpush1.bf16.msra.mxu0 0
        %2615 = vmatprep.subr.bf16.mxu0 0
        %2616 = vmatpush1.bf16.msra.mxu0 0
        %2617 = vmatprep.subr.bf16.mxu0 0
        %2618 = vmatpush1.bf16.msra.mxu0 0
        %2619 = vmatprep.subr.bf16.mxu0 0
        %2620 = vmatpush1.bf16.msra.mxu0 0
        %2621 = vmatprep.subr.bf16.mxu0 0
        %2622 = vmatpush1.bf16.msra.mxu0 %v2602
        %2623 = vmatprep.subr.bf16.mxu0 0
        %2624 = vmatpush2.bf16.msra.mxu0 0
        %2625 = vmatprep.subr.bf16.mxu0 0
        %2626 = vmatpush2.bf16.msra.mxu0 0
        %2627 = vmatprep.subr.bf16.mxu0 0
        %2628 = vmatpush2.bf16.msra.mxu0 0
        %2629 = vmatprep.subr.bf16.mxu0 0
        %2630 = vmatpush2.bf16.msra.mxu0 0
        %2631 = vmatprep.subr.bf16.mxu0 0
        %2632 = vmatpush2.bf16.msra.mxu0 0
        %2633 = vmatprep.subr.bf16.mxu0 0
        %2634 = vmatpush2.bf16.msra.mxu0 0
        %2635 = vmatprep.subr.bf16.mxu0 0
        %2636 = vmatpush2.bf16.msra.mxu0 0
        %2637 = vmatprep.subr.bf16.mxu0 0
        %2638 = vmatpush2.bf16.msra.mxu0 0
        %2639 = vmatprep.mubr.bf16.mxu0 0
        %2640 = vmatmul.mubr.bf16.gmra.mxu0 %v2605
        %v2641 = vpop.f32.mrf.mxu0
        %v2642 = vadd.f32 0.0, %v2641
        %v2643 = vpop.f32.mrf.mxu0
        %v2644 = vpop.f32.mrf.mxu0
        %v2645 = vadd.f32 0.0, %v2644
        %v2646 = vpop.f32.mrf.mxu0
        %2647 = vdwg.mxu0
        %2648 = vrot.lane.b32.xlu0 %v664, 40
        %v2649 = vpop.permute.xlu0 %2648
        %v2652 = vsel %vm890, %v2506, 0
        %2654 = vmatprep.subr.bf16.mxu0 0
        %2655 = vmatpush1.bf16.msra.mxu0 0
        %2656 = vmatprep.subr.bf16.mxu0 0
        %2657 = vmatpush1.bf16.msra.mxu0 0
        %2658 = vmatprep.subr.bf16.mxu0 0
        %2659 = vmatpush1.bf16.msra.mxu0 0
        %2660 = vmatprep.subr.bf16.mxu0 0
        %2661 = vmatpush1.bf16.msra.mxu0 0
        %2662 = vmatprep.subr.bf16.mxu0 0
        %2663 = vmatpush1.bf16.msra.mxu0 0
        %2664 = vmatprep.subr.bf16.mxu0 0
        %2665 = vmatpush1.bf16.msra.mxu0 0
        %2666 = vmatprep.subr.bf16.mxu0 0
        %2667 = vmatpush1.bf16.msra.mxu0 0
        %2668 = vmatprep.subr.bf16.mxu0 0
        %2669 = vmatpush1.bf16.msra.mxu0 %v2649
        %2670 = vmatprep.subr.bf16.mxu0 0
        %2671 = vmatpush2.bf16.msra.mxu0 0
        %2672 = vmatprep.subr.bf16.mxu0 0
        %2673 = vmatpush2.bf16.msra.mxu0 0
        %2674 = vmatprep.subr.bf16.mxu0 0
        %2675 = vmatpush2.bf16.msra.mxu0 0
        %2676 = vmatprep.subr.bf16.mxu0 0
        %2677 = vmatpush2.bf16.msra.mxu0 0
        %2678 = vmatprep.subr.bf16.mxu0 0
        %2679 = vmatpush2.bf16.msra.mxu0 0
        %2680 = vmatprep.subr.bf16.mxu0 0
        %2681 = vmatpush2.bf16.msra.mxu0 0
        %2682 = vmatprep.subr.bf16.mxu0 0
        %2683 = vmatpush2.bf16.msra.mxu0 0
        %2684 = vmatprep.subr.bf16.mxu0 0
        %2685 = vmatpush2.bf16.msra.mxu0 0
        %2686 = vmatprep.mubr.bf16.mxu0 0
        %2687 = vmatmul.mubr.bf16.gmra.mxu0 %v2652
        %v2688 = vpop.f32.mrf.mxu0
        %v2689 = vadd.f32 0.0, %v2688
        %v2690 = vpop.f32.mrf.mxu0
        %v2691 = vpop.f32.mrf.mxu0
        %v2692 = vadd.f32 0.0, %v2691
        %v2693 = vpop.f32.mrf.mxu0
        %2694 = vdwg.mxu0
        %2703 = vrot.lane.b32.xlu0 %v1532, 8
        %v2704 = vpop.permute.xlu0 %2703
        %2705 = vrot.lane.b32.xlu0 %v1535, 8
        %v2706 = vpop.permute.xlu0 %2705
        %2707 = vrot.lane.b32.xlu0 %v1579, 8
        %v2708 = vpop.permute.xlu0 %2707
        %2709 = vrot.lane.b32.xlu0 %v1582, 8
        %v2710 = vpop.permute.xlu0 %2709
        %2711 = vrot.lane.b32.xlu0 %v1626, 8
        %v2712 = vpop.permute.xlu0 %2711
        %2713 = vrot.lane.b32.xlu0 %v1629, 8
        %v2714 = vpop.permute.xlu0 %2713
        %2715 = vrot.lane.b32.xlu0 %v1673, 8
        %v2716 = vpop.permute.xlu0 %2715
        %2717 = vrot.lane.b32.xlu0 %v1676, 8
        %v2718 = vpop.permute.xlu0 %2717
        %2735 = vrot.lane.b32.xlu0 %v2040, 16
        %v2736 = vpop.permute.xlu0 %2735
        %2737 = vrot.lane.b32.xlu0 %v2043, 16
        %v2738 = vpop.permute.xlu0 %2737
        %2739 = vrot.lane.b32.xlu0 %v2087, 16
        %v2740 = vpop.permute.xlu0 %2739
        %2741 = vrot.lane.b32.xlu0 %v2090, 16
        %v2742 = vpop.permute.xlu0 %2741
        %2743 = vrot.lane.b32.xlu0 %v2134, 16
        %v2744 = vpop.permute.xlu0 %2743
        %2745 = vrot.lane.b32.xlu0 %v2137, 16
        %v2746 = vpop.permute.xlu0 %2745
        %2747 = vrot.lane.b32.xlu0 %v2181, 16
        %v2748 = vpop.permute.xlu0 %2747
        %2749 = vrot.lane.b32.xlu0 %v2184, 16
        %v2750 = vpop.permute.xlu0 %2749
        %2767 = vrot.lane.b32.xlu0 %v2548, 24
        %v2768 = vpop.permute.xlu0 %2767
        %2769 = vrot.lane.b32.xlu0 %v2551, 24
        %v2770 = vpop.permute.xlu0 %2769
        %2771 = vrot.lane.b32.xlu0 %v2595, 24
        %v2772 = vpop.permute.xlu0 %2771
        %2773 = vrot.lane.b32.xlu0 %v2598, 24
        %v2774 = vpop.permute.xlu0 %2773
        %2775 = vrot.lane.b32.xlu0 %v2642, 24
        %v2776 = vpop.permute.xlu0 %2775
        %2777 = vrot.lane.b32.xlu0 %v2645, 24
        %v2778 = vpop.permute.xlu0 %2777
        %2779 = vrot.lane.b32.xlu0 %v2689, 24
        %v2780 = vpop.permute.xlu0 %2779
        %2781 = vrot.lane.b32.xlu0 %v2692, 24
        %v2782 = vpop.permute.xlu0 %2781
        %v2791 = vsel %vm668, %v1024, %v2704
        %v2792 = vsel %vm668, %v1027, %v2706
        %v2793 = vsel %vm668, %v1071, %v2708
        %v2794 = vsel %vm668, %v1074, %v2710
        %v2795 = vsel %vm668, %v1118, %v2712
        %v2796 = vsel %vm668, %v1121, %v2714
        %v2797 = vsel %vm668, %v1165, %v2716
        %v2798 = vsel %vm668, %v1168, %v2718
        %v2799 = vsel %vm890, %v2791, %v2736
        %v2800 = vsel %vm890, %v2792, %v2738
        %v2801 = vsel %vm890, %v2793, %v2740
        %v2802 = vsel %vm890, %v2794, %v2742
        %v2803 = vsel %vm890, %v2795, %v2744
        %v2804 = vsel %vm890, %v2796, %v2746
        %v2805 = vsel %vm890, %v2797, %v2748
        %v2806 = vsel %vm890, %v2798, %v2750
        %vm2807 = vcmask 195584
        %v2808 = vsel %vm2807, %v2799, %v2768
        %v2809 = vsel %vm2807, %v2800, %v2770
        %v2810 = vsel %vm2807, %v2801, %v2772
        %v2811 = vsel %vm2807, %v2802, %v2774
        %v2812 = vsel %vm2807, %v2803, %v2776
        %v2813 = vsel %vm2807, %v2804, %v2778
        %v2814 = vsel %vm2807, %v2805, %v2780
        %v2815 = vsel %vm2807, %v2806, %v2782
        %v2816 = vpack.c.bf16 %v2809, %v2808
        %v2817 = vpack.c.bf16 %v2811, %v2810
        %v2818 = vpack.c.bf16 %v2813, %v2812
        %v2819 = vpack.c.bf16 %v2815, %v2814
        %v2820 = vld [vmem:[#allocation10] sm:$0xff]
        %v2821 = vld [vmem:[#allocation10 + $0x8] sm:$0xff]
        %v2822 = vld [vmem:[#allocation10 + $0x10] sm:$0xff]
        %v2823 = vld [vmem:[#allocation10 + $0x18] sm:$0xff]
        %v2824 = vpack.c.bf16 %v2821, %v2820
        %v2825 = vpack.c.bf16 %v2823, %v2822
        %v2826 = vld [vmem:[%s6] sm:$0x1]
        %v2828 = vlaneseq
        %v2829 = vshrl.u32 %v2828, 7
        %v2830 = vsub.s32 0, %v2829
        %v2831 = vrot.slane %v2826, %v2830
        %v2834 = vsel %vm421, %v2816, 0
        %v2837 = vsel %vm421, %v2817, 0
        %v2840 = vsel %vm421, %v2818, 0
        %v2843 = vsel %vm421, %v2819, 0
        %2845 = vmatprep.subr.bf16.mxu0 0
        %2846 = vmatpush1.bf16.msra.mxu0 0
        %2847 = vmatprep.subr.bf16.mxu0 0
        %2848 = vmatpush1.bf16.msra.mxu0 0
        %2849 = vmatprep.subr.bf16.mxu0 0
        %2850 = vmatpush1.bf16.msra.mxu0 0
        %2851 = vmatprep.subr.bf16.mxu0 0
        %2852 = vmatpush1.bf16.msra.mxu0 0
        %2853 = vmatprep.subr.bf16.mxu0 0
        %2854 = vmatpush1.bf16.msra.mxu0 0
        %2855 = vmatprep.subr.bf16.mxu0 0
        %2856 = vmatpush1.bf16.msra.mxu0 0
        %2857 = vmatprep.subr.bf16.mxu0 0
        %2858 = vmatpush1.bf16.msra.mxu0 %v2825
        %2859 = vmatprep.subr.bf16.mxu0 0
        %2860 = vmatpush1.bf16.msra.mxu0 %v2824
        %2861 = vmatprep.subr.bf16.mxu0 0
        %2862 = vmatpush2.bf16.msra.mxu0 0
        %2863 = vmatprep.subr.bf16.mxu0 0
        %2864 = vmatpush2.bf16.msra.mxu0 0
        %2865 = vmatprep.subr.bf16.mxu0 0
        %2866 = vmatpush2.bf16.msra.mxu0 0
        %2867 = vmatprep.subr.bf16.mxu0 0
        %2868 = vmatpush2.bf16.msra.mxu0 0
        %2869 = vmatprep.subr.bf16.mxu0 0
        %2870 = vmatpush2.bf16.msra.mxu0 0
        %2871 = vmatprep.subr.bf16.mxu0 0
        %2872 = vmatpush2.bf16.msra.mxu0 0
        %2873 = vmatprep.subr.bf16.mxu0 0
        %2874 = vmatpush2.bf16.msra.mxu0 0
        %2875 = vmatprep.subr.bf16.mxu0 0
        %2876 = vmatpush2.bf16.msra.mxu0 0
        %2877 = vmatprep.mubr.bf16.mxu0 0
        %2878 = vmatmul.mubr.bf16.gmra.mxu0 %v2834
        %v2879 = vpop.f32.mrf.mxu0
        %v2880 = vadd.f32 %v2831, %v2879
        %v2881 = vpop.f32.mrf.mxu0
        %v2882 = vpop.f32.mrf.mxu0
        %v2883 = vadd.f32 %v2831, %v2882
        %v2884 = vpop.f32.mrf.mxu0
        %2885 = vmatprep.mubr.bf16.mxu0 0
        %2886 = vmatmul.mubr.bf16.gmra.mxu0 %v2837
        %v2887 = vpop.f32.mrf.mxu0
        %v2888 = vadd.f32 %v2831, %v2887
        %v2889 = vpop.f32.mrf.mxu0
        %v2890 = vpop.f32.mrf.mxu0
        %v2891 = vadd.f32 %v2831, %v2890
        %v2892 = vpop.f32.mrf.mxu0
        %2893 = vmatprep.mubr.bf16.mxu0 0
        %2894 = vmatmul.mubr.bf16.gmra.mxu0 %v2840
        %v2895 = vpop.f32.mrf.mxu0
        %v2896 = vadd.f32 %v2831, %v2895
        %v2897 = vpop.f32.mrf.mxu0
        %v2898 = vpop.f32.mrf.mxu0
        %v2899 = vadd.f32 %v2831, %v2898
        %v2900 = vpop.f32.mrf.mxu0
        %2901 = vmatprep.mubr.bf16.mxu0 0
        %2902 = vmatmul.mubr.bf16.gmra.mxu0 %v2843
        %v2903 = vpop.f32.mrf.mxu0
        %v2904 = vadd.f32 %v2831, %v2903
        %v2905 = vpop.f32.mrf.mxu0
        %v2906 = vpop.f32.mrf.mxu0
        %v2907 = vadd.f32 %v2831, %v2906
        %v2908 = vpop.f32.mrf.mxu0
        %2909 = vdwg.mxu0
        %2910 = vst.msk [vmem:[%s409] sm:$0xff] %vm421, %v2880
        %2911 = vst.msk [vmem:[%s409 + $0x8] sm:$0xff] %vm421, %v2883
        %2912 = vst.msk [vmem:[%s409 + $0x10] sm:$0xff] %vm421, %v2888
        %2913 = vst.msk [vmem:[%s409 + $0x18] sm:$0xff] %vm421, %v2891
        %2914 = vst.msk [vmem:[%s409 + $0x20] sm:$0xff] %vm421, %v2896
        %2915 = vst.msk [vmem:[%s409 + $0x28] sm:$0xff] %vm421, %v2899
        %2916 = vst.msk [vmem:[%s409 + $0x30] sm:$0xff] %vm421, %v2904
        %2917 = vst.msk [vmem:[%s409 + $0x38] sm:$0xff] %vm421, %v2907
        %s2918 = sand.u32 %s230, 1
        %s2919 = scalar_lea.sflag [#allocation4], %s2918
        %s2920 = sand.u32 %s230, 1
        %s2921 = smul.addr %s2920, 64
        %s2922 = scalar_lea.vmem [#allocation11], %s2921
        // Predicated region
        $region77: #{tpu_custom_call.1} parent=55 // pred_check
          %p2923 = pneg %p240
        $region78: #{tpu_custom_call.1} parent=55 // pred_check_branch
          %2925 = sbr.rel (%p2923) target = $region80
        $region79: #{tpu_custom_call.1} parent=55 // pred_region
          %s2926 = smul.u32 4, %s28
          %s2928 = ssub.s32 1024, 1024
          %2929 = vsyncadd %s2919, %s2928
          %s2930 = smul.addr %s2926, 2
          %s2931 = smul.addr %s2930, 128
          %s2932 = scalar_lea.hbm %s9, %s2931
          %s2933 = sshll.u32 %s2922, 4
          %s2934 = int_to_ptr.vmem [resolvable:$true] %s2933
          %2939 = dma.vmem_to_hbm [thread:$0]  %s2934, 1024, %s2932, %s2919, 128, 128, 8
        $region80: #{tpu_custom_call.1} parent=55 // pred_fallthru
          _
      $region56: #{tpu_custom_call.1} parent=5 // pred_fallthru
        _
      %p2940 = scmp.le.s32.totalorder 2, %s23
      // Predicated region
      $region81: #{tpu_custom_call.1} parent=5 // pred_check
        %p2941 = pneg %p2940
      $region82: #{tpu_custom_call.1} parent=5 // pred_check_branch
        %2943 = sbr.rel (%p2941) target = $region84
      $region83: #{tpu_custom_call.1} parent=5 // pred_region
        %s2944 = ssub.s32 %s23, 2
        // Predicated region
        $region85: #{tpu_custom_call.1} parent=83 // pred_check
          %p2945 = pneg %p246
        $region86: #{tpu_custom_call.1} parent=83 // pred_check_branch
          %2947 = sbr.rel (%p2945) target = $region88
        $region87: #{tpu_custom_call.1} parent=83 // pred_region
          %s2948 = sand.u32 %s231, 1
          %s2949 = scalar_lea.sflag [#allocation4], %s2948
          %s2950 = sand.u32 %s231, 1
          %s2951 = smul.addr %s2950, 64
          %s2952 = scalar_lea.vmem [#allocation11], %s2951
          %2953 = dma.done %s2949, 1024
        $region88: #{tpu_custom_call.1} parent=83 // pred_fallthru
          _
      $region84: #{tpu_custom_call.1} parent=5 // pred_fallthru
        _
    $region6: #{tpu_custom_call.1} parent=1 // loop_footer
      %s27 = sadd.s32 1, %s23
    $region7: #{tpu_custom_call.1} parent=1 // loop_footer_branch
      %22 = sbr.rel target = $region3
    $region8: #{tpu_custom_call.1} parent=1 // loop_exit
      _
    %2954 = vsyncpa [#allocation3], 1
    %s2955 = scalar_lea.sflag [#allocation3], 1
    %2956 = vsyncpa %s2955, 1
    %2957 = vsyncpa [#allocation6], 1
    %2958 = vsyncpa [#allocation9], 1
    %2959 = vsyncpa [#allocation4], 1
    %s2960 = scalar_lea.sflag [#allocation4], 1
    %2961 = vsyncpa %s2960, 1

</llo_original>
